<compile_context>
chip_gen: v6e
topology: v6e:2x2x1
jax: 0.10.0
libtpu: 0.0.40
codegen_flags: <defaults>
</compile_context>

<pallas_src>
import numpy as np
import jax
import jax.numpy as jnp
from jax.experimental import pallas as pl
from jax.experimental.pallas import tpu as pltpu

LEAK = 0.2
BN_EPS = 1e-5
HIDDEN = (1024, 512, 256, 128)


def _round_up(x, m):
    return ((x + m - 1) // m) * m


def _leaky_relu(x):
    return jnp.where(x > 0, x, LEAK * x)


def _bn_train_folded(h, gamma, beta, row_mask, inv_n):
    """nn.BatchNorm1d training-mode forward, folded to h*scale + shift.
    Stats over real batch rows only (row_mask zeroes padded rows)."""
    if row_mask is None:
        mean = jnp.mean(h, axis=0, keepdims=True)
        centered = h - mean
        var = jnp.mean(centered * centered, axis=0, keepdims=True)
    else:
        mean = jnp.sum(h * row_mask, axis=0, keepdims=True) * inv_n
        centered = (h - mean) * row_mask
        var = jnp.sum(centered * centered, axis=0, keepdims=True) * inv_n
    scale = gamma * jax.lax.rsqrt(var + BN_EPS)          # rsqrt -> EUP slot
    shift = beta - mean * scale
    return h * scale + shift


def _make_kernel(b_real, b_pad):
    masked = (b_pad != b_real)
    inv_n = 1.0 / float(b_real)

    def kernel(x_ref, w1_ref, b1_ref,
               w2_ref, b2_ref, g2_ref, be2_ref,
               w3_ref, b3_ref, g3_ref, be3_ref,
               w4_ref, b4_ref, g4_ref, be4_ref,
               w5_ref, b5_ref,
               o_ref, acc_ref):
        k = pl.program_id(0)

        @pl.when(k == 0)
        def _():
            acc_ref[...] = jnp.zeros_like(acc_ref)

        # Layer 1: K-tiled bf16 matmul, f32 accumulation in VMEM scratch.
        acc_ref[...] += jnp.dot(x_ref[...], w1_ref[...],
                                preferred_element_type=jnp.float32)

        @pl.when(k == pl.num_programs(0) - 1)
        def _():
            if masked:
                row_ids = jax.lax.broadcasted_iota(jnp.int32, (b_pad, 1), 0)
                row_mask = (row_ids < b_real).astype(jnp.float32)
            else:
                row_mask = None

            # Linear(D_in, 1024) + LeakyReLU
            h = _leaky_relu(acc_ref[...] + b1_ref[...])

            # Linear(1024, 512) + BN + LeakyReLU
            h = jnp.dot(h.astype(jnp.bfloat16), w2_ref[...],
                        preferred_element_type=jnp.float32) + b2_ref[...]
            h = _leaky_relu(_bn_train_folded(h, g2_ref[...], be2_ref[...],
                                             row_mask, inv_n))

            # Linear(512, 256) + BN + LeakyReLU
            h = jnp.dot(h.astype(jnp.bfloat16), w3_ref[...],
                        preferred_element_type=jnp.float32) + b3_ref[...]
            h = _leaky_relu(_bn_train_folded(h, g3_ref[...], be3_ref[...],
                                             row_mask, inv_n))

            # Linear(256, 128) + BN + LeakyReLU
            h = jnp.dot(h.astype(jnp.bfloat16), w4_ref[...],
                        preferred_element_type=jnp.float32) + b4_ref[...]
            h = _leaky_relu(_bn_train_folded(h, g4_ref[...], be4_ref[...],
                                             row_mask, inv_n))

            # Linear(128, latent_dim_padded) + LeakyReLU (lane-dense, padded)
            h = jnp.dot(h.astype(jnp.bfloat16), w5_ref[...],
                        preferred_element_type=jnp.float32) + b5_ref[...]
            h = _leaky_relu(h)

            o_ref[...] = h.astype(o_ref.dtype)

    return kernel


def init_params(key, img_shape, latent_dim):
    """PyTorch-default-style init: Linear U(-1/sqrt(fan_in), 1/sqrt(fan_in)),
    BatchNorm gamma=1, beta=0. Weights stored as (in, out), f32."""
    dims = [int(np.prod(img_shape))] + list(HIDDEN) + [latent_dim]
    keys = jax.random.split(key, 2 * (len(dims) - 1))
    params = []
    bn_after = {1, 2, 3}
    for li in range(len(dims) - 1):
        d_in, d_out = dims[li], dims[li + 1]
        bound = 1.0 / np.sqrt(d_in)
        w = jax.random.uniform(keys[2 * li], (d_in, d_out), jnp.float32,
                               minval=-bound, maxval=bound)
        b = jax.random.uniform(keys[2 * li + 1], (1, d_out), jnp.float32,
                               minval=-bound, maxval=bound)
        params += [w, b]
        if li in bn_after:
            params += [jnp.ones((1, d_out), jnp.float32),
                       jnp.zeros((1, d_out), jnp.float32)]
    return params


def _prepare_params(params, d_in, k_pad, latent_dim, out_pad):
    (w1, b1, w2, b2, g2, be2, w3, b3, g3, be3,
     w4, b4, g4, be4, w5, b5) = params
    w1p = jnp.zeros((k_pad, HIDDEN[0]), jnp.bfloat16).at[:d_in].set(
        w1.astype(jnp.bfloat16))
    w5p = jnp.zeros((HIDDEN[3], out_pad), jnp.bfloat16).at[:, :latent_dim].set(
        w5.astype(jnp.bfloat16))
    b5p = jnp.zeros((1, out_pad), jnp.float32).at[:, :latent_dim].set(b5)
    bf16 = lambda w: w.astype(jnp.bfloat16)
    return (w1p, b1,
            bf16(w2), b2, g2, be2,
            bf16(w3), b3, g3, be3,
            bf16(w4), b4, g4, be4,
            w5p, b5p)


def z_encoder_forward(img, params, latent_dim):
    B_real = img.shape[0]
    D_in = int(np.prod(img.shape[1:]))

    B_pad = _round_up(max(B_real, 8), 8)                 # f32 sublane multiple
    tk = min(2048, _round_up(D_in, 128))                 # v7x-safe K tile
    K_pad = _round_up(D_in, tk)
    num_k = K_pad // tk
    out_pad = _round_up(max(latent_dim, 128), 128)       # lane-dense output

    # Plain-JAX glue: flatten NCHW, zero-pad batch/K, cast matmul input to bf16.
    x = img.reshape(B_real, -1).astype(jnp.float32)
    x_pad = jnp.zeros((B_pad, K_pad), jnp.bfloat16).at[:B_real, :D_in].set(
        x.astype(jnp.bfloat16))

    kparams = _prepare_params(params, D_in, K_pad, latent_dim, out_pad)

    # VMEM budget: actual footprint (double-buffered tiles + resident params
    # + scratch + output) with headroom, capped below physical VMEM.
    try:
        info = pltpu.get_tpu_info()
        phys_vmem = int(getattr(info, "vmem_capacity_bytes", 64 * 1024 * 1024))
    except Exception:
        phys_vmem = 64 * 1024 * 1024
    footprint = 2 * (B_pad * tk * 2)                      # x tile (bf16), 2 bufs
    footprint += 2 * (tk * HIDDEN[0] * 2)                 # w1 tile (bf16), 2 bufs
    footprint += 2 * sum(int(np.prod(p.shape)) * jnp.dtype(p.dtype).itemsize
                         for p in kparams[1:])            # resident params
    footprint += B_pad * HIDDEN[0] * 4                    # acc scratch
    footprint += 2 * B_pad * out_pad * 4                  # output
    vmem_limit = int(min(max(32 * 1024 * 1024, 2 * footprint),
                         phys_vmem - 16 * 1024 * 1024))

    x_spec = pl.BlockSpec((B_pad, tk), lambda k: (0, k))
    w1_spec = pl.BlockSpec((tk, HIDDEN[0]), lambda k: (k, 0))
    const_spec = lambda shape: pl.BlockSpec(shape, lambda k: (0, 0))
    in_specs = [x_spec, w1_spec] + [const_spec(p.shape) for p in kparams[1:]]

    out = pl.pallas_call(
        _make_kernel(B_real, B_pad),
        out_shape=jax.ShapeDtypeStruct((B_pad, out_pad), jnp.float32),
        grid_spec=pltpu.PrefetchScalarGridSpec(
            num_scalar_prefetch=0,
            grid=(num_k,),
            in_specs=in_specs,
            out_specs=pl.BlockSpec((B_pad, out_pad), lambda k: (0, 0)),
            scratch_shapes=[pltpu.VMEM((B_pad, HIDDEN[0]), jnp.float32)]),
        compiler_params=pltpu.CompilerParams(
            dimension_semantics=("arbitrary",),
            vmem_limit_bytes=vmem_limit),
    )(x_pad, *kparams)

    return out[:B_real, :latent_dim]


def z_encoder_ref(img, params):
    """Pure-JAX reference matching the kernel's numerics
    (bf16 matmul operands, f32 accumulation / BN / activations)."""
    x = img.reshape(img.shape[0], -1).astype(jnp.float32)
    (w1, b1, w2, b2, g2, be2, w3, b3, g3, be3,
     w4, b4, g4, be4, w5, b5) = params

    def mm(a, w):
        return jnp.dot(a.astype(jnp.bfloat16), w.astype(jnp.bfloat16),
                       preferred_element_type=jnp.float32)

    def bn(h, g, be):
        mean = jnp.mean(h, axis=0, keepdims=True)
        c = h - mean
        var = jnp.mean(c * c, axis=0, keepdims=True)
        scale = g * jax.lax.rsqrt(var + BN_EPS)
        shift = be - mean * scale
        return h * scale + shift

    h = _leaky_relu(mm(x, w1) + b1)
    h = _leaky_relu(bn(mm(h, w2) + b2, g2, be2))
    h = _leaky_relu(bn(mm(h, w3) + b3, g3, be3))
    h = _leaky_relu(bn(mm(h, w4) + b4, g4, be4))
    h = _leaky_relu(mm(h, w5) + b5)
    return h


if __name__ == "__main__":
    img_shape = (4, 16, 16)    # (C, H, W) -> D_in = 1024
    latent_dim = 32
    batch = 2

    key = jax.random.PRNGKey(0)
    k_img, k_par = jax.random.split(key)

    img = jax.random.normal(k_img, (batch,) + img_shape, jnp.float32)  # NCHW
    params = init_params(k_par, img_shape, latent_dim)

    out = z_encoder_forward(img, params, latent_dim)
    out = jax.block_until_ready(out)
    assert out.shape == (batch, latent_dim)

    ref = z_encoder_ref(img, params)
    np.testing.assert_allclose(np.asarray(out), np.asarray(ref),
                               rtol=1e-3, atol=1e-3)

    print("KERNEL_OK")
</pallas_src>

<mosaic_0001>
module attributes {stable_mosaic.version = 11 : i64} {
  func.func @kernel(%arg0: i32, %arg1: memref<8x1024xbf16, #tpu.memory_space<vmem>>, %arg2: memref<1024x1024xbf16, #tpu.memory_space<vmem>>, %arg3: memref<1x1024xf32, #tpu.memory_space<vmem>>, %arg4: memref<1024x512xbf16, #tpu.memory_space<vmem>>, %arg5: memref<1x512xf32, #tpu.memory_space<vmem>>, %arg6: memref<1x512xf32, #tpu.memory_space<vmem>>, %arg7: memref<1x512xf32, #tpu.memory_space<vmem>>, %arg8: memref<512x256xbf16, #tpu.memory_space<vmem>>, %arg9: memref<1x256xf32, #tpu.memory_space<vmem>>, %arg10: memref<1x256xf32, #tpu.memory_space<vmem>>, %arg11: memref<1x256xf32, #tpu.memory_space<vmem>>, %arg12: memref<256x128xbf16, #tpu.memory_space<vmem>>, %arg13: memref<1x128xf32, #tpu.memory_space<vmem>>, %arg14: memref<1x128xf32, #tpu.memory_space<vmem>>, %arg15: memref<1x128xf32, #tpu.memory_space<vmem>>, %arg16: memref<128x128xbf16, #tpu.memory_space<vmem>>, %arg17: memref<1x128xf32, #tpu.memory_space<vmem>>, %arg18: memref<8x128xf32, #tpu.memory_space<vmem>>, %arg19: memref<8x1024xf32, #tpu.memory_space<vmem>>) attributes {dimension_semantics = [#tpu.dimension_semantics<arbitrary>], iteration_bounds = array<i64: 1>, scalar_prefetch = 0 : i64, scratch_operands = 1 : i64, tpu.core_type = #tpu.core_type<tc>, window_params = [{transform_indices = @transform_0, window_bounds = array<i64: 8, 1024>}, {transform_indices = @transform_1, window_bounds = array<i64: 1024, 1024>}, {pipeline_mode = #tpu.pipeline_mode<synchronous>, transform_indices = @transform_2, window_bounds = array<i64: 1, 1024>}, {pipeline_mode = #tpu.pipeline_mode<synchronous>, transform_indices = @transform_3, window_bounds = array<i64: 1024, 512>}, {pipeline_mode = #tpu.pipeline_mode<synchronous>, transform_indices = @transform_4, window_bounds = array<i64: 1, 512>}, {pipeline_mode = #tpu.pipeline_mode<synchronous>, transform_indices = @transform_5, window_bounds = array<i64: 1, 512>}, {pipeline_mode = #tpu.pipeline_mode<synchronous>, transform_indices = @transform_6, window_bounds = array<i64: 1, 512>}, {pipeline_mode = #tpu.pipeline_mode<synchronous>, transform_indices = @transform_7, window_bounds = array<i64: 512, 256>}, {pipeline_mode = #tpu.pipeline_mode<synchronous>, transform_indices = @transform_8, window_bounds = array<i64: 1, 256>}, {pipeline_mode = #tpu.pipeline_mode<synchronous>, transform_indices = @transform_9, window_bounds = array<i64: 1, 256>}, {pipeline_mode = #tpu.pipeline_mode<synchronous>, transform_indices = @transform_10, window_bounds = array<i64: 1, 256>}, {pipeline_mode = #tpu.pipeline_mode<synchronous>, transform_indices = @transform_11, window_bounds = array<i64: 256, 128>}, {pipeline_mode = #tpu.pipeline_mode<synchronous>, transform_indices = @transform_12, window_bounds = array<i64: 1, 128>}, {pipeline_mode = #tpu.pipeline_mode<synchronous>, transform_indices = @transform_13, window_bounds = array<i64: 1, 128>}, {pipeline_mode = #tpu.pipeline_mode<synchronous>, transform_indices = @transform_14, window_bounds = array<i64: 1, 128>}, {pipeline_mode = #tpu.pipeline_mode<synchronous>, transform_indices = @transform_15, window_bounds = array<i64: 128, 128>}, {pipeline_mode = #tpu.pipeline_mode<synchronous>, transform_indices = @transform_16, window_bounds = array<i64: 1, 128>}, {pipeline_mode = #tpu.pipeline_mode<synchronous>, transform_indices = @transform_17, window_bounds = array<i64: 8, 128>}]} {
    %c0_i32 = arith.constant 0 : i32
    %0 = arith.cmpi eq, %arg0, %c0_i32 : i32
    %1 = arith.extui %0 : i1 to i32
    %c0_i32_0 = arith.constant 0 : i32
    %2 = arith.cmpi ne, %1, %c0_i32_0 : i32
    scf.if %2 {
      %cst_10 = arith.constant 0.000000e+00 : f32
      %12 = vector.broadcast %cst_10 : f32 to vector<8x1024xf32>
      %c0_11 = arith.constant 0 : index
      %c0_12 = arith.constant 0 : index
      %13 = vector.load %arg19[%c0_11, %c0_12] : memref<8x1024xf32, #tpu.memory_space<vmem>>, vector<8x1024xf32>
      tpu.vector_store %arg19[%c0_11, %c0_12], %12 {strides = array<i32>} : memref<8x1024xf32, #tpu.memory_space<vmem>>, vector<8x1024xf32>,
    } else {
    }
    %c0 = arith.constant 0 : index
    %c0_1 = arith.constant 0 : index
    %3 = vector.load %arg19[%c0, %c0_1] : memref<8x1024xf32, #tpu.memory_space<vmem>>, vector<8x1024xf32>
    %c0_2 = arith.constant 0 : index
    %c0_3 = arith.constant 0 : index
    %4 = vector.load %arg1[%c0_2, %c0_3] : memref<8x1024xbf16, #tpu.memory_space<vmem>>, vector<8x1024xbf16>
    %c0_4 = arith.constant 0 : index
    %c0_5 = arith.constant 0 : index
    %5 = vector.load %arg2[%c0_4, %c0_5] : memref<1024x1024xbf16, #tpu.memory_space<vmem>>, vector<1024x1024xbf16>
    %cst = arith.constant dense<0.000000e+00> : vector<8x1024xf32>
    %6 = tpu.matmul %4, %5, %cst {dimension_numbers = #tpu.dot_dimension_numbers<[1], [0], [0], [1], [0, 0, 1, 1], [], []>} : vector<8x1024xbf16>, vector<1024x1024xbf16>, vector<8x1024xf32> -> vector<8x1024xf32>
    %7 = arith.addf %3, %6 : vector<8x1024xf32>
    %c0_6 = arith.constant 0 : index
    %c0_7 = arith.constant 0 : index
    %8 = vector.load %arg19[%c0_6, %c0_7] : memref<8x1024xf32, #tpu.memory_space<vmem>>, vector<8x1024xf32>
    tpu.vector_store %arg19[%c0_6, %c0_7], %7 {strides = array<i32>} : memref<8x1024xf32, #tpu.memory_space<vmem>>, vector<8x1024xf32>,
    %c0_i32_8 = arith.constant 0 : i32
    %9 = arith.cmpi eq, %arg0, %c0_i32_8 : i32
    %10 = arith.extui %9 : i1 to i32
    %c0_i32_9 = arith.constant 0 : i32
    %11 = arith.cmpi ne, %10, %c0_i32_9 : i32
    scf.if %11 {
      %12 = tpu.iota {dimensions = array<i32: 0>} : vector<8x1xi32>
      %c2_i32 = arith.constant 2 : i32
      %13 = vector.broadcast %c2_i32 : i32 to vector<8x1xi32>
      %14 = arith.cmpi slt, %12, %13 : vector<8x1xi32>
      %15 = arith.extui %14 : vector<8x1xi1> to vector<8x1xi32>
      %16 = arith.sitofp %15 : vector<8x1xi32> to vector<8x1xf32>
      %c0_10 = arith.constant 0 : index
      %c0_11 = arith.constant 0 : index
      %17 = vector.load %arg19[%c0_10, %c0_11] : memref<8x1024xf32, #tpu.memory_space<vmem>>, vector<8x1024xf32>
      %c0_12 = arith.constant 0 : index
      %c0_13 = arith.constant 0 : index
      %18 = vector.load %arg3[%c0_12, %c0_13] : memref<1x1024xf32, #tpu.memory_space<vmem>>, vector<1x1024xf32>
      %19 = vector.broadcast %18 : vector<1x1024xf32> to vector<8x1024xf32>
      %20 = arith.addf %17, %19 : vector<8x1024xf32>
      %cst_14 = arith.constant 0.000000e+00 : f32
      %21 = vector.broadcast %cst_14 : f32 to vector<8x1024xf32>
      %22 = arith.cmpf ogt, %20, %21 : vector<8x1024xf32>
      %cst_15 = arith.constant 2.000000e-01 : f32
      %23 = vector.broadcast %cst_15 : f32 to vector<8x1024xf32>
      %24 = arith.mulf %23, %20 : vector<8x1024xf32>
      %25 = arith.select %22, %20, %24 : vector<8x1024xi1>, vector<8x1024xf32>
      %26 = arith.truncf %25 : vector<8x1024xf32> to vector<8x1024xbf16>
      %c0_16 = arith.constant 0 : index
      %c0_17 = arith.constant 0 : index
      %27 = vector.load %arg4[%c0_16, %c0_17] : memref<1024x512xbf16, #tpu.memory_space<vmem>>, vector<1024x512xbf16>
      %cst_18 = arith.constant dense<0.000000e+00> : vector<8x512xf32>
      %28 = tpu.matmul %26, %27, %cst_18 {dimension_numbers = #tpu.dot_dimension_numbers<[1], [0], [0], [1], [0, 0, 1, 1], [], []>} : vector<8x1024xbf16>, vector<1024x512xbf16>, vector<8x512xf32> -> vector<8x512xf32>
      %c0_19 = arith.constant 0 : index
      %c0_20 = arith.constant 0 : index
      %29 = vector.load %arg5[%c0_19, %c0_20] : memref<1x512xf32, #tpu.memory_space<vmem>>, vector<1x512xf32>
      %30 = vector.broadcast %29 : vector<1x512xf32> to vector<8x512xf32>
      %31 = arith.addf %28, %30 : vector<8x512xf32>
      %c0_21 = arith.constant 0 : index
      %c0_22 = arith.constant 0 : index
      %32 = vector.load %arg6[%c0_21, %c0_22] : memref<1x512xf32, #tpu.memory_space<vmem>>, vector<1x512xf32>
      %c0_23 = arith.constant 0 : index
      %c0_24 = arith.constant 0 : index
      %33 = vector.load %arg7[%c0_23, %c0_24] : memref<1x512xf32, #tpu.memory_space<vmem>>, vector<1x512xf32>
      %34 = vector.broadcast %16 : vector<8x1xf32> to vector<8x512xf32>
      %35 = arith.mulf %31, %34 : vector<8x512xf32>
      %cst_25 = arith.constant dense<0.000000e+00> : vector<512xf32>
      %36 = vector.multi_reduction <add>, %35, %cst_25 [0] : vector<8x512xf32> to vector<512xf32>
      %37 = vector.shape_cast %36 : vector<512xf32> to vector<1x512xf32>
      %cst_26 = arith.constant 5.000000e-01 : f32
      %38 = vector.broadcast %cst_26 : f32 to vector<1x512xf32>
      %39 = arith.mulf %37, %38 : vector<1x512xf32>
      %40 = vector.broadcast %39 : vector<1x512xf32> to vector<8x512xf32>
      %41 = arith.subf %31, %40 : vector<8x512xf32>
      %42 = vector.broadcast %16 : vector<8x1xf32> to vector<8x512xf32>
      %43 = arith.mulf %41, %42 : vector<8x512xf32>
      %44 = arith.mulf %43, %43 : vector<8x512xf32>
      %cst_27 = arith.constant dense<0.000000e+00> : vector<512xf32>
      %45 = vector.multi_reduction <add>, %44, %cst_27 [0] : vector<8x512xf32> to vector<512xf32>
      %46 = vector.shape_cast %45 : vector<512xf32> to vector<1x512xf32>
      %cst_28 = arith.constant 5.000000e-01 : f32
      %47 = vector.broadcast %cst_28 : f32 to vector<1x512xf32>
      %48 = arith.mulf %46, %47 : vector<1x512xf32>
      %cst_29 = arith.constant 9.99999974E-6 : f32
      %49 = vector.broadcast %cst_29 : f32 to vector<1x512xf32>
      %50 = arith.addf %48, %49 : vector<1x512xf32>
      %51 = math.rsqrt %50 : vector<1x512xf32>
      %52 = arith.mulf %32, %51 : vector<1x512xf32>
      %53 = arith.mulf %39, %52 : vector<1x512xf32>
      %54 = arith.subf %33, %53 : vector<1x512xf32>
      %55 = vector.broadcast %52 : vector<1x512xf32> to vector<8x512xf32>
      %56 = arith.mulf %31, %55 : vector<8x512xf32>
      %57 = vector.broadcast %54 : vector<1x512xf32> to vector<8x512xf32>
      %58 = arith.addf %56, %57 : vector<8x512xf32>
      %cst_30 = arith.constant 0.000000e+00 : f32
      %59 = vector.broadcast %cst_30 : f32 to vector<8x512xf32>
      %60 = arith.cmpf ogt, %58, %59 : vector<8x512xf32>
      %cst_31 = arith.constant 2.000000e-01 : f32
      %61 = vector.broadcast %cst_31 : f32 to vector<8x512xf32>
      %62 = arith.mulf %61, %58 : vector<8x512xf32>
      %63 = arith.select %60, %58, %62 : vector<8x512xi1>, vector<8x512xf32>
      %64 = arith.truncf %63 : vector<8x512xf32> to vector<8x512xbf16>
      %c0_32 = arith.constant 0 : index
      %c0_33 = arith.constant 0 : index
      %65 = vector.load %arg8[%c0_32, %c0_33] : memref<512x256xbf16, #tpu.memory_space<vmem>>, vector<512x256xbf16>
      %cst_34 = arith.constant dense<0.000000e+00> : vector<8x256xf32>
      %66 = tpu.matmul %64, %65, %cst_34 {dimension_numbers = #tpu.dot_dimension_numbers<[1], [0], [0], [1], [0, 0, 1, 1], [], []>} : vector<8x512xbf16>, vector<512x256xbf16>, vector<8x256xf32> -> vector<8x256xf32>
      %c0_35 = arith.constant 0 : index
      %c0_36 = arith.constant 0 : index
      %67 = vector.load %arg9[%c0_35, %c0_36] : memref<1x256xf32, #tpu.memory_space<vmem>>, vector<1x256xf32>
      %68 = vector.broadcast %67 : vector<1x256xf32> to vector<8x256xf32>
      %69 = arith.addf %66, %68 : vector<8x256xf32>
      %c0_37 = arith.constant 0 : index
      %c0_38 = arith.constant 0 : index
      %70 = vector.load %arg10[%c0_37, %c0_38] : memref<1x256xf32, #tpu.memory_space<vmem>>, vector<1x256xf32>
      %c0_39 = arith.constant 0 : index
      %c0_40 = arith.constant 0 : index
      %71 = vector.load %arg11[%c0_39, %c0_40] : memref<1x256xf32, #tpu.memory_space<vmem>>, vector<1x256xf32>
      %72 = vector.broadcast %16 : vector<8x1xf32> to vector<8x256xf32>
      %73 = arith.mulf %69, %72 : vector<8x256xf32>
      %cst_41 = arith.constant dense<0.000000e+00> : vector<256xf32>
      %74 = vector.multi_reduction <add>, %73, %cst_41 [0] : vector<8x256xf32> to vector<256xf32>
      %75 = vector.shape_cast %74 : vector<256xf32> to vector<1x256xf32>
      %cst_42 = arith.constant 5.000000e-01 : f32
      %76 = vector.broadcast %cst_42 : f32 to vector<1x256xf32>
      %77 = arith.mulf %75, %76 : vector<1x256xf32>
      %78 = vector.broadcast %77 : vector<1x256xf32> to vector<8x256xf32>
      %79 = arith.subf %69, %78 : vector<8x256xf32>
      %80 = vector.broadcast %16 : vector<8x1xf32> to vector<8x256xf32>
      %81 = arith.mulf %79, %80 : vector<8x256xf32>
      %82 = arith.mulf %81, %81 : vector<8x256xf32>
      %cst_43 = arith.constant dense<0.000000e+00> : vector<256xf32>
      %83 = vector.multi_reduction <add>, %82, %cst_43 [0] : vector<8x256xf32> to vector<256xf32>
      %84 = vector.shape_cast %83 : vector<256xf32> to vector<1x256xf32>
      %cst_44 = arith.constant 5.000000e-01 : f32
      %85 = vector.broadcast %cst_44 : f32 to vector<1x256xf32>
      %86 = arith.mulf %84, %85 : vector<1x256xf32>
      %cst_45 = arith.constant 9.99999974E-6 : f32
      %87 = vector.broadcast %cst_45 : f32 to vector<1x256xf32>
      %88 = arith.addf %86, %87 : vector<1x256xf32>
      %89 = math.rsqrt %88 : vector<1x256xf32>
      %90 = arith.mulf %70, %89 : vector<1x256xf32>
      %91 = arith.mulf %77, %90 : vector<1x256xf32>
      %92 = arith.subf %71, %91 : vector<1x256xf32>
      %93 = vector.broadcast %90 : vector<1x256xf32> to vector<8x256xf32>
      %94 = arith.mulf %69, %93 : vector<8x256xf32>
      %95 = vector.broadcast %92 : vector<1x256xf32> to vector<8x256xf32>
      %96 = arith.addf %94, %95 : vector<8x256xf32>
      %cst_46 = arith.constant 0.000000e+00 : f32
      %97 = vector.broadcast %cst_46 : f32 to vector<8x256xf32>
      %98 = arith.cmpf ogt, %96, %97 : vector<8x256xf32>
      %cst_47 = arith.constant 2.000000e-01 : f32
      %99 = vector.broadcast %cst_47 : f32 to vector<8x256xf32>
      %100 = arith.mulf %99, %96 : vector<8x256xf32>
      %101 = arith.select %98, %96, %100 : vector<8x256xi1>, vector<8x256xf32>
      %102 = arith.truncf %101 : vector<8x256xf32> to vector<8x256xbf16>
      %c0_48 = arith.constant 0 : index
      %c0_49 = arith.constant 0 : index
      %103 = vector.load %arg12[%c0_48, %c0_49] : memref<256x128xbf16, #tpu.memory_space<vmem>>, vector<256x128xbf16>
      %cst_50 = arith.constant dense<0.000000e+00> : vector<8x128xf32>
      %104 = tpu.matmul %102, %103, %cst_50 {dimension_numbers = #tpu.dot_dimension_numbers<[1], [0], [0], [1], [0, 0, 1, 1], [], []>} : vector<8x256xbf16>, vector<256x128xbf16>, vector<8x128xf32> -> vector<8x128xf32>
      %c0_51 = arith.constant 0 : index
      %c0_52 = arith.constant 0 : index
      %105 = vector.load %arg13[%c0_51, %c0_52] : memref<1x128xf32, #tpu.memory_space<vmem>>, vector<1x128xf32>
      %106 = vector.broadcast %105 : vector<1x128xf32> to vector<8x128xf32>
      %107 = arith.addf %104, %106 : vector<8x128xf32>
      %c0_53 = arith.constant 0 : index
      %c0_54 = arith.constant 0 : index
      %108 = vector.load %arg14[%c0_53, %c0_54] : memref<1x128xf32, #tpu.memory_space<vmem>>, vector<1x128xf32>
      %c0_55 = arith.constant 0 : index
      %c0_56 = arith.constant 0 : index
      %109 = vector.load %arg15[%c0_55, %c0_56] : memref<1x128xf32, #tpu.memory_space<vmem>>, vector<1x128xf32>
      %110 = vector.broadcast %16 : vector<8x1xf32> to vector<8x128xf32>
      %111 = arith.mulf %107, %110 : vector<8x128xf32>
      %cst_57 = arith.constant dense<0.000000e+00> : vector<128xf32>
      %112 = vector.multi_reduction <add>, %111, %cst_57 [0] : vector<8x128xf32> to vector<128xf32>
      %113 = vector.shape_cast %112 : vector<128xf32> to vector<1x128xf32>
      %cst_58 = arith.constant 5.000000e-01 : f32
      %114 = vector.broadcast %cst_58 : f32 to vector<1x128xf32>
      %115 = arith.mulf %113, %114 : vector<1x128xf32>
      %116 = vector.broadcast %115 : vector<1x128xf32> to vector<8x128xf32>
      %117 = arith.subf %107, %116 : vector<8x128xf32>
      %118 = vector.broadcast %16 : vector<8x1xf32> to vector<8x128xf32>
      %119 = arith.mulf %117, %118 : vector<8x128xf32>
      %120 = arith.mulf %119, %119 : vector<8x128xf32>
      %cst_59 = arith.constant dense<0.000000e+00> : vector<128xf32>
      %121 = vector.multi_reduction <add>, %120, %cst_59 [0] : vector<8x128xf32> to vector<128xf32>
      %122 = vector.shape_cast %121 : vector<128xf32> to vector<1x128xf32>
      %cst_60 = arith.constant 5.000000e-01 : f32
      %123 = vector.broadcast %cst_60 : f32 to vector<1x128xf32>
      %124 = arith.mulf %122, %123 : vector<1x128xf32>
      %cst_61 = arith.constant 9.99999974E-6 : f32
      %125 = vector.broadcast %cst_61 : f32 to vector<1x128xf32>
      %126 = arith.addf %124, %125 : vector<1x128xf32>
      %127 = math.rsqrt %126 : vector<1x128xf32>
      %128 = arith.mulf %108, %127 : vector<1x128xf32>
      %129 = arith.mulf %115, %128 : vector<1x128xf32>
      %130 = arith.subf %109, %129 : vector<1x128xf32>
      %131 = vector.broadcast %128 : vector<1x128xf32> to vector<8x128xf32>
      %132 = arith.mulf %107, %131 : vector<8x128xf32>
      %133 = vector.broadcast %130 : vector<1x128xf32> to vector<8x128xf32>
      %134 = arith.addf %132, %133 : vector<8x128xf32>
      %cst_62 = arith.constant 0.000000e+00 : f32
      %135 = vector.broadcast %cst_62 : f32 to vector<8x128xf32>
      %136 = arith.cmpf ogt, %134, %135 : vector<8x128xf32>
      %cst_63 = arith.constant 2.000000e-01 : f32
      %137 = vector.broadcast %cst_63 : f32 to vector<8x128xf32>
      %138 = arith.mulf %137, %134 : vector<8x128xf32>
      %139 = arith.select %136, %134, %138 : vector<8x128xi1>, vector<8x128xf32>
      %140 = arith.truncf %139 : vector<8x128xf32> to vector<8x128xbf16>
      %c0_64 = arith.constant 0 : index
      %c0_65 = arith.constant 0 : index
      %141 = vector.load %arg16[%c0_64, %c0_65] : memref<128x128xbf16, #tpu.memory_space<vmem>>, vector<128x128xbf16>
      %cst_66 = arith.constant dense<0.000000e+00> : vector<8x128xf32>
      %142 = tpu.matmul %140, %141, %cst_66 {dimension_numbers = #tpu.dot_dimension_numbers<[1], [0], [0], [1], [0, 0, 1, 1], [], []>} : vector<8x128xbf16>, vector<128x128xbf16>, vector<8x128xf32> -> vector<8x128xf32>
      %c0_67 = arith.constant 0 : index
      %c0_68 = arith.constant 0 : index
      %143 = vector.load %arg17[%c0_67, %c0_68] : memref<1x128xf32, #tpu.memory_space<vmem>>, vector<1x128xf32>
      %144 = vector.broadcast %143 : vector<1x128xf32> to vector<8x128xf32>
      %145 = arith.addf %142, %144 : vector<8x128xf32>
      %cst_69 = arith.constant 0.000000e+00 : f32
      %146 = vector.broadcast %cst_69 : f32 to vector<8x128xf32>
      %147 = arith.cmpf ogt, %145, %146 : vector<8x128xf32>
      %cst_70 = arith.constant 2.000000e-01 : f32
      %148 = vector.broadcast %cst_70 : f32 to vector<8x128xf32>
      %149 = arith.mulf %148, %145 : vector<8x128xf32>
      %150 = arith.select %147, %145, %149 : vector<8x128xi1>, vector<8x128xf32>
      %c0_71 = arith.constant 0 : index
      %c0_72 = arith.constant 0 : index
      %151 = vector.load %arg18[%c0_71, %c0_72] : memref<8x128xf32, #tpu.memory_space<vmem>>, vector<8x128xf32>
      tpu.vector_store %arg18[%c0_71, %c0_72], %150 {strides = array<i32>} : memref<8x128xf32, #tpu.memory_space<vmem>>, vector<8x128xf32>,
    } else {
    }
    return
  }
  func.func @transform_0(%arg0: i32) -> (i32, i32) {
    %c0_i32 = arith.constant 0 : i32
    %c0_i32_0 = arith.constant 0 : i32
    return %c0_i32, %arg0 : i32, i32
  }
  func.func @transform_1(%arg0: i32) -> (i32, i32) {
    %c0_i32 = arith.constant 0 : i32
    %c0_i32_0 = arith.constant 0 : i32
    return %arg0, %c0_i32 : i32, i32
  }
  func.func @transform_2(%arg0: i32) -> (i32, i32) {
    %c0_i32 = arith.constant 0 : i32
    %c0_i32_0 = arith.constant 0 : i32
    %c0_i32_1 = arith.constant 0 : i32
    return %c0_i32, %c0_i32_0 : i32, i32
  }
  func.func @transform_3(%arg0: i32) -> (i32, i32) {
    %c0_i32 = arith.constant 0 : i32
    %c0_i32_0 = arith.constant 0 : i32
    %c0_i32_1 = arith.constant 0 : i32
    return %c0_i32, %c0_i32_0 : i32, i32
  }
  func.func @transform_4(%arg0: i32) -> (i32, i32) {
    %c0_i32 = arith.constant 0 : i32
    %c0_i32_0 = arith.constant 0 : i32
    %c0_i32_1 = arith.constant 0 : i32
    return %c0_i32, %c0_i32_0 : i32, i32
  }
  func.func @transform_5(%arg0: i32) -> (i32, i32) {
    %c0_i32 = arith.constant 0 : i32
    %c0_i32_0 = arith.constant 0 : i32
    %c0_i32_1 = arith.constant 0 : i32
    return %c0_i32, %c0_i32_0 : i32, i32
  }
  func.func @transform_6(%arg0: i32) -> (i32, i32) {
    %c0_i32 = arith.constant 0 : i32
    %c0_i32_0 = arith.constant 0 : i32
    %c0_i32_1 = arith.constant 0 : i32
    return %c0_i32, %c0_i32_0 : i32, i32
  }
  func.func @transform_7(%arg0: i32) -> (i32, i32) {
    %c0_i32 = arith.constant 0 : i32
    %c0_i32_0 = arith.constant 0 : i32
    %c0_i32_1 = arith.constant 0 : i32
    return %c0_i32, %c0_i32_0 : i32, i32
  }
  func.func @transform_8(%arg0: i32) -> (i32, i32) {
    %c0_i32 = arith.constant 0 : i32
    %c0_i32_0 = arith.constant 0 : i32
    %c0_i32_1 = arith.constant 0 : i32
    return %c0_i32, %c0_i32_0 : i32, i32
  }
  func.func @transform_9(%arg0: i32) -> (i32, i32) {
    %c0_i32 = arith.constant 0 : i32
    %c0_i32_0 = arith.constant 0 : i32
    %c0_i32_1 = arith.constant 0 : i32
    return %c0_i32, %c0_i32_0 : i32, i32
  }
  func.func @transform_10(%arg0: i32) -> (i32, i32) {
    %c0_i32 = arith.constant 0 : i32
    %c0_i32_0 = arith.constant 0 : i32
    %c0_i32_1 = arith.constant 0 : i32
    return %c0_i32, %c0_i32_0 : i32, i32
  }
  func.func @transform_11(%arg0: i32) -> (i32, i32) {
    %c0_i32 = arith.constant 0 : i32
    %c0_i32_0 = arith.constant 0 : i32
    %c0_i32_1 = arith.constant 0 : i32
    return %c0_i32, %c0_i32_0 : i32, i32
  }
  func.func @transform_12(%arg0: i32) -> (i32, i32) {
    %c0_i32 = arith.constant 0 : i32
    %c0_i32_0 = arith.constant 0 : i32
    %c0_i32_1 = arith.constant 0 : i32
    return %c0_i32, %c0_i32_0 : i32, i32
  }
  func.func @transform_13(%arg0: i32) -> (i32, i32) {
    %c0_i32 = arith.constant 0 : i32
    %c0_i32_0 = arith.constant 0 : i32
    %c0_i32_1 = arith.constant 0 : i32
    return %c0_i32, %c0_i32_0 : i32, i32
  }
  func.func @transform_14(%arg0: i32) -> (i32, i32) {
    %c0_i32 = arith.constant 0 : i32
    %c0_i32_0 = arith.constant 0 : i32
    %c0_i32_1 = arith.constant 0 : i32
    return %c0_i32, %c0_i32_0 : i32, i32
  }
  func.func @transform_15(%arg0: i32) -> (i32, i32) {
    %c0_i32 = arith.constant 0 : i32
    %c0_i32_0 = arith.constant 0 : i32
    %c0_i32_1 = arith.constant 0 : i32
    return %c0_i32, %c0_i32_0 : i32, i32
  }
  func.func @transform_16(%arg0: i32) -> (i32, i32) {
    %c0_i32 = arith.constant 0 : i32
    %c0_i32_0 = arith.constant 0 : i32
    %c0_i32_1 = arith.constant 0 : i32
    return %c0_i32, %c0_i32_0 : i32, i32
  }
  func.func @transform_17(%arg0: i32) -> (i32, i32) {
    %c0_i32 = arith.constant 0 : i32
    %c0_i32_0 = arith.constant 0 : i32
    %c0_i32_1 = arith.constant 0 : i32
    return %c0_i32, %c0_i32_0 : i32, i32
  }
}

</mosaic_0001>

<llo_original>
// kernel: tpu_custom_call.1
$region0: #{tpu_custom_call.1}
  #allocation0 [shape = 'u32[]', space=smem, size = 0x4, offset = 0x4, fixed_abs, tag = 'smem constant byte address 0x4 - core index']
  #allocation1 [shape = 'u32[144,128]{1,0:T(1,128)}', space=vmem, size = 0x12000, scoped, tag = 'internal scratch']
  #allocation2 [shape = 'f32[8,1024]{1,0:T(8,128)}', space=vmem, size = 0x8000, scoped, tag = 'scratch operand']
  %s0 = inlined_call_operand.hbm [shape: bf16[8,1024], index: 0, kind: input, shape index: {}]
  %s1 = inlined_call_operand.hbm [shape: bf16[1024,1024], index: 1, kind: input, shape index: {}]
  %s2 = inlined_call_operand.hbm [shape: f32[1,1024], index: 2, kind: input, shape index: {}]
  %s3 = inlined_call_operand.hbm [shape: bf16[1024,512], index: 3, kind: input, shape index: {}]
  %s4 = inlined_call_operand.hbm [shape: f32[1,512], index: 4, kind: input, shape index: {}]
  %s5 = inlined_call_operand.hbm [shape: f32[1,512], index: 5, kind: input, shape index: {}]
  %s6 = inlined_call_operand.hbm [shape: f32[1,512], index: 6, kind: input, shape index: {}]
  %s7 = inlined_call_operand.hbm [shape: bf16[512,256], index: 7, kind: input, shape index: {}]
  %s8 = inlined_call_operand.hbm [shape: f32[1,256], index: 8, kind: input, shape index: {}]
  %s9 = inlined_call_operand.hbm [shape: f32[1,256], index: 9, kind: input, shape index: {}]
  %s10 = inlined_call_operand.hbm [shape: f32[1,256], index: 10, kind: input, shape index: {}]
  %s11 = inlined_call_operand.hbm [shape: bf16[256,128], index: 11, kind: input, shape index: {}]
  %s12 = inlined_call_operand.hbm [shape: f32[1,128], index: 12, kind: input, shape index: {}]
  %s13 = inlined_call_operand.hbm [shape: f32[1,128], index: 13, kind: input, shape index: {}]
  %s14 = inlined_call_operand.hbm [shape: f32[1,128], index: 14, kind: input, shape index: {}]
  %s15 = inlined_call_operand.hbm [shape: bf16[128,128], index: 15, kind: input, shape index: {}]
  %s16 = inlined_call_operand.hbm [shape: f32[1,128], index: 16, kind: input, shape index: {}]
  %s17 = inlined_call_operand.hbm [shape: f32[8,128], index: 17, kind: output, shape index: {}]
  %s18 = sld [smem:[#allocation0]]
  $region154: #{tpu_custom_call.1} parent=0
    _
  %s20 = ssub.s32 1, %s18
  %s21 = scalar_select 0, %s20, %s18
  $region1: #{tpu_custom_call.1} parent=0
    #allocation3 [shape = 'u8[16384]{0}', space=vmem, size = 0x4000, scoped, tag = 'input window, operand 0, single buffered']
    #allocation4 [shape = 's32[1]{0}', space=sflag, size = 0x4, scoped, tag = 'scoped memory for tpu_custom_call.1']
    #allocation5 [shape = 's32[1]{0}', space=sflag, size = 0x4, scoped, tag = 'scoped memory for tpu_custom_call.1']
    #allocation6 [shape = 'u8[2097152]{0}', space=vmem, size = 0x200000, scoped, tag = 'input window, operand 1, single buffered']
    #allocation7 [shape = 's32[1]{0}', space=sflag, size = 0x4, scoped, tag = 'scoped memory for tpu_custom_call.1']
    #allocation8 [shape = 'u8[4096]{0}', space=vmem, size = 0x1000, scoped, tag = 'input window, operand 2, single buffered']
    #allocation9 [shape = 'u8[1048576]{0}', space=vmem, size = 0x100000, scoped, tag = 'input window, operand 3, single buffered']
    #allocation10 [shape = 's32[1]{0}', space=sflag, size = 0x4, scoped, tag = 'scoped memory for tpu_custom_call.1']
    #allocation11 [shape = 'u8[2048]{0}', space=vmem, size = 0x800, scoped, tag = 'input window, operand 4, single buffered']
    #allocation12 [shape = 'u8[2048]{0}', space=vmem, size = 0x800, scoped, tag = 'input window, operand 5, single buffered']
    #allocation13 [shape = 's32[1]{0}', space=sflag, size = 0x4, scoped, tag = 'scoped memory for tpu_custom_call.1']
    #allocation14 [shape = 'u8[2048]{0}', space=vmem, size = 0x800, scoped, tag = 'input window, operand 6, single buffered']
    #allocation15 [shape = 'u8[262144]{0}', space=vmem, size = 0x40000, scoped, tag = 'input window, operand 7, single buffered']
    #allocation16 [shape = 's32[1]{0}', space=sflag, size = 0x4, scoped, tag = 'scoped memory for tpu_custom_call.1']
    #allocation17 [shape = 'u8[1024]{0}', space=vmem, size = 0x400, scoped, tag = 'input window, operand 8, single buffered']
    #allocation18 [shape = 'u8[1024]{0}', space=vmem, size = 0x400, scoped, tag = 'input window, operand 9, single buffered']
    #allocation19 [shape = 's32[1]{0}', space=sflag, size = 0x4, scoped, tag = 'scoped memory for tpu_custom_call.1']
    #allocation20 [shape = 'u8[1024]{0}', space=vmem, size = 0x400, scoped, tag = 'input window, operand 10, single buffered']
    #allocation21 [shape = 'u8[65536]{0}', space=vmem, size = 0x10000, scoped, tag = 'input window, operand 11, single buffered']
    #allocation22 [shape = 's32[1]{0}', space=sflag, size = 0x4, scoped, tag = 'scoped memory for tpu_custom_call.1']
    #allocation23 [shape = 'u8[512]{0}', space=vmem, size = 0x400, scoped, tag = 'input window, operand 12, single buffered']
    #allocation24 [shape = 'u8[512]{0}', space=vmem, size = 0x400, scoped, tag = 'input window, operand 13, single buffered']
    #allocation25 [shape = 's32[1]{0}', space=sflag, size = 0x4, scoped, tag = 'scoped memory for tpu_custom_call.1']
    #allocation26 [shape = 'u8[512]{0}', space=vmem, size = 0x400, scoped, tag = 'input window, operand 14, single buffered']
    #allocation27 [shape = 'u8[32768]{0}', space=vmem, size = 0x8000, scoped, tag = 'input window, operand 15, single buffered']
    #allocation28 [shape = 's32[1]{0}', space=sflag, size = 0x4, scoped, tag = 'scoped memory for tpu_custom_call.1']
    #allocation29 [shape = 'u8[512]{0}', space=vmem, size = 0x400, scoped, tag = 'input window, operand 16, single buffered']
    #allocation30 [shape = 'u8[4096]{0}', space=vmem, size = 0x1000, scoped, tag = 'output window, operand 0, single buffered']
    %22 = vsyncpa [#allocation4], 0
    %23 = vsyncpa [#allocation7], 0
    %24 = vsyncpa [#allocation10], 0
    %25 = vsyncpa [#allocation13], 0
    %26 = vsyncpa [#allocation16], 0
    %27 = vsyncpa [#allocation19], 0
    %28 = vsyncpa [#allocation22], 0
    %29 = vsyncpa [#allocation25], 0
    %30 = vsyncpa [#allocation28], 0
    %31 = vsyncpa [#allocation5], 0
    // Predicated region
    $region2: #{tpu_custom_call.1} parent=1 // pred_check
      _
    $region3: #{tpu_custom_call.1} parent=1 // pred_check_branch
      %33 = sbr.rel (0) target = $region5
    $region4: #{tpu_custom_call.1} parent=1 // pred_region
      %s35 = ssub.s32 512, 512
      %36 = vsyncadd [#allocation4], %s35
      %s38 = sshll.u32 [#allocation3], 4
      %s39 = int_to_ptr.vmem [resolvable:$true] %s38
      %41 = dma.hbm_to_vmem [thread:$0]  %s0, 512, %s39, [#allocation4]
    $region5: #{tpu_custom_call.1} parent=1 // pred_fallthru
      _
    // Predicated region
    $region6: #{tpu_custom_call.1} parent=1 // pred_check
      _
    $region7: #{tpu_custom_call.1} parent=1 // pred_check_branch
      %43 = sbr.rel (0) target = $region9
    $region8: #{tpu_custom_call.1} parent=1 // pred_region
      %s45 = ssub.s32 65536, 65536
      %46 = vsyncadd [#allocation7], %s45
      %s47 = sshll.u32 [#allocation6], 4
      %s48 = int_to_ptr.vmem [resolvable:$true] %s47
      %53 = dma.hbm_to_vmem [thread:$0]  %s1, 65536, %s48, [#allocation7], 512, 512, 32
    $region9: #{tpu_custom_call.1} parent=1 // pred_fallthru
      _
    // Predicated region
    $region10: #{tpu_custom_call.1} parent=1 // pred_check
      _
    $region11: #{tpu_custom_call.1} parent=1 // pred_check_branch
      %55 = sbr.rel (0) target = $region13
    $region12: #{tpu_custom_call.1} parent=1 // pred_region
      %s57 = ssub.s32 128, 128
      %58 = vsyncadd [#allocation7], %s57
      %s60 = sshll.u32 [#allocation8], 4
      %s61 = int_to_ptr.vmem [resolvable:$true] %s60
      %63 = dma.hbm_to_vmem [thread:$0]  %s2, 128, %s61, [#allocation7]
    $region13: #{tpu_custom_call.1} parent=1 // pred_fallthru
      _
    // Predicated region
    $region14: #{tpu_custom_call.1} parent=1 // pred_check
      _
    $region15: #{tpu_custom_call.1} parent=1 // pred_check_branch
      %65 = sbr.rel (0) target = $region17
    $region16: #{tpu_custom_call.1} parent=1 // pred_region
      %s67 = ssub.s32 32768, 32768
      %68 = vsyncadd [#allocation10], %s67
      %s69 = sshll.u32 [#allocation9], 4
      %s70 = int_to_ptr.vmem [resolvable:$true] %s69
      %75 = dma.hbm_to_vmem [thread:$0]  %s3, 32768, %s70, [#allocation10], 256, 256, 16
    $region17: #{tpu_custom_call.1} parent=1 // pred_fallthru
      _
    // Predicated region
    $region18: #{tpu_custom_call.1} parent=1 // pred_check
      _
    $region19: #{tpu_custom_call.1} parent=1 // pred_check_branch
      %77 = sbr.rel (0) target = $region21
    $region20: #{tpu_custom_call.1} parent=1 // pred_region
      %s79 = ssub.s32 64, 64
      %80 = vsyncadd [#allocation10], %s79
      %s82 = sshll.u32 [#allocation11], 4
      %s83 = int_to_ptr.vmem [resolvable:$true] %s82
      %85 = dma.hbm_to_vmem [thread:$0]  %s4, 64, %s83, [#allocation10]
    $region21: #{tpu_custom_call.1} parent=1 // pred_fallthru
      _
    // Predicated region
    $region22: #{tpu_custom_call.1} parent=1 // pred_check
      _
    $region23: #{tpu_custom_call.1} parent=1 // pred_check_branch
      %87 = sbr.rel (0) target = $region25
    $region24: #{tpu_custom_call.1} parent=1 // pred_region
      %s89 = ssub.s32 64, 64
      %90 = vsyncadd [#allocation13], %s89
      %s92 = sshll.u32 [#allocation12], 4
      %s93 = int_to_ptr.vmem [resolvable:$true] %s92
      %95 = dma.hbm_to_vmem [thread:$0]  %s5, 64, %s93, [#allocation13]
    $region25: #{tpu_custom_call.1} parent=1 // pred_fallthru
      _
    // Predicated region
    $region26: #{tpu_custom_call.1} parent=1 // pred_check
      _
    $region27: #{tpu_custom_call.1} parent=1 // pred_check_branch
      %97 = sbr.rel (0) target = $region29
    $region28: #{tpu_custom_call.1} parent=1 // pred_region
      %s99 = ssub.s32 64, 64
      %100 = vsyncadd [#allocation13], %s99
      %s102 = sshll.u32 [#allocation14], 4
      %s103 = int_to_ptr.vmem [resolvable:$true] %s102
      %105 = dma.hbm_to_vmem [thread:$0]  %s6, 64, %s103, [#allocation13]
    $region29: #{tpu_custom_call.1} parent=1 // pred_fallthru
      _
    // Predicated region
    $region30: #{tpu_custom_call.1} parent=1 // pred_check
      _
    $region31: #{tpu_custom_call.1} parent=1 // pred_check_branch
      %107 = sbr.rel (0) target = $region33
    $region32: #{tpu_custom_call.1} parent=1 // pred_region
      %s109 = ssub.s32 8192, 8192
      %110 = vsyncadd [#allocation16], %s109
      %s111 = sshll.u32 [#allocation15], 4
      %s112 = int_to_ptr.vmem [resolvable:$true] %s111
      %117 = dma.hbm_to_vmem [thread:$0]  %s7, 8192, %s112, [#allocation16], 128, 128, 8
    $region33: #{tpu_custom_call.1} parent=1 // pred_fallthru
      _
    // Predicated region
    $region34: #{tpu_custom_call.1} parent=1 // pred_check
      _
    $region35: #{tpu_custom_call.1} parent=1 // pred_check_branch
      %119 = sbr.rel (0) target = $region37
    $region36: #{tpu_custom_call.1} parent=1 // pred_region
      %s121 = ssub.s32 32, 32
      %122 = vsyncadd [#allocation16], %s121
      %s124 = sshll.u32 [#allocation17], 4
      %s125 = int_to_ptr.vmem [resolvable:$true] %s124
      %127 = dma.hbm_to_vmem [thread:$0]  %s8, 32, %s125, [#allocation16]
    $region37: #{tpu_custom_call.1} parent=1 // pred_fallthru
      _
    // Predicated region
    $region38: #{tpu_custom_call.1} parent=1 // pred_check
      _
    $region39: #{tpu_custom_call.1} parent=1 // pred_check_branch
      %129 = sbr.rel (0) target = $region41
    $region40: #{tpu_custom_call.1} parent=1 // pred_region
      %s131 = ssub.s32 32, 32
      %132 = vsyncadd [#allocation19], %s131
      %s134 = sshll.u32 [#allocation18], 4
      %s135 = int_to_ptr.vmem [resolvable:$true] %s134
      %137 = dma.hbm_to_vmem [thread:$0]  %s9, 32, %s135, [#allocation19]
    $region41: #{tpu_custom_call.1} parent=1 // pred_fallthru
      _
    // Predicated region
    $region42: #{tpu_custom_call.1} parent=1 // pred_check
      _
    $region43: #{tpu_custom_call.1} parent=1 // pred_check_branch
      %139 = sbr.rel (0) target = $region45
    $region44: #{tpu_custom_call.1} parent=1 // pred_region
      %s141 = ssub.s32 32, 32
      %142 = vsyncadd [#allocation19], %s141
      %s144 = sshll.u32 [#allocation20], 4
      %s145 = int_to_ptr.vmem [resolvable:$true] %s144
      %147 = dma.hbm_to_vmem [thread:$0]  %s10, 32, %s145, [#allocation19]
    $region45: #{tpu_custom_call.1} parent=1 // pred_fallthru
      _
    // Predicated region
    $region46: #{tpu_custom_call.1} parent=1 // pred_check
      _
    $region47: #{tpu_custom_call.1} parent=1 // pred_check_branch
      %149 = sbr.rel (0) target = $region49
    $region48: #{tpu_custom_call.1} parent=1 // pred_region
      %s151 = ssub.s32 2048, 2048
      %152 = vsyncadd [#allocation22], %s151
      %s153 = sshll.u32 [#allocation21], 4
      %s154 = int_to_ptr.vmem [resolvable:$true] %s153
      %159 = dma.hbm_to_vmem [thread:$0]  %s11, 2048, %s154, [#allocation22], 64, 64, 4
    $region49: #{tpu_custom_call.1} parent=1 // pred_fallthru
      _
    // Predicated region
    $region50: #{tpu_custom_call.1} parent=1 // pred_check
      _
    $region51: #{tpu_custom_call.1} parent=1 // pred_check_branch
      %161 = sbr.rel (0) target = $region53
    $region52: #{tpu_custom_call.1} parent=1 // pred_region
      %s163 = ssub.s32 16, 16
      %164 = vsyncadd [#allocation22], %s163
      %s166 = sshll.u32 [#allocation23], 4
      %s167 = int_to_ptr.vmem [resolvable:$true] %s166
      %169 = dma.hbm_to_vmem [thread:$0]  %s12, 16, %s167, [#allocation22]
    $region53: #{tpu_custom_call.1} parent=1 // pred_fallthru
      _
    // Predicated region
    $region54: #{tpu_custom_call.1} parent=1 // pred_check
      _
    $region55: #{tpu_custom_call.1} parent=1 // pred_check_branch
      %171 = sbr.rel (0) target = $region57
    $region56: #{tpu_custom_call.1} parent=1 // pred_region
      %s173 = ssub.s32 16, 16
      %174 = vsyncadd [#allocation25], %s173
      %s176 = sshll.u32 [#allocation24], 4
      %s177 = int_to_ptr.vmem [resolvable:$true] %s176
      %179 = dma.hbm_to_vmem [thread:$0]  %s13, 16, %s177, [#allocation25]
    $region57: #{tpu_custom_call.1} parent=1 // pred_fallthru
      _
    // Predicated region
    $region58: #{tpu_custom_call.1} parent=1 // pred_check
      _
    $region59: #{tpu_custom_call.1} parent=1 // pred_check_branch
      %181 = sbr.rel (0) target = $region61
    $region60: #{tpu_custom_call.1} parent=1 // pred_region
      %s183 = ssub.s32 16, 16
      %184 = vsyncadd [#allocation25], %s183
      %s186 = sshll.u32 [#allocation26], 4
      %s187 = int_to_ptr.vmem [resolvable:$true] %s186
      %189 = dma.hbm_to_vmem [thread:$0]  %s14, 16, %s187, [#allocation25]
    $region61: #{tpu_custom_call.1} parent=1 // pred_fallthru
      _
    // Predicated region
    $region62: #{tpu_custom_call.1} parent=1 // pred_check
      _
    $region63: #{tpu_custom_call.1} parent=1 // pred_check_branch
      %191 = sbr.rel (0) target = $region65
    $region64: #{tpu_custom_call.1} parent=1 // pred_region
      %s193 = ssub.s32 1024, 1024
      %194 = vsyncadd [#allocation28], %s193
      %s195 = sshll.u32 [#allocation27], 4
      %s196 = int_to_ptr.vmem [resolvable:$true] %s195
      %201 = dma.hbm_to_vmem [thread:$0]  %s15, 1024, %s196, [#allocation28], 64, 64, 4
    $region65: #{tpu_custom_call.1} parent=1 // pred_fallthru
      _
    // Predicated region
    $region66: #{tpu_custom_call.1} parent=1 // pred_check
      _
    $region67: #{tpu_custom_call.1} parent=1 // pred_check_branch
      %203 = sbr.rel (0) target = $region69
    $region68: #{tpu_custom_call.1} parent=1 // pred_region
      %s205 = ssub.s32 16, 16
      %206 = vsyncadd [#allocation28], %s205
      %s208 = sshll.u32 [#allocation29], 4
      %s209 = int_to_ptr.vmem [resolvable:$true] %s208
      %211 = dma.hbm_to_vmem [thread:$0]  %s16, 16, %s209, [#allocation28]
    $region69: #{tpu_custom_call.1} parent=1 // pred_fallthru
      _
    // Predicated region
    $region70: #{tpu_custom_call.1} parent=1 // pred_check
      _
    $region71: #{tpu_custom_call.1} parent=1 // pred_check_branch
      %213 = sbr.rel (0) target = $region73
    $region72: #{tpu_custom_call.1} parent=1 // pred_region
      %214 = dma.done [#allocation4], 512
    $region73: #{tpu_custom_call.1} parent=1 // pred_fallthru
      _
    // Predicated region
    $region74: #{tpu_custom_call.1} parent=1 // pred_check
      _
    $region75: #{tpu_custom_call.1} parent=1 // pred_check_branch
      %216 = sbr.rel (0) target = $region77
    $region76: #{tpu_custom_call.1} parent=1 // pred_region
      %217 = dma.done [#allocation7], 65536
    $region77: #{tpu_custom_call.1} parent=1 // pred_fallthru
      _
    // Predicated region
    $region78: #{tpu_custom_call.1} parent=1 // pred_check
      _
    $region79: #{tpu_custom_call.1} parent=1 // pred_check_branch
      %219 = sbr.rel (0) target = $region81
    $region80: #{tpu_custom_call.1} parent=1 // pred_region
      %220 = dma.done [#allocation7], 128
    $region81: #{tpu_custom_call.1} parent=1 // pred_fallthru
      _
    // Predicated region
    $region82: #{tpu_custom_call.1} parent=1 // pred_check
      _
    $region83: #{tpu_custom_call.1} parent=1 // pred_check_branch
      %222 = sbr.rel (0) target = $region85
    $region84: #{tpu_custom_call.1} parent=1 // pred_region
      %223 = dma.done [#allocation10], 32768
    $region85: #{tpu_custom_call.1} parent=1 // pred_fallthru
      _
    // Predicated region
    $region86: #{tpu_custom_call.1} parent=1 // pred_check
      _
    $region87: #{tpu_custom_call.1} parent=1 // pred_check_branch
      %225 = sbr.rel (0) target = $region89
    $region88: #{tpu_custom_call.1} parent=1 // pred_region
      %226 = dma.done [#allocation10], 64
    $region89: #{tpu_custom_call.1} parent=1 // pred_fallthru
      _
    // Predicated region
    $region90: #{tpu_custom_call.1} parent=1 // pred_check
      _
    $region91: #{tpu_custom_call.1} parent=1 // pred_check_branch
      %228 = sbr.rel (0) target = $region93
    $region92: #{tpu_custom_call.1} parent=1 // pred_region
      %229 = dma.done [#allocation13], 64
    $region93: #{tpu_custom_call.1} parent=1 // pred_fallthru
      _
    // Predicated region
    $region94: #{tpu_custom_call.1} parent=1 // pred_check
      _
    $region95: #{tpu_custom_call.1} parent=1 // pred_check_branch
      %231 = sbr.rel (0) target = $region97
    $region96: #{tpu_custom_call.1} parent=1 // pred_region
      %232 = dma.done [#allocation13], 64
    $region97: #{tpu_custom_call.1} parent=1 // pred_fallthru
      _
    // Predicated region
    $region98: #{tpu_custom_call.1} parent=1 // pred_check
      _
    $region99: #{tpu_custom_call.1} parent=1 // pred_check_branch
      %234 = sbr.rel (0) target = $region101
    $region100: #{tpu_custom_call.1} parent=1 // pred_region
      %235 = dma.done [#allocation16], 8192
    $region101: #{tpu_custom_call.1} parent=1 // pred_fallthru
      _
    // Predicated region
    $region102: #{tpu_custom_call.1} parent=1 // pred_check
      _
    $region103: #{tpu_custom_call.1} parent=1 // pred_check_branch
      %237 = sbr.rel (0) target = $region105
    $region104: #{tpu_custom_call.1} parent=1 // pred_region
      %238 = dma.done [#allocation16], 32
    $region105: #{tpu_custom_call.1} parent=1 // pred_fallthru
      _
    // Predicated region
    $region106: #{tpu_custom_call.1} parent=1 // pred_check
      _
    $region107: #{tpu_custom_call.1} parent=1 // pred_check_branch
      %240 = sbr.rel (0) target = $region109
    $region108: #{tpu_custom_call.1} parent=1 // pred_region
      %241 = dma.done [#allocation19], 32
    $region109: #{tpu_custom_call.1} parent=1 // pred_fallthru
      _
    // Predicated region
    $region110: #{tpu_custom_call.1} parent=1 // pred_check
      _
    $region111: #{tpu_custom_call.1} parent=1 // pred_check_branch
      %243 = sbr.rel (0) target = $region113
    $region112: #{tpu_custom_call.1} parent=1 // pred_region
      %244 = dma.done [#allocation19], 32
    $region113: #{tpu_custom_call.1} parent=1 // pred_fallthru
      _
    // Predicated region
    $region114: #{tpu_custom_call.1} parent=1 // pred_check
      _
    $region115: #{tpu_custom_call.1} parent=1 // pred_check_branch
      %246 = sbr.rel (0) target = $region117
    $region116: #{tpu_custom_call.1} parent=1 // pred_region
      %247 = dma.done [#allocation22], 2048
    $region117: #{tpu_custom_call.1} parent=1 // pred_fallthru
      _
    // Predicated region
    $region118: #{tpu_custom_call.1} parent=1 // pred_check
      _
    $region119: #{tpu_custom_call.1} parent=1 // pred_check_branch
      %249 = sbr.rel (0) target = $region121
    $region120: #{tpu_custom_call.1} parent=1 // pred_region
      %250 = dma.done [#allocation22], 16
    $region121: #{tpu_custom_call.1} parent=1 // pred_fallthru
      _
    // Predicated region
    $region122: #{tpu_custom_call.1} parent=1 // pred_check
      _
    $region123: #{tpu_custom_call.1} parent=1 // pred_check_branch
      %252 = sbr.rel (0) target = $region125
    $region124: #{tpu_custom_call.1} parent=1 // pred_region
      %253 = dma.done [#allocation25], 16
    $region125: #{tpu_custom_call.1} parent=1 // pred_fallthru
      _
    // Predicated region
    $region126: #{tpu_custom_call.1} parent=1 // pred_check
      _
    $region127: #{tpu_custom_call.1} parent=1 // pred_check_branch
      %255 = sbr.rel (0) target = $region129
    $region128: #{tpu_custom_call.1} parent=1 // pred_region
      %256 = dma.done [#allocation25], 16
    $region129: #{tpu_custom_call.1} parent=1 // pred_fallthru
      _
    // Predicated region
    $region130: #{tpu_custom_call.1} parent=1 // pred_check
      _
    $region131: #{tpu_custom_call.1} parent=1 // pred_check_branch
      %258 = sbr.rel (0) target = $region133
    $region132: #{tpu_custom_call.1} parent=1 // pred_region
      %259 = dma.done [#allocation28], 1024
    $region133: #{tpu_custom_call.1} parent=1 // pred_fallthru
      _
    // Predicated region
    $region134: #{tpu_custom_call.1} parent=1 // pred_check
      _
    $region135: #{tpu_custom_call.1} parent=1 // pred_check_branch
      %261 = sbr.rel (0) target = $region137
    $region136: #{tpu_custom_call.1} parent=1 // pred_region
      %262 = dma.done [#allocation28], 16
    $region137: #{tpu_custom_call.1} parent=1 // pred_fallthru
      _
    %p264 = scmp.eq.s32.totalorder 0, 0
    // Predicated region
    $region138: #{tpu_custom_call.1} parent=1 // pred_check
      %p265 = pneg %p264
    $region139: #{tpu_custom_call.1} parent=1 // pred_check_branch
      %267 = sbr.rel (%p265) target = $region141
    $region140: #{tpu_custom_call.1} parent=1 // pred_region
      %268 = vst [vmem:[#allocation2] sm:$0xff] 0.0
      %269 = vst [vmem:[#allocation2 + $0x8] sm:$0xff] 0.0
      %270 = vst [vmem:[#allocation2 + $0x10] sm:$0xff] 0.0
      %271 = vst [vmem:[#allocation2 + $0x18] sm:$0xff] 0.0
      %272 = vst [vmem:[#allocation2 + $0x20] sm:$0xff] 0.0
      %273 = vst [vmem:[#allocation2 + $0x28] sm:$0xff] 0.0
      %274 = vst [vmem:[#allocation2 + $0x30] sm:$0xff] 0.0
      %275 = vst [vmem:[#allocation2 + $0x38] sm:$0xff] 0.0
    $region141: #{tpu_custom_call.1} parent=1 // pred_fallthru
      _
    %v276 = vld [vmem:[#allocation2] sm:$0xff]
    %v277 = vld [vmem:[#allocation2 + $0x8] sm:$0xff]
    %v278 = vld [vmem:[#allocation2 + $0x10] sm:$0xff]
    %v279 = vld [vmem:[#allocation2 + $0x18] sm:$0xff]
    %v280 = vld [vmem:[#allocation2 + $0x20] sm:$0xff]
    %v281 = vld [vmem:[#allocation2 + $0x28] sm:$0xff]
    %v282 = vld [vmem:[#allocation2 + $0x30] sm:$0xff]
    %v283 = vld [vmem:[#allocation2 + $0x38] sm:$0xff]
    %v284 = vld [vmem:[#allocation3] sm:$0xff]
    %v285 = vld [vmem:[#allocation3 + $0x8] sm:$0xff]
    %v286 = vld [vmem:[#allocation3 + $0x10] sm:$0xff]
    %v287 = vld [vmem:[#allocation3 + $0x18] sm:$0xff]
    %v288 = vld [vmem:[#allocation6] sm:$0xff]
    %v289 = vld [vmem:[#allocation6 + $0x8] sm:$0xff]
    %v290 = vld [vmem:[#allocation6 + $0x10] sm:$0xff]
    %v291 = vld [vmem:[#allocation6 + $0x18] sm:$0xff]
    %v292 = vld [vmem:[#allocation6 + $0x20] sm:$0xff]
    %v293 = vld [vmem:[#allocation6 + $0x28] sm:$0xff]
    %v294 = vld [vmem:[#allocation6 + $0x30] sm:$0xff]
    %v295 = vld [vmem:[#allocation6 + $0x38] sm:$0xff]
    %v296 = vld [vmem:[#allocation6 + $0x40] sm:$0xff]
    %v297 = vld [vmem:[#allocation6 + $0x48] sm:$0xff]
    %v298 = vld [vmem:[#allocation6 + $0x50] sm:$0xff]
    %v299 = vld [vmem:[#allocation6 + $0x58] sm:$0xff]
    %v300 = vld [vmem:[#allocation6 + $0x60] sm:$0xff]
    %v301 = vld [vmem:[#allocation6 + $0x68] sm:$0xff]
    %v302 = vld [vmem:[#allocation6 + $0x70] sm:$0xff]
    %v303 = vld [vmem:[#allocation6 + $0x78] sm:$0xff]
    %v304 = vld [vmem:[#allocation6 + $0x80] sm:$0xff]
    %v305 = vld [vmem:[#allocation6 + $0x88] sm:$0xff]
    %v306 = vld [vmem:[#allocation6 + $0x90] sm:$0xff]
    %v307 = vld [vmem:[#allocation6 + $0x98] sm:$0xff]
    %v308 = vld [vmem:[#allocation6 + $0xa0] sm:$0xff]
    %v309 = vld [vmem:[#allocation6 + $0xa8] sm:$0xff]
    %v310 = vld [vmem:[#allocation6 + $0xb0] sm:$0xff]
    %v311 = vld [vmem:[#allocation6 + $0xb8] sm:$0xff]
    %v312 = vld [vmem:[#allocation6 + $0xc0] sm:$0xff]
    %v313 = vld [vmem:[#allocation6 + $0xc8] sm:$0xff]
    %v314 = vld [vmem:[#allocation6 + $0xd0] sm:$0xff]
    %v315 = vld [vmem:[#allocation6 + $0xd8] sm:$0xff]
    %v316 = vld [vmem:[#allocation6 + $0xe0] sm:$0xff]
    %v317 = vld [vmem:[#allocation6 + $0xe8] sm:$0xff]
    %v318 = vld [vmem:[#allocation6 + $0xf0] sm:$0xff]
    %v319 = vld [vmem:[#allocation6 + $0xf8] sm:$0xff]
    %v320 = vld [vmem:[#allocation6 + $0x100] sm:$0xff]
    %v321 = vld [vmem:[#allocation6 + $0x108] sm:$0xff]
    %v322 = vld [vmem:[#allocation6 + $0x110] sm:$0xff]
    %v323 = vld [vmem:[#allocation6 + $0x118] sm:$0xff]
    %v324 = vld [vmem:[#allocation6 + $0x120] sm:$0xff]
    %v325 = vld [vmem:[#allocation6 + $0x128] sm:$0xff]
    %v326 = vld [vmem:[#allocation6 + $0x130] sm:$0xff]
    %v327 = vld [vmem:[#allocation6 + $0x138] sm:$0xff]
    %v328 = vld [vmem:[#allocation6 + $0x140] sm:$0xff]
    %v329 = vld [vmem:[#allocation6 + $0x148] sm:$0xff]
    %v330 = vld [vmem:[#allocation6 + $0x150] sm:$0xff]
    %v331 = vld [vmem:[#allocation6 + $0x158] sm:$0xff]
    %v332 = vld [vmem:[#allocation6 + $0x160] sm:$0xff]
    %v333 = vld [vmem:[#allocation6 + $0x168] sm:$0xff]
    %v334 = vld [vmem:[#allocation6 + $0x170] sm:$0xff]
    %v335 = vld [vmem:[#allocation6 + $0x178] sm:$0xff]
    %v336 = vld [vmem:[#allocation6 + $0x180] sm:$0xff]
    %v337 = vld [vmem:[#allocation6 + $0x188] sm:$0xff]
    %v338 = vld [vmem:[#allocation6 + $0x190] sm:$0xff]
    %v339 = vld [vmem:[#allocation6 + $0x198] sm:$0xff]
    %v340 = vld [vmem:[#allocation6 + $0x1a0] sm:$0xff]
    %v341 = vld [vmem:[#allocation6 + $0x1a8] sm:$0xff]
    %v342 = vld [vmem:[#allocation6 + $0x1b0] sm:$0xff]
    %v343 = vld [vmem:[#allocation6 + $0x1b8] sm:$0xff]
    %v344 = vld [vmem:[#allocation6 + $0x1c0] sm:$0xff]
    %v345 = vld [vmem:[#allocation6 + $0x1c8] sm:$0xff]
    %v346 = vld [vmem:[#allocation6 + $0x1d0] sm:$0xff]
    %v347 = vld [vmem:[#allocation6 + $0x1d8] sm:$0xff]
    %v348 = vld [vmem:[#allocation6 + $0x1e0] sm:$0xff]
    %v349 = vld [vmem:[#allocation6 + $0x1e8] sm:$0xff]
    %v350 = vld [vmem:[#allocation6 + $0x1f0] sm:$0xff]
    %v351 = vld [vmem:[#allocation6 + $0x1f8] sm:$0xff]
    %v352 = vld [vmem:[#allocation6 + $0x200] sm:$0xff]
    %v353 = vld [vmem:[#allocation6 + $0x208] sm:$0xff]
    %v354 = vld [vmem:[#allocation6 + $0x210] sm:$0xff]
    %v355 = vld [vmem:[#allocation6 + $0x218] sm:$0xff]
    %v356 = vld [vmem:[#allocation6 + $0x220] sm:$0xff]
    %v357 = vld [vmem:[#allocation6 + $0x228] sm:$0xff]
    %v358 = vld [vmem:[#allocation6 + $0x230] sm:$0xff]
    %v359 = vld [vmem:[#allocation6 + $0x238] sm:$0xff]
    %v360 = vld [vmem:[#allocation6 + $0x240] sm:$0xff]
    %v361 = vld [vmem:[#allocation6 + $0x248] sm:$0xff]
    %v362 = vld [vmem:[#allocation6 + $0x250] sm:$0xff]
    %v363 = vld [vmem:[#allocation6 + $0x258] sm:$0xff]
    %v364 = vld [vmem:[#allocation6 + $0x260] sm:$0xff]
    %v365 = vld [vmem:[#allocation6 + $0x268] sm:$0xff]
    %v366 = vld [vmem:[#allocation6 + $0x270] sm:$0xff]
    %v367 = vld [vmem:[#allocation6 + $0x278] sm:$0xff]
    %v368 = vld [vmem:[#allocation6 + $0x280] sm:$0xff]
    %v369 = vld [vmem:[#allocation6 + $0x288] sm:$0xff]
    %v370 = vld [vmem:[#allocation6 + $0x290] sm:$0xff]
    %v371 = vld [vmem:[#allocation6 + $0x298] sm:$0xff]
    %v372 = vld [vmem:[#allocation6 + $0x2a0] sm:$0xff]
    %v373 = vld [vmem:[#allocation6 + $0x2a8] sm:$0xff]
    %v374 = vld [vmem:[#allocation6 + $0x2b0] sm:$0xff]
    %v375 = vld [vmem:[#allocation6 + $0x2b8] sm:$0xff]
    %v376 = vld [vmem:[#allocation6 + $0x2c0] sm:$0xff]
    %v377 = vld [vmem:[#allocation6 + $0x2c8] sm:$0xff]
    %v378 = vld [vmem:[#allocation6 + $0x2d0] sm:$0xff]
    %v379 = vld [vmem:[#allocation6 + $0x2d8] sm:$0xff]
    %v380 = vld [vmem:[#allocation6 + $0x2e0] sm:$0xff]
    %v381 = vld [vmem:[#allocation6 + $0x2e8] sm:$0xff]
    %v382 = vld [vmem:[#allocation6 + $0x2f0] sm:$0xff]
    %v383 = vld [vmem:[#allocation6 + $0x2f8] sm:$0xff]
    %v384 = vld [vmem:[#allocation6 + $0x300] sm:$0xff]
    %v385 = vld [vmem:[#allocation6 + $0x308] sm:$0xff]
    %v386 = vld [vmem:[#allocation6 + $0x310] sm:$0xff]
    %v387 = vld [vmem:[#allocation6 + $0x318] sm:$0xff]
    %v388 = vld [vmem:[#allocation6 + $0x320] sm:$0xff]
    %v389 = vld [vmem:[#allocation6 + $0x328] sm:$0xff]
    %v390 = vld [vmem:[#allocation6 + $0x330] sm:$0xff]
    %v391 = vld [vmem:[#allocation6 + $0x338] sm:$0xff]
    %v392 = vld [vmem:[#allocation6 + $0x340] sm:$0xff]
    %v393 = vld [vmem:[#allocation6 + $0x348] sm:$0xff]
    %v394 = vld [vmem:[#allocation6 + $0x350] sm:$0xff]
    %v395 = vld [vmem:[#allocation6 + $0x358] sm:$0xff]
    %v396 = vld [vmem:[#allocation6 + $0x360] sm:$0xff]
    %v397 = vld [vmem:[#allocation6 + $0x368] sm:$0xff]
    %v398 = vld [vmem:[#allocation6 + $0x370] sm:$0xff]
    %v399 = vld [vmem:[#allocation6 + $0x378] sm:$0xff]
    %v400 = vld [vmem:[#allocation6 + $0x380] sm:$0xff]
    %v401 = vld [vmem:[#allocation6 + $0x388] sm:$0xff]
    %v402 = vld [vmem:[#allocation6 + $0x390] sm:$0xff]
    %v403 = vld [vmem:[#allocation6 + $0x398] sm:$0xff]
    %v404 = vld [vmem:[#allocation6 + $0x3a0] sm:$0xff]
    %v405 = vld [vmem:[#allocation6 + $0x3a8] sm:$0xff]
    %v406 = vld [vmem:[#allocation6 + $0x3b0] sm:$0xff]
    %v407 = vld [vmem:[#allocation6 + $0x3b8] sm:$0xff]
    %v408 = vld [vmem:[#allocation6 + $0x3c0] sm:$0xff]
    %v409 = vld [vmem:[#allocation6 + $0x3c8] sm:$0xff]
    %v410 = vld [vmem:[#allocation6 + $0x3d0] sm:$0xff]
    %v411 = vld [vmem:[#allocation6 + $0x3d8] sm:$0xff]
    %v412 = vld [vmem:[#allocation6 + $0x3e0] sm:$0xff]
    %v413 = vld [vmem:[#allocation6 + $0x3e8] sm:$0xff]
    %v414 = vld [vmem:[#allocation6 + $0x3f0] sm:$0xff]
    %v415 = vld [vmem:[#allocation6 + $0x3f8] sm:$0xff]
    %v416 = vld [vmem:[#allocation6 + $0x400] sm:$0xff]
    %v417 = vld [vmem:[#allocation6 + $0x408] sm:$0xff]
    %v418 = vld [vmem:[#allocation6 + $0x410] sm:$0xff]
    %v419 = vld [vmem:[#allocation6 + $0x418] sm:$0xff]
    %v420 = vld [vmem:[#allocation6 + $0x420] sm:$0xff]
    %v421 = vld [vmem:[#allocation6 + $0x428] sm:$0xff]
    %v422 = vld [vmem:[#allocation6 + $0x430] sm:$0xff]
    %v423 = vld [vmem:[#allocation6 + $0x438] sm:$0xff]
    %v424 = vld [vmem:[#allocation6 + $0x440] sm:$0xff]
    %v425 = vld [vmem:[#allocation6 + $0x448] sm:$0xff]
    %v426 = vld [vmem:[#allocation6 + $0x450] sm:$0xff]
    %v427 = vld [vmem:[#allocation6 + $0x458] sm:$0xff]
    %v428 = vld [vmem:[#allocation6 + $0x460] sm:$0xff]
    %v429 = vld [vmem:[#allocation6 + $0x468] sm:$0xff]
    %v430 = vld [vmem:[#allocation6 + $0x470] sm:$0xff]
    %v431 = vld [vmem:[#allocation6 + $0x478] sm:$0xff]
    %v432 = vld [vmem:[#allocation6 + $0x480] sm:$0xff]
    %v433 = vld [vmem:[#allocation6 + $0x488] sm:$0xff]
    %v434 = vld [vmem:[#allocation6 + $0x490] sm:$0xff]
    %v435 = vld [vmem:[#allocation6 + $0x498] sm:$0xff]
    %v436 = vld [vmem:[#allocation6 + $0x4a0] sm:$0xff]
    %v437 = vld [vmem:[#allocation6 + $0x4a8] sm:$0xff]
    %v438 = vld [vmem:[#allocation6 + $0x4b0] sm:$0xff]
    %v439 = vld [vmem:[#allocation6 + $0x4b8] sm:$0xff]
    %v440 = vld [vmem:[#allocation6 + $0x4c0] sm:$0xff]
    %v441 = vld [vmem:[#allocation6 + $0x4c8] sm:$0xff]
    %v442 = vld [vmem:[#allocation6 + $0x4d0] sm:$0xff]
    %v443 = vld [vmem:[#allocation6 + $0x4d8] sm:$0xff]
    %v444 = vld [vmem:[#allocation6 + $0x4e0] sm:$0xff]
    %v445 = vld [vmem:[#allocation6 + $0x4e8] sm:$0xff]
    %v446 = vld [vmem:[#allocation6 + $0x4f0] sm:$0xff]
    %v447 = vld [vmem:[#allocation6 + $0x4f8] sm:$0xff]
    %v448 = vld [vmem:[#allocation6 + $0x500] sm:$0xff]
    %v449 = vld [vmem:[#allocation6 + $0x508] sm:$0xff]
    %v450 = vld [vmem:[#allocation6 + $0x510] sm:$0xff]
    %v451 = vld [vmem:[#allocation6 + $0x518] sm:$0xff]
    %v452 = vld [vmem:[#allocation6 + $0x520] sm:$0xff]
    %v453 = vld [vmem:[#allocation6 + $0x528] sm:$0xff]
    %v454 = vld [vmem:[#allocation6 + $0x530] sm:$0xff]
    %v455 = vld [vmem:[#allocation6 + $0x538] sm:$0xff]
    %v456 = vld [vmem:[#allocation6 + $0x540] sm:$0xff]
    %v457 = vld [vmem:[#allocation6 + $0x548] sm:$0xff]
    %v458 = vld [vmem:[#allocation6 + $0x550] sm:$0xff]
    %v459 = vld [vmem:[#allocation6 + $0x558] sm:$0xff]
    %v460 = vld [vmem:[#allocation6 + $0x560] sm:$0xff]
    %v461 = vld [vmem:[#allocation6 + $0x568] sm:$0xff]
    %v462 = vld [vmem:[#allocation6 + $0x570] sm:$0xff]
    %v463 = vld [vmem:[#allocation6 + $0x578] sm:$0xff]
    %v464 = vld [vmem:[#allocation6 + $0x580] sm:$0xff]
    %v465 = vld [vmem:[#allocation6 + $0x588] sm:$0xff]
    %v466 = vld [vmem:[#allocation6 + $0x590] sm:$0xff]
    %v467 = vld [vmem:[#allocation6 + $0x598] sm:$0xff]
    %v468 = vld [vmem:[#allocation6 + $0x5a0] sm:$0xff]
    %v469 = vld [vmem:[#allocation6 + $0x5a8] sm:$0xff]
    %v470 = vld [vmem:[#allocation6 + $0x5b0] sm:$0xff]
    %v471 = vld [vmem:[#allocation6 + $0x5b8] sm:$0xff]
    %v472 = vld [vmem:[#allocation6 + $0x5c0] sm:$0xff]
    %v473 = vld [vmem:[#allocation6 + $0x5c8] sm:$0xff]
    %v474 = vld [vmem:[#allocation6 + $0x5d0] sm:$0xff]
    %v475 = vld [vmem:[#allocation6 + $0x5d8] sm:$0xff]
    %v476 = vld [vmem:[#allocation6 + $0x5e0] sm:$0xff]
    %v477 = vld [vmem:[#allocation6 + $0x5e8] sm:$0xff]
    %v478 = vld [vmem:[#allocation6 + $0x5f0] sm:$0xff]
    %v479 = vld [vmem:[#allocation6 + $0x5f8] sm:$0xff]
    %v480 = vld [vmem:[#allocation6 + $0x600] sm:$0xff]
    %v481 = vld [vmem:[#allocation6 + $0x608] sm:$0xff]
    %v482 = vld [vmem:[#allocation6 + $0x610] sm:$0xff]
    %v483 = vld [vmem:[#allocation6 + $0x618] sm:$0xff]
    %v484 = vld [vmem:[#allocation6 + $0x620] sm:$0xff]
    %v485 = vld [vmem:[#allocation6 + $0x628] sm:$0xff]
    %v486 = vld [vmem:[#allocation6 + $0x630] sm:$0xff]
    %v487 = vld [vmem:[#allocation6 + $0x638] sm:$0xff]
    %v488 = vld [vmem:[#allocation6 + $0x640] sm:$0xff]
    %v489 = vld [vmem:[#allocation6 + $0x648] sm:$0xff]
    %v490 = vld [vmem:[#allocation6 + $0x650] sm:$0xff]
    %v491 = vld [vmem:[#allocation6 + $0x658] sm:$0xff]
    %v492 = vld [vmem:[#allocation6 + $0x660] sm:$0xff]
    %v493 = vld [vmem:[#allocation6 + $0x668] sm:$0xff]
    %v494 = vld [vmem:[#allocation6 + $0x670] sm:$0xff]
    %v495 = vld [vmem:[#allocation6 + $0x678] sm:$0xff]
    %v496 = vld [vmem:[#allocation6 + $0x680] sm:$0xff]
    %v497 = vld [vmem:[#allocation6 + $0x688] sm:$0xff]
    %v498 = vld [vmem:[#allocation6 + $0x690] sm:$0xff]
    %v499 = vld [vmem:[#allocation6 + $0x698] sm:$0xff]
    %v500 = vld [vmem:[#allocation6 + $0x6a0] sm:$0xff]
    %v501 = vld [vmem:[#allocation6 + $0x6a8] sm:$0xff]
    %v502 = vld [vmem:[#allocation6 + $0x6b0] sm:$0xff]
    %v503 = vld [vmem:[#allocation6 + $0x6b8] sm:$0xff]
    %v504 = vld [vmem:[#allocation6 + $0x6c0] sm:$0xff]
    %v505 = vld [vmem:[#allocation6 + $0x6c8] sm:$0xff]
    %v506 = vld [vmem:[#allocation6 + $0x6d0] sm:$0xff]
    %v507 = vld [vmem:[#allocation6 + $0x6d8] sm:$0xff]
    %v508 = vld [vmem:[#allocation6 + $0x6e0] sm:$0xff]
    %v509 = vld [vmem:[#allocation6 + $0x6e8] sm:$0xff]
    %v510 = vld [vmem:[#allocation6 + $0x6f0] sm:$0xff]
    %v511 = vld [vmem:[#allocation6 + $0x6f8] sm:$0xff]
    %v512 = vld [vmem:[#allocation6 + $0x700] sm:$0xff]
    %v513 = vld [vmem:[#allocation6 + $0x708] sm:$0xff]
    %v514 = vld [vmem:[#allocation6 + $0x710] sm:$0xff]
    %v515 = vld [vmem:[#allocation6 + $0x718] sm:$0xff]
    %v516 = vld [vmem:[#allocation6 + $0x720] sm:$0xff]
    %v517 = vld [vmem:[#allocation6 + $0x728] sm:$0xff]
    %v518 = vld [vmem:[#allocation6 + $0x730] sm:$0xff]
    %v519 = vld [vmem:[#allocation6 + $0x738] sm:$0xff]
    %v520 = vld [vmem:[#allocation6 + $0x740] sm:$0xff]
    %v521 = vld [vmem:[#allocation6 + $0x748] sm:$0xff]
    %v522 = vld [vmem:[#allocation6 + $0x750] sm:$0xff]
    %v523 = vld [vmem:[#allocation6 + $0x758] sm:$0xff]
    %v524 = vld [vmem:[#allocation6 + $0x760] sm:$0xff]
    %v525 = vld [vmem:[#allocation6 + $0x768] sm:$0xff]
    %v526 = vld [vmem:[#allocation6 + $0x770] sm:$0xff]
    %v527 = vld [vmem:[#allocation6 + $0x778] sm:$0xff]
    %v528 = vld [vmem:[#allocation6 + $0x780] sm:$0xff]
    %v529 = vld [vmem:[#allocation6 + $0x788] sm:$0xff]
    %v530 = vld [vmem:[#allocation6 + $0x790] sm:$0xff]
    %v531 = vld [vmem:[#allocation6 + $0x798] sm:$0xff]
    %v532 = vld [vmem:[#allocation6 + $0x7a0] sm:$0xff]
    %v533 = vld [vmem:[#allocation6 + $0x7a8] sm:$0xff]
    %v534 = vld [vmem:[#allocation6 + $0x7b0] sm:$0xff]
    %v535 = vld [vmem:[#allocation6 + $0x7b8] sm:$0xff]
    %v536 = vld [vmem:[#allocation6 + $0x7c0] sm:$0xff]
    %v537 = vld [vmem:[#allocation6 + $0x7c8] sm:$0xff]
    %v538 = vld [vmem:[#allocation6 + $0x7d0] sm:$0xff]
    %v539 = vld [vmem:[#allocation6 + $0x7d8] sm:$0xff]
    %v540 = vld [vmem:[#allocation6 + $0x7e0] sm:$0xff]
    %v541 = vld [vmem:[#allocation6 + $0x7e8] sm:$0xff]
    %v542 = vld [vmem:[#allocation6 + $0x7f0] sm:$0xff]
    %v543 = vld [vmem:[#allocation6 + $0x7f8] sm:$0xff]
    %v544 = vld [vmem:[#allocation6 + $0x800] sm:$0xff]
    %v545 = vld [vmem:[#allocation6 + $0x808] sm:$0xff]
    %v546 = vld [vmem:[#allocation6 + $0x810] sm:$0xff]
    %v547 = vld [vmem:[#allocation6 + $0x818] sm:$0xff]
    %v548 = vld [vmem:[#allocation6 + $0x820] sm:$0xff]
    %v549 = vld [vmem:[#allocation6 + $0x828] sm:$0xff]
    %v550 = vld [vmem:[#allocation6 + $0x830] sm:$0xff]
    %v551 = vld [vmem:[#allocation6 + $0x838] sm:$0xff]
    %v552 = vld [vmem:[#allocation6 + $0x840] sm:$0xff]
    %v553 = vld [vmem:[#allocation6 + $0x848] sm:$0xff]
    %v554 = vld [vmem:[#allocation6 + $0x850] sm:$0xff]
    %v555 = vld [vmem:[#allocation6 + $0x858] sm:$0xff]
    %v556 = vld [vmem:[#allocation6 + $0x860] sm:$0xff]
    %v557 = vld [vmem:[#allocation6 + $0x868] sm:$0xff]
    %v558 = vld [vmem:[#allocation6 + $0x870] sm:$0xff]
    %v559 = vld [vmem:[#allocation6 + $0x878] sm:$0xff]
    %v560 = vld [vmem:[#allocation6 + $0x880] sm:$0xff]
    %v561 = vld [vmem:[#allocation6 + $0x888] sm:$0xff]
    %v562 = vld [vmem:[#allocation6 + $0x890] sm:$0xff]
    %v563 = vld [vmem:[#allocation6 + $0x898] sm:$0xff]
    %v564 = vld [vmem:[#allocation6 + $0x8a0] sm:$0xff]
    %v565 = vld [vmem:[#allocation6 + $0x8a8] sm:$0xff]
    %v566 = vld [vmem:[#allocation6 + $0x8b0] sm:$0xff]
    %v567 = vld [vmem:[#allocation6 + $0x8b8] sm:$0xff]
    %v568 = vld [vmem:[#allocation6 + $0x8c0] sm:$0xff]
    %v569 = vld [vmem:[#allocation6 + $0x8c8] sm:$0xff]
    %v570 = vld [vmem:[#allocation6 + $0x8d0] sm:$0xff]
    %v571 = vld [vmem:[#allocation6 + $0x8d8] sm:$0xff]
    %v572 = vld [vmem:[#allocation6 + $0x8e0] sm:$0xff]
    %v573 = vld [vmem:[#allocation6 + $0x8e8] sm:$0xff]
    %v574 = vld [vmem:[#allocation6 + $0x8f0] sm:$0xff]
    %v575 = vld [vmem:[#allocation6 + $0x8f8] sm:$0xff]
    %v576 = vld [vmem:[#allocation6 + $0x900] sm:$0xff]
    %v577 = vld [vmem:[#allocation6 + $0x908] sm:$0xff]
    %v578 = vld [vmem:[#allocation6 + $0x910] sm:$0xff]
    %v579 = vld [vmem:[#allocation6 + $0x918] sm:$0xff]
    %v580 = vld [vmem:[#allocation6 + $0x920] sm:$0xff]
    %v581 = vld [vmem:[#allocation6 + $0x928] sm:$0xff]
    %v582 = vld [vmem:[#allocation6 + $0x930] sm:$0xff]
    %v583 = vld [vmem:[#allocation6 + $0x938] sm:$0xff]
    %v584 = vld [vmem:[#allocation6 + $0x940] sm:$0xff]
    %v585 = vld [vmem:[#allocation6 + $0x948] sm:$0xff]
    %v586 = vld [vmem:[#allocation6 + $0x950] sm:$0xff]
    %v587 = vld [vmem:[#allocation6 + $0x958] sm:$0xff]
    %v588 = vld [vmem:[#allocation6 + $0x960] sm:$0xff]
    %v589 = vld [vmem:[#allocation6 + $0x968] sm:$0xff]
    %v590 = vld [vmem:[#allocation6 + $0x970] sm:$0xff]
    %v591 = vld [vmem:[#allocation6 + $0x978] sm:$0xff]
    %v592 = vld [vmem:[#allocation6 + $0x980] sm:$0xff]
    %v593 = vld [vmem:[#allocation6 + $0x988] sm:$0xff]
    %v594 = vld [vmem:[#allocation6 + $0x990] sm:$0xff]
    %v595 = vld [vmem:[#allocation6 + $0x998] sm:$0xff]
    %v596 = vld [vmem:[#allocation6 + $0x9a0] sm:$0xff]
    %v597 = vld [vmem:[#allocation6 + $0x9a8] sm:$0xff]
    %v598 = vld [vmem:[#allocation6 + $0x9b0] sm:$0xff]
    %v599 = vld [vmem:[#allocation6 + $0x9b8] sm:$0xff]
    %v600 = vld [vmem:[#allocation6 + $0x9c0] sm:$0xff]
    %v601 = vld [vmem:[#allocation6 + $0x9c8] sm:$0xff]
    %v602 = vld [vmem:[#allocation6 + $0x9d0] sm:$0xff]
    %v603 = vld [vmem:[#allocation6 + $0x9d8] sm:$0xff]
    %v604 = vld [vmem:[#allocation6 + $0x9e0] sm:$0xff]
    %v605 = vld [vmem:[#allocation6 + $0x9e8] sm:$0xff]
    %v606 = vld [vmem:[#allocation6 + $0x9f0] sm:$0xff]
    %v607 = vld [vmem:[#allocation6 + $0x9f8] sm:$0xff]
    %v608 = vld [vmem:[#allocation6 + $0xa00] sm:$0xff]
    %v609 = vld [vmem:[#allocation6 + $0xa08] sm:$0xff]
    %v610 = vld [vmem:[#allocation6 + $0xa10] sm:$0xff]
    %v611 = vld [vmem:[#allocation6 + $0xa18] sm:$0xff]
    %v612 = vld [vmem:[#allocation6 + $0xa20] sm:$0xff]
    %v613 = vld [vmem:[#allocation6 + $0xa28] sm:$0xff]
    %v614 = vld [vmem:[#allocation6 + $0xa30] sm:$0xff]
    %v615 = vld [vmem:[#allocation6 + $0xa38] sm:$0xff]
    %v616 = vld [vmem:[#allocation6 + $0xa40] sm:$0xff]
    %v617 = vld [vmem:[#allocation6 + $0xa48] sm:$0xff]
    %v618 = vld [vmem:[#allocation6 + $0xa50] sm:$0xff]
    %v619 = vld [vmem:[#allocation6 + $0xa58] sm:$0xff]
    %v620 = vld [vmem:[#allocation6 + $0xa60] sm:$0xff]
    %v621 = vld [vmem:[#allocation6 + $0xa68] sm:$0xff]
    %v622 = vld [vmem:[#allocation6 + $0xa70] sm:$0xff]
    %v623 = vld [vmem:[#allocation6 + $0xa78] sm:$0xff]
    %v624 = vld [vmem:[#allocation6 + $0xa80] sm:$0xff]
    %v625 = vld [vmem:[#allocation6 + $0xa88] sm:$0xff]
    %v626 = vld [vmem:[#allocation6 + $0xa90] sm:$0xff]
    %v627 = vld [vmem:[#allocation6 + $0xa98] sm:$0xff]
    %v628 = vld [vmem:[#allocation6 + $0xaa0] sm:$0xff]
    %v629 = vld [vmem:[#allocation6 + $0xaa8] sm:$0xff]
    %v630 = vld [vmem:[#allocation6 + $0xab0] sm:$0xff]
    %v631 = vld [vmem:[#allocation6 + $0xab8] sm:$0xff]
    %v632 = vld [vmem:[#allocation6 + $0xac0] sm:$0xff]
    %v633 = vld [vmem:[#allocation6 + $0xac8] sm:$0xff]
    %v634 = vld [vmem:[#allocation6 + $0xad0] sm:$0xff]
    %v635 = vld [vmem:[#allocation6 + $0xad8] sm:$0xff]
    %v636 = vld [vmem:[#allocation6 + $0xae0] sm:$0xff]
    %v637 = vld [vmem:[#allocation6 + $0xae8] sm:$0xff]
    %v638 = vld [vmem:[#allocation6 + $0xaf0] sm:$0xff]
    %v639 = vld [vmem:[#allocation6 + $0xaf8] sm:$0xff]
    %v640 = vld [vmem:[#allocation6 + $0xb00] sm:$0xff]
    %v641 = vld [vmem:[#allocation6 + $0xb08] sm:$0xff]
    %v642 = vld [vmem:[#allocation6 + $0xb10] sm:$0xff]
    %v643 = vld [vmem:[#allocation6 + $0xb18] sm:$0xff]
    %v644 = vld [vmem:[#allocation6 + $0xb20] sm:$0xff]
    %v645 = vld [vmem:[#allocation6 + $0xb28] sm:$0xff]
    %v646 = vld [vmem:[#allocation6 + $0xb30] sm:$0xff]
    %v647 = vld [vmem:[#allocation6 + $0xb38] sm:$0xff]
    %v648 = vld [vmem:[#allocation6 + $0xb40] sm:$0xff]
    %v649 = vld [vmem:[#allocation6 + $0xb48] sm:$0xff]
    %v650 = vld [vmem:[#allocation6 + $0xb50] sm:$0xff]
    %v651 = vld [vmem:[#allocation6 + $0xb58] sm:$0xff]
    %v652 = vld [vmem:[#allocation6 + $0xb60] sm:$0xff]
    %v653 = vld [vmem:[#allocation6 + $0xb68] sm:$0xff]
    %v654 = vld [vmem:[#allocation6 + $0xb70] sm:$0xff]
    %v655 = vld [vmem:[#allocation6 + $0xb78] sm:$0xff]
    %v656 = vld [vmem:[#allocation6 + $0xb80] sm:$0xff]
    %v657 = vld [vmem:[#allocation6 + $0xb88] sm:$0xff]
    %v658 = vld [vmem:[#allocation6 + $0xb90] sm:$0xff]
    %v659 = vld [vmem:[#allocation6 + $0xb98] sm:$0xff]
    %v660 = vld [vmem:[#allocation6 + $0xba0] sm:$0xff]
    %v661 = vld [vmem:[#allocation6 + $0xba8] sm:$0xff]
    %v662 = vld [vmem:[#allocation6 + $0xbb0] sm:$0xff]
    %v663 = vld [vmem:[#allocation6 + $0xbb8] sm:$0xff]
    %v664 = vld [vmem:[#allocation6 + $0xbc0] sm:$0xff]
    %v665 = vld [vmem:[#allocation6 + $0xbc8] sm:$0xff]
    %v666 = vld [vmem:[#allocation6 + $0xbd0] sm:$0xff]
    %v667 = vld [vmem:[#allocation6 + $0xbd8] sm:$0xff]
    %v668 = vld [vmem:[#allocation6 + $0xbe0] sm:$0xff]
    %v669 = vld [vmem:[#allocation6 + $0xbe8] sm:$0xff]
    %v670 = vld [vmem:[#allocation6 + $0xbf0] sm:$0xff]
    %v671 = vld [vmem:[#allocation6 + $0xbf8] sm:$0xff]
    %v672 = vld [vmem:[#allocation6 + $0xc00] sm:$0xff]
    %v673 = vld [vmem:[#allocation6 + $0xc08] sm:$0xff]
    %v674 = vld [vmem:[#allocation6 + $0xc10] sm:$0xff]
    %v675 = vld [vmem:[#allocation6 + $0xc18] sm:$0xff]
    %v676 = vld [vmem:[#allocation6 + $0xc20] sm:$0xff]
    %v677 = vld [vmem:[#allocation6 + $0xc28] sm:$0xff]
    %v678 = vld [vmem:[#allocation6 + $0xc30] sm:$0xff]
    %v679 = vld [vmem:[#allocation6 + $0xc38] sm:$0xff]
    %v680 = vld [vmem:[#allocation6 + $0xc40] sm:$0xff]
    %v681 = vld [vmem:[#allocation6 + $0xc48] sm:$0xff]
    %v682 = vld [vmem:[#allocation6 + $0xc50] sm:$0xff]
    %v683 = vld [vmem:[#allocation6 + $0xc58] sm:$0xff]
    %v684 = vld [vmem:[#allocation6 + $0xc60] sm:$0xff]
    %v685 = vld [vmem:[#allocation6 + $0xc68] sm:$0xff]
    %v686 = vld [vmem:[#allocation6 + $0xc70] sm:$0xff]
    %v687 = vld [vmem:[#allocation6 + $0xc78] sm:$0xff]
    %v688 = vld [vmem:[#allocation6 + $0xc80] sm:$0xff]
    %v689 = vld [vmem:[#allocation6 + $0xc88] sm:$0xff]
    %v690 = vld [vmem:[#allocation6 + $0xc90] sm:$0xff]
    %v691 = vld [vmem:[#allocation6 + $0xc98] sm:$0xff]
    %v692 = vld [vmem:[#allocation6 + $0xca0] sm:$0xff]
    %v693 = vld [vmem:[#allocation6 + $0xca8] sm:$0xff]
    %v694 = vld [vmem:[#allocation6 + $0xcb0] sm:$0xff]
    %v695 = vld [vmem:[#allocation6 + $0xcb8] sm:$0xff]
    %v696 = vld [vmem:[#allocation6 + $0xcc0] sm:$0xff]
    %v697 = vld [vmem:[#allocation6 + $0xcc8] sm:$0xff]
    %v698 = vld [vmem:[#allocation6 + $0xcd0] sm:$0xff]
    %v699 = vld [vmem:[#allocation6 + $0xcd8] sm:$0xff]
    %v700 = vld [vmem:[#allocation6 + $0xce0] sm:$0xff]
    %v701 = vld [vmem:[#allocation6 + $0xce8] sm:$0xff]
    %v702 = vld [vmem:[#allocation6 + $0xcf0] sm:$0xff]
    %v703 = vld [vmem:[#allocation6 + $0xcf8] sm:$0xff]
    %v704 = vld [vmem:[#allocation6 + $0xd00] sm:$0xff]
    %v705 = vld [vmem:[#allocation6 + $0xd08] sm:$0xff]
    %v706 = vld [vmem:[#allocation6 + $0xd10] sm:$0xff]
    %v707 = vld [vmem:[#allocation6 + $0xd18] sm:$0xff]
    %v708 = vld [vmem:[#allocation6 + $0xd20] sm:$0xff]
    %v709 = vld [vmem:[#allocation6 + $0xd28] sm:$0xff]
    %v710 = vld [vmem:[#allocation6 + $0xd30] sm:$0xff]
    %v711 = vld [vmem:[#allocation6 + $0xd38] sm:$0xff]
    %v712 = vld [vmem:[#allocation6 + $0xd40] sm:$0xff]
    %v713 = vld [vmem:[#allocation6 + $0xd48] sm:$0xff]
    %v714 = vld [vmem:[#allocation6 + $0xd50] sm:$0xff]
    %v715 = vld [vmem:[#allocation6 + $0xd58] sm:$0xff]
    %v716 = vld [vmem:[#allocation6 + $0xd60] sm:$0xff]
    %v717 = vld [vmem:[#allocation6 + $0xd68] sm:$0xff]
    %v718 = vld [vmem:[#allocation6 + $0xd70] sm:$0xff]
    %v719 = vld [vmem:[#allocation6 + $0xd78] sm:$0xff]
    %v720 = vld [vmem:[#allocation6 + $0xd80] sm:$0xff]
    %v721 = vld [vmem:[#allocation6 + $0xd88] sm:$0xff]
    %v722 = vld [vmem:[#allocation6 + $0xd90] sm:$0xff]
    %v723 = vld [vmem:[#allocation6 + $0xd98] sm:$0xff]
    %v724 = vld [vmem:[#allocation6 + $0xda0] sm:$0xff]
    %v725 = vld [vmem:[#allocation6 + $0xda8] sm:$0xff]
    %v726 = vld [vmem:[#allocation6 + $0xdb0] sm:$0xff]
    %v727 = vld [vmem:[#allocation6 + $0xdb8] sm:$0xff]
    %v728 = vld [vmem:[#allocation6 + $0xdc0] sm:$0xff]
    %v729 = vld [vmem:[#allocation6 + $0xdc8] sm:$0xff]
    %v730 = vld [vmem:[#allocation6 + $0xdd0] sm:$0xff]
    %v731 = vld [vmem:[#allocation6 + $0xdd8] sm:$0xff]
    %v732 = vld [vmem:[#allocation6 + $0xde0] sm:$0xff]
    %v733 = vld [vmem:[#allocation6 + $0xde8] sm:$0xff]
    %v734 = vld [vmem:[#allocation6 + $0xdf0] sm:$0xff]
    %v735 = vld [vmem:[#allocation6 + $0xdf8] sm:$0xff]
    %v736 = vld [vmem:[#allocation6 + $0xe00] sm:$0xff]
    %v737 = vld [vmem:[#allocation6 + $0xe08] sm:$0xff]
    %v738 = vld [vmem:[#allocation6 + $0xe10] sm:$0xff]
    %v739 = vld [vmem:[#allocation6 + $0xe18] sm:$0xff]
    %v740 = vld [vmem:[#allocation6 + $0xe20] sm:$0xff]
    %v741 = vld [vmem:[#allocation6 + $0xe28] sm:$0xff]
    %v742 = vld [vmem:[#allocation6 + $0xe30] sm:$0xff]
    %v743 = vld [vmem:[#allocation6 + $0xe38] sm:$0xff]
    %v744 = vld [vmem:[#allocation6 + $0xe40] sm:$0xff]
    %v745 = vld [vmem:[#allocation6 + $0xe48] sm:$0xff]
    %v746 = vld [vmem:[#allocation6 + $0xe50] sm:$0xff]
    %v747 = vld [vmem:[#allocation6 + $0xe58] sm:$0xff]
    %v748 = vld [vmem:[#allocation6 + $0xe60] sm:$0xff]
    %v749 = vld [vmem:[#allocation6 + $0xe68] sm:$0xff]
    %v750 = vld [vmem:[#allocation6 + $0xe70] sm:$0xff]
    %v751 = vld [vmem:[#allocation6 + $0xe78] sm:$0xff]
    %v752 = vld [vmem:[#allocation6 + $0xe80] sm:$0xff]
    %v753 = vld [vmem:[#allocation6 + $0xe88] sm:$0xff]
    %v754 = vld [vmem:[#allocation6 + $0xe90] sm:$0xff]
    %v755 = vld [vmem:[#allocation6 + $0xe98] sm:$0xff]
    %v756 = vld [vmem:[#allocation6 + $0xea0] sm:$0xff]
    %v757 = vld [vmem:[#allocation6 + $0xea8] sm:$0xff]
    %v758 = vld [vmem:[#allocation6 + $0xeb0] sm:$0xff]
    %v759 = vld [vmem:[#allocation6 + $0xeb8] sm:$0xff]
    %v760 = vld [vmem:[#allocation6 + $0xec0] sm:$0xff]
    %v761 = vld [vmem:[#allocation6 + $0xec8] sm:$0xff]
    %v762 = vld [vmem:[#allocation6 + $0xed0] sm:$0xff]
    %v763 = vld [vmem:[#allocation6 + $0xed8] sm:$0xff]
    %v764 = vld [vmem:[#allocation6 + $0xee0] sm:$0xff]
    %v765 = vld [vmem:[#allocation6 + $0xee8] sm:$0xff]
    %v766 = vld [vmem:[#allocation6 + $0xef0] sm:$0xff]
    %v767 = vld [vmem:[#allocation6 + $0xef8] sm:$0xff]
    %v768 = vld [vmem:[#allocation6 + $0xf00] sm:$0xff]
    %v769 = vld [vmem:[#allocation6 + $0xf08] sm:$0xff]
    %v770 = vld [vmem:[#allocation6 + $0xf10] sm:$0xff]
    %v771 = vld [vmem:[#allocation6 + $0xf18] sm:$0xff]
    %v772 = vld [vmem:[#allocation6 + $0xf20] sm:$0xff]
    %v773 = vld [vmem:[#allocation6 + $0xf28] sm:$0xff]
    %v774 = vld [vmem:[#allocation6 + $0xf30] sm:$0xff]
    %v775 = vld [vmem:[#allocation6 + $0xf38] sm:$0xff]
    %v776 = vld [vmem:[#allocation6 + $0xf40] sm:$0xff]
    %v777 = vld [vmem:[#allocation6 + $0xf48] sm:$0xff]
    %v778 = vld [vmem:[#allocation6 + $0xf50] sm:$0xff]
    %v779 = vld [vmem:[#allocation6 + $0xf58] sm:$0xff]
    %v780 = vld [vmem:[#allocation6 + $0xf60] sm:$0xff]
    %v781 = vld [vmem:[#allocation6 + $0xf68] sm:$0xff]
    %v782 = vld [vmem:[#allocation6 + $0xf70] sm:$0xff]
    %v783 = vld [vmem:[#allocation6 + $0xf78] sm:$0xff]
    %v784 = vld [vmem:[#allocation6 + $0xf80] sm:$0xff]
    %v785 = vld [vmem:[#allocation6 + $0xf88] sm:$0xff]
    %v786 = vld [vmem:[#allocation6 + $0xf90] sm:$0xff]
    %v787 = vld [vmem:[#allocation6 + $0xf98] sm:$0xff]
    %v788 = vld [vmem:[#allocation6 + $0xfa0] sm:$0xff]
    %v789 = vld [vmem:[#allocation6 + $0xfa8] sm:$0xff]
    %v790 = vld [vmem:[#allocation6 + $0xfb0] sm:$0xff]
    %v791 = vld [vmem:[#allocation6 + $0xfb8] sm:$0xff]
    %v792 = vld [vmem:[#allocation6 + $0xfc0] sm:$0xff]
    %v793 = vld [vmem:[#allocation6 + $0xfc8] sm:$0xff]
    %v794 = vld [vmem:[#allocation6 + $0xfd0] sm:$0xff]
    %v795 = vld [vmem:[#allocation6 + $0xfd8] sm:$0xff]
    %v796 = vld [vmem:[#allocation6 + $0xfe0] sm:$0xff]
    %v797 = vld [vmem:[#allocation6 + $0xfe8] sm:$0xff]
    %v798 = vld [vmem:[#allocation6 + $0xff0] sm:$0xff]
    %v799 = vld [vmem:[#allocation6 + $0xff8] sm:$0xff]
    %v804 = vunpack.c.l.b16 %v284
    %v805 = vunpack.c.h.b16 %v284
    %v806 = vunpack.c.l.b16 %v285
    %v807 = vunpack.c.h.b16 %v285
    %v808 = vunpack.c.l.b16 %v286
    %v809 = vunpack.c.h.b16 %v286
    %v810 = vunpack.c.l.b16 %v287
    %v811 = vunpack.c.h.b16 %v287
    %v812 = vpack.c.b16 %v804, %v804
    %v813 = vpack.c.b16 %v805, %v805
    %v814 = vpack.c.b16 %v806, %v806
    %v815 = vpack.c.b16 %v807, %v807
    %v816 = vpack.c.b16 %v808, %v808
    %v817 = vpack.c.b16 %v809, %v809
    %v818 = vpack.c.b16 %v810, %v810
    %v819 = vpack.c.b16 %v811, %v811
    %v1340 = vunpack.c.l.b16 %v288
    %v1341 = vunpack.c.h.b16 %v288
    %v1342 = vunpack.c.l.b16 %v289
    %v1343 = vunpack.c.h.b16 %v289
    %v1344 = vunpack.c.l.b16 %v290
    %v1345 = vunpack.c.h.b16 %v290
    %v1346 = vunpack.c.l.b16 %v291
    %v1347 = vunpack.c.h.b16 %v291
    %v1348 = vunpack.c.l.b16 %v292
    %v1349 = vunpack.c.h.b16 %v292
    %v1350 = vunpack.c.l.b16 %v293
    %v1351 = vunpack.c.h.b16 %v293
    %v1352 = vunpack.c.l.b16 %v294
    %v1353 = vunpack.c.h.b16 %v294
    %v1354 = vunpack.c.l.b16 %v295
    %v1355 = vunpack.c.h.b16 %v295
    %v1356 = vunpack.c.l.b16 %v296
    %v1357 = vunpack.c.h.b16 %v296
    %v1358 = vunpack.c.l.b16 %v297
    %v1359 = vunpack.c.h.b16 %v297
    %v1360 = vunpack.c.l.b16 %v298
    %v1361 = vunpack.c.h.b16 %v298
    %v1362 = vunpack.c.l.b16 %v299
    %v1363 = vunpack.c.h.b16 %v299
    %v1364 = vunpack.c.l.b16 %v300
    %v1365 = vunpack.c.h.b16 %v300
    %v1366 = vunpack.c.l.b16 %v301
    %v1367 = vunpack.c.h.b16 %v301
    %v1368 = vunpack.c.l.b16 %v302
    %v1369 = vunpack.c.h.b16 %v302
    %v1370 = vunpack.c.l.b16 %v303
    %v1371 = vunpack.c.h.b16 %v303
    %v1372 = vunpack.c.l.b16 %v304
    %v1373 = vunpack.c.h.b16 %v304
    %v1374 = vunpack.c.l.b16 %v305
    %v1375 = vunpack.c.h.b16 %v305
    %v1376 = vunpack.c.l.b16 %v306
    %v1377 = vunpack.c.h.b16 %v306
    %v1378 = vunpack.c.l.b16 %v307
    %v1379 = vunpack.c.h.b16 %v307
    %v1380 = vunpack.c.l.b16 %v308
    %v1381 = vunpack.c.h.b16 %v308
    %v1382 = vunpack.c.l.b16 %v309
    %v1383 = vunpack.c.h.b16 %v309
    %v1384 = vunpack.c.l.b16 %v310
    %v1385 = vunpack.c.h.b16 %v310
    %v1386 = vunpack.c.l.b16 %v311
    %v1387 = vunpack.c.h.b16 %v311
    %v1388 = vunpack.c.l.b16 %v312
    %v1389 = vunpack.c.h.b16 %v312
    %v1390 = vunpack.c.l.b16 %v313
    %v1391 = vunpack.c.h.b16 %v313
    %v1392 = vunpack.c.l.b16 %v314
    %v1393 = vunpack.c.h.b16 %v314
    %v1394 = vunpack.c.l.b16 %v315
    %v1395 = vunpack.c.h.b16 %v315
    %v1396 = vunpack.c.l.b16 %v316
    %v1397 = vunpack.c.h.b16 %v316
    %v1398 = vunpack.c.l.b16 %v317
    %v1399 = vunpack.c.h.b16 %v317
    %v1400 = vunpack.c.l.b16 %v318
    %v1401 = vunpack.c.h.b16 %v318
    %v1402 = vunpack.c.l.b16 %v319
    %v1403 = vunpack.c.h.b16 %v319
    %v1404 = vunpack.c.l.b16 %v320
    %v1405 = vunpack.c.h.b16 %v320
    %v1406 = vunpack.c.l.b16 %v321
    %v1407 = vunpack.c.h.b16 %v321
    %v1408 = vunpack.c.l.b16 %v322
    %v1409 = vunpack.c.h.b16 %v322
    %v1410 = vunpack.c.l.b16 %v323
    %v1411 = vunpack.c.h.b16 %v323
    %v1412 = vunpack.c.l.b16 %v324
    %v1413 = vunpack.c.h.b16 %v324
    %v1414 = vunpack.c.l.b16 %v325
    %v1415 = vunpack.c.h.b16 %v325
    %v1416 = vunpack.c.l.b16 %v326
    %v1417 = vunpack.c.h.b16 %v326
    %v1418 = vunpack.c.l.b16 %v327
    %v1419 = vunpack.c.h.b16 %v327
    %v1420 = vunpack.c.l.b16 %v328
    %v1421 = vunpack.c.h.b16 %v328
    %v1422 = vunpack.c.l.b16 %v329
    %v1423 = vunpack.c.h.b16 %v329
    %v1424 = vunpack.c.l.b16 %v330
    %v1425 = vunpack.c.h.b16 %v330
    %v1426 = vunpack.c.l.b16 %v331
    %v1427 = vunpack.c.h.b16 %v331
    %v1428 = vunpack.c.l.b16 %v332
    %v1429 = vunpack.c.h.b16 %v332
    %v1430 = vunpack.c.l.b16 %v333
    %v1431 = vunpack.c.h.b16 %v333
    %v1432 = vunpack.c.l.b16 %v334
    %v1433 = vunpack.c.h.b16 %v334
    %v1434 = vunpack.c.l.b16 %v335
    %v1435 = vunpack.c.h.b16 %v335
    %v1436 = vunpack.c.l.b16 %v336
    %v1437 = vunpack.c.h.b16 %v336
    %v1438 = vunpack.c.l.b16 %v337
    %v1439 = vunpack.c.h.b16 %v337
    %v1440 = vunpack.c.l.b16 %v338
    %v1441 = vunpack.c.h.b16 %v338
    %v1442 = vunpack.c.l.b16 %v339
    %v1443 = vunpack.c.h.b16 %v339
    %v1444 = vunpack.c.l.b16 %v340
    %v1445 = vunpack.c.h.b16 %v340
    %v1446 = vunpack.c.l.b16 %v341
    %v1447 = vunpack.c.h.b16 %v341
    %v1448 = vunpack.c.l.b16 %v342
    %v1449 = vunpack.c.h.b16 %v342
    %v1450 = vunpack.c.l.b16 %v343
    %v1451 = vunpack.c.h.b16 %v343
    %v1452 = vunpack.c.l.b16 %v344
    %v1453 = vunpack.c.h.b16 %v344
    %v1454 = vunpack.c.l.b16 %v345
    %v1455 = vunpack.c.h.b16 %v345
    %v1456 = vunpack.c.l.b16 %v346
    %v1457 = vunpack.c.h.b16 %v346
    %v1458 = vunpack.c.l.b16 %v347
    %v1459 = vunpack.c.h.b16 %v347
    %v1460 = vunpack.c.l.b16 %v348
    %v1461 = vunpack.c.h.b16 %v348
    %v1462 = vunpack.c.l.b16 %v349
    %v1463 = vunpack.c.h.b16 %v349
    %v1464 = vunpack.c.l.b16 %v350
    %v1465 = vunpack.c.h.b16 %v350
    %v1466 = vunpack.c.l.b16 %v351
    %v1467 = vunpack.c.h.b16 %v351
    %v1468 = vunpack.c.l.b16 %v352
    %v1469 = vunpack.c.h.b16 %v352
    %v1470 = vunpack.c.l.b16 %v353
    %v1471 = vunpack.c.h.b16 %v353
    %v1472 = vunpack.c.l.b16 %v354
    %v1473 = vunpack.c.h.b16 %v354
    %v1474 = vunpack.c.l.b16 %v355
    %v1475 = vunpack.c.h.b16 %v355
    %v1476 = vunpack.c.l.b16 %v356
    %v1477 = vunpack.c.h.b16 %v356
    %v1478 = vunpack.c.l.b16 %v357
    %v1479 = vunpack.c.h.b16 %v357
    %v1480 = vunpack.c.l.b16 %v358
    %v1481 = vunpack.c.h.b16 %v358
    %v1482 = vunpack.c.l.b16 %v359
    %v1483 = vunpack.c.h.b16 %v359
    %v1484 = vunpack.c.l.b16 %v360
    %v1485 = vunpack.c.h.b16 %v360
    %v1486 = vunpack.c.l.b16 %v361
    %v1487 = vunpack.c.h.b16 %v361
    %v1488 = vunpack.c.l.b16 %v362
    %v1489 = vunpack.c.h.b16 %v362
    %v1490 = vunpack.c.l.b16 %v363
    %v1491 = vunpack.c.h.b16 %v363
    %v1492 = vunpack.c.l.b16 %v364
    %v1493 = vunpack.c.h.b16 %v364
    %v1494 = vunpack.c.l.b16 %v365
    %v1495 = vunpack.c.h.b16 %v365
    %v1496 = vunpack.c.l.b16 %v366
    %v1497 = vunpack.c.h.b16 %v366
    %v1498 = vunpack.c.l.b16 %v367
    %v1499 = vunpack.c.h.b16 %v367
    %v1500 = vunpack.c.l.b16 %v368
    %v1501 = vunpack.c.h.b16 %v368
    %v1502 = vunpack.c.l.b16 %v369
    %v1503 = vunpack.c.h.b16 %v369
    %v1504 = vunpack.c.l.b16 %v370
    %v1505 = vunpack.c.h.b16 %v370
    %v1506 = vunpack.c.l.b16 %v371
    %v1507 = vunpack.c.h.b16 %v371
    %v1508 = vunpack.c.l.b16 %v372
    %v1509 = vunpack.c.h.b16 %v372
    %v1510 = vunpack.c.l.b16 %v373
    %v1511 = vunpack.c.h.b16 %v373
    %v1512 = vunpack.c.l.b16 %v374
    %v1513 = vunpack.c.h.b16 %v374
    %v1514 = vunpack.c.l.b16 %v375
    %v1515 = vunpack.c.h.b16 %v375
    %v1516 = vunpack.c.l.b16 %v376
    %v1517 = vunpack.c.h.b16 %v376
    %v1518 = vunpack.c.l.b16 %v377
    %v1519 = vunpack.c.h.b16 %v377
    %v1520 = vunpack.c.l.b16 %v378
    %v1521 = vunpack.c.h.b16 %v378
    %v1522 = vunpack.c.l.b16 %v379
    %v1523 = vunpack.c.h.b16 %v379
    %v1524 = vunpack.c.l.b16 %v380
    %v1525 = vunpack.c.h.b16 %v380
    %v1526 = vunpack.c.l.b16 %v381
    %v1527 = vunpack.c.h.b16 %v381
    %v1528 = vunpack.c.l.b16 %v382
    %v1529 = vunpack.c.h.b16 %v382
    %v1530 = vunpack.c.l.b16 %v383
    %v1531 = vunpack.c.h.b16 %v383
    %v1532 = vunpack.c.l.b16 %v384
    %v1533 = vunpack.c.h.b16 %v384
    %v1534 = vunpack.c.l.b16 %v385
    %v1535 = vunpack.c.h.b16 %v385
    %v1536 = vunpack.c.l.b16 %v386
    %v1537 = vunpack.c.h.b16 %v386
    %v1538 = vunpack.c.l.b16 %v387
    %v1539 = vunpack.c.h.b16 %v387
    %v1540 = vunpack.c.l.b16 %v388
    %v1541 = vunpack.c.h.b16 %v388
    %v1542 = vunpack.c.l.b16 %v389
    %v1543 = vunpack.c.h.b16 %v389
    %v1544 = vunpack.c.l.b16 %v390
    %v1545 = vunpack.c.h.b16 %v390
    %v1546 = vunpack.c.l.b16 %v391
    %v1547 = vunpack.c.h.b16 %v391
    %v1548 = vunpack.c.l.b16 %v392
    %v1549 = vunpack.c.h.b16 %v392
    %v1550 = vunpack.c.l.b16 %v393
    %v1551 = vunpack.c.h.b16 %v393
    %v1552 = vunpack.c.l.b16 %v394
    %v1553 = vunpack.c.h.b16 %v394
    %v1554 = vunpack.c.l.b16 %v395
    %v1555 = vunpack.c.h.b16 %v395
    %v1556 = vunpack.c.l.b16 %v396
    %v1557 = vunpack.c.h.b16 %v396
    %v1558 = vunpack.c.l.b16 %v397
    %v1559 = vunpack.c.h.b16 %v397
    %v1560 = vunpack.c.l.b16 %v398
    %v1561 = vunpack.c.h.b16 %v398
    %v1562 = vunpack.c.l.b16 %v399
    %v1563 = vunpack.c.h.b16 %v399
    %v1564 = vunpack.c.l.b16 %v400
    %v1565 = vunpack.c.h.b16 %v400
    %v1566 = vunpack.c.l.b16 %v401
    %v1567 = vunpack.c.h.b16 %v401
    %v1568 = vunpack.c.l.b16 %v402
    %v1569 = vunpack.c.h.b16 %v402
    %v1570 = vunpack.c.l.b16 %v403
    %v1571 = vunpack.c.h.b16 %v403
    %v1572 = vunpack.c.l.b16 %v404
    %v1573 = vunpack.c.h.b16 %v404
    %v1574 = vunpack.c.l.b16 %v405
    %v1575 = vunpack.c.h.b16 %v405
    %v1576 = vunpack.c.l.b16 %v406
    %v1577 = vunpack.c.h.b16 %v406
    %v1578 = vunpack.c.l.b16 %v407
    %v1579 = vunpack.c.h.b16 %v407
    %v1580 = vunpack.c.l.b16 %v408
    %v1581 = vunpack.c.h.b16 %v408
    %v1582 = vunpack.c.l.b16 %v409
    %v1583 = vunpack.c.h.b16 %v409
    %v1584 = vunpack.c.l.b16 %v410
    %v1585 = vunpack.c.h.b16 %v410
    %v1586 = vunpack.c.l.b16 %v411
    %v1587 = vunpack.c.h.b16 %v411
    %v1588 = vunpack.c.l.b16 %v412
    %v1589 = vunpack.c.h.b16 %v412
    %v1590 = vunpack.c.l.b16 %v413
    %v1591 = vunpack.c.h.b16 %v413
    %v1592 = vunpack.c.l.b16 %v414
    %v1593 = vunpack.c.h.b16 %v414
    %v1594 = vunpack.c.l.b16 %v415
    %v1595 = vunpack.c.h.b16 %v415
    %v1596 = vunpack.c.l.b16 %v416
    %v1597 = vunpack.c.h.b16 %v416
    %v1598 = vunpack.c.l.b16 %v417
    %v1599 = vunpack.c.h.b16 %v417
    %v1600 = vunpack.c.l.b16 %v418
    %v1601 = vunpack.c.h.b16 %v418
    %v1602 = vunpack.c.l.b16 %v419
    %v1603 = vunpack.c.h.b16 %v419
    %v1604 = vunpack.c.l.b16 %v420
    %v1605 = vunpack.c.h.b16 %v420
    %v1606 = vunpack.c.l.b16 %v421
    %v1607 = vunpack.c.h.b16 %v421
    %v1608 = vunpack.c.l.b16 %v422
    %v1609 = vunpack.c.h.b16 %v422
    %v1610 = vunpack.c.l.b16 %v423
    %v1611 = vunpack.c.h.b16 %v423
    %v1612 = vunpack.c.l.b16 %v424
    %v1613 = vunpack.c.h.b16 %v424
    %v1614 = vunpack.c.l.b16 %v425
    %v1615 = vunpack.c.h.b16 %v425
    %v1616 = vunpack.c.l.b16 %v426
    %v1617 = vunpack.c.h.b16 %v426
    %v1618 = vunpack.c.l.b16 %v427
    %v1619 = vunpack.c.h.b16 %v427
    %v1620 = vunpack.c.l.b16 %v428
    %v1621 = vunpack.c.h.b16 %v428
    %v1622 = vunpack.c.l.b16 %v429
    %v1623 = vunpack.c.h.b16 %v429
    %v1624 = vunpack.c.l.b16 %v430
    %v1625 = vunpack.c.h.b16 %v430
    %v1626 = vunpack.c.l.b16 %v431
    %v1627 = vunpack.c.h.b16 %v431
    %v1628 = vunpack.c.l.b16 %v432
    %v1629 = vunpack.c.h.b16 %v432
    %v1630 = vunpack.c.l.b16 %v433
    %v1631 = vunpack.c.h.b16 %v433
    %v1632 = vunpack.c.l.b16 %v434
    %v1633 = vunpack.c.h.b16 %v434
    %v1634 = vunpack.c.l.b16 %v435
    %v1635 = vunpack.c.h.b16 %v435
    %v1636 = vunpack.c.l.b16 %v436
    %v1637 = vunpack.c.h.b16 %v436
    %v1638 = vunpack.c.l.b16 %v437
    %v1639 = vunpack.c.h.b16 %v437
    %v1640 = vunpack.c.l.b16 %v438
    %v1641 = vunpack.c.h.b16 %v438
    %v1642 = vunpack.c.l.b16 %v439
    %v1643 = vunpack.c.h.b16 %v439
    %v1644 = vunpack.c.l.b16 %v440
    %v1645 = vunpack.c.h.b16 %v440
    %v1646 = vunpack.c.l.b16 %v441
    %v1647 = vunpack.c.h.b16 %v441
    %v1648 = vunpack.c.l.b16 %v442
    %v1649 = vunpack.c.h.b16 %v442
    %v1650 = vunpack.c.l.b16 %v443
    %v1651 = vunpack.c.h.b16 %v443
    %v1652 = vunpack.c.l.b16 %v444
    %v1653 = vunpack.c.h.b16 %v444
    %v1654 = vunpack.c.l.b16 %v445
    %v1655 = vunpack.c.h.b16 %v445
    %v1656 = vunpack.c.l.b16 %v446
    %v1657 = vunpack.c.h.b16 %v446
    %v1658 = vunpack.c.l.b16 %v447
    %v1659 = vunpack.c.h.b16 %v447
    %v1660 = vunpack.c.l.b16 %v448
    %v1661 = vunpack.c.h.b16 %v448
    %v1662 = vunpack.c.l.b16 %v449
    %v1663 = vunpack.c.h.b16 %v449
    %v1664 = vunpack.c.l.b16 %v450
    %v1665 = vunpack.c.h.b16 %v450
    %v1666 = vunpack.c.l.b16 %v451
    %v1667 = vunpack.c.h.b16 %v451
    %v1668 = vunpack.c.l.b16 %v452
    %v1669 = vunpack.c.h.b16 %v452
    %v1670 = vunpack.c.l.b16 %v453
    %v1671 = vunpack.c.h.b16 %v453
    %v1672 = vunpack.c.l.b16 %v454
    %v1673 = vunpack.c.h.b16 %v454
    %v1674 = vunpack.c.l.b16 %v455
    %v1675 = vunpack.c.h.b16 %v455
    %v1676 = vunpack.c.l.b16 %v456
    %v1677 = vunpack.c.h.b16 %v456
    %v1678 = vunpack.c.l.b16 %v457
    %v1679 = vunpack.c.h.b16 %v457
    %v1680 = vunpack.c.l.b16 %v458
    %v1681 = vunpack.c.h.b16 %v458
    %v1682 = vunpack.c.l.b16 %v459
    %v1683 = vunpack.c.h.b16 %v459
    %v1684 = vunpack.c.l.b16 %v460
    %v1685 = vunpack.c.h.b16 %v460
    %v1686 = vunpack.c.l.b16 %v461
    %v1687 = vunpack.c.h.b16 %v461
    %v1688 = vunpack.c.l.b16 %v462
    %v1689 = vunpack.c.h.b16 %v462
    %v1690 = vunpack.c.l.b16 %v463
    %v1691 = vunpack.c.h.b16 %v463
    %v1692 = vunpack.c.l.b16 %v464
    %v1693 = vunpack.c.h.b16 %v464
    %v1694 = vunpack.c.l.b16 %v465
    %v1695 = vunpack.c.h.b16 %v465
    %v1696 = vunpack.c.l.b16 %v466
    %v1697 = vunpack.c.h.b16 %v466
    %v1698 = vunpack.c.l.b16 %v467
    %v1699 = vunpack.c.h.b16 %v467
    %v1700 = vunpack.c.l.b16 %v468
    %v1701 = vunpack.c.h.b16 %v468
    %v1702 = vunpack.c.l.b16 %v469
    %v1703 = vunpack.c.h.b16 %v469
    %v1704 = vunpack.c.l.b16 %v470
    %v1705 = vunpack.c.h.b16 %v470
    %v1706 = vunpack.c.l.b16 %v471
    %v1707 = vunpack.c.h.b16 %v471
    %v1708 = vunpack.c.l.b16 %v472
    %v1709 = vunpack.c.h.b16 %v472
    %v1710 = vunpack.c.l.b16 %v473
    %v1711 = vunpack.c.h.b16 %v473
    %v1712 = vunpack.c.l.b16 %v474
    %v1713 = vunpack.c.h.b16 %v474
    %v1714 = vunpack.c.l.b16 %v475
    %v1715 = vunpack.c.h.b16 %v475
    %v1716 = vunpack.c.l.b16 %v476
    %v1717 = vunpack.c.h.b16 %v476
    %v1718 = vunpack.c.l.b16 %v477
    %v1719 = vunpack.c.h.b16 %v477
    %v1720 = vunpack.c.l.b16 %v478
    %v1721 = vunpack.c.h.b16 %v478
    %v1722 = vunpack.c.l.b16 %v479
    %v1723 = vunpack.c.h.b16 %v479
    %v1724 = vunpack.c.l.b16 %v480
    %v1725 = vunpack.c.h.b16 %v480
    %v1726 = vunpack.c.l.b16 %v481
    %v1727 = vunpack.c.h.b16 %v481
    %v1728 = vunpack.c.l.b16 %v482
    %v1729 = vunpack.c.h.b16 %v482
    %v1730 = vunpack.c.l.b16 %v483
    %v1731 = vunpack.c.h.b16 %v483
    %v1732 = vunpack.c.l.b16 %v484
    %v1733 = vunpack.c.h.b16 %v484
    %v1734 = vunpack.c.l.b16 %v485
    %v1735 = vunpack.c.h.b16 %v485
    %v1736 = vunpack.c.l.b16 %v486
    %v1737 = vunpack.c.h.b16 %v486
    %v1738 = vunpack.c.l.b16 %v487
    %v1739 = vunpack.c.h.b16 %v487
    %v1740 = vunpack.c.l.b16 %v488
    %v1741 = vunpack.c.h.b16 %v488
    %v1742 = vunpack.c.l.b16 %v489
    %v1743 = vunpack.c.h.b16 %v489
    %v1744 = vunpack.c.l.b16 %v490
    %v1745 = vunpack.c.h.b16 %v490
    %v1746 = vunpack.c.l.b16 %v491
    %v1747 = vunpack.c.h.b16 %v491
    %v1748 = vunpack.c.l.b16 %v492
    %v1749 = vunpack.c.h.b16 %v492
    %v1750 = vunpack.c.l.b16 %v493
    %v1751 = vunpack.c.h.b16 %v493
    %v1752 = vunpack.c.l.b16 %v494
    %v1753 = vunpack.c.h.b16 %v494
    %v1754 = vunpack.c.l.b16 %v495
    %v1755 = vunpack.c.h.b16 %v495
    %v1756 = vunpack.c.l.b16 %v496
    %v1757 = vunpack.c.h.b16 %v496
    %v1758 = vunpack.c.l.b16 %v497
    %v1759 = vunpack.c.h.b16 %v497
    %v1760 = vunpack.c.l.b16 %v498
    %v1761 = vunpack.c.h.b16 %v498
    %v1762 = vunpack.c.l.b16 %v499
    %v1763 = vunpack.c.h.b16 %v499
    %v1764 = vunpack.c.l.b16 %v500
    %v1765 = vunpack.c.h.b16 %v500
    %v1766 = vunpack.c.l.b16 %v501
    %v1767 = vunpack.c.h.b16 %v501
    %v1768 = vunpack.c.l.b16 %v502
    %v1769 = vunpack.c.h.b16 %v502
    %v1770 = vunpack.c.l.b16 %v503
    %v1771 = vunpack.c.h.b16 %v503
    %v1772 = vunpack.c.l.b16 %v504
    %v1773 = vunpack.c.h.b16 %v504
    %v1774 = vunpack.c.l.b16 %v505
    %v1775 = vunpack.c.h.b16 %v505
    %v1776 = vunpack.c.l.b16 %v506
    %v1777 = vunpack.c.h.b16 %v506
    %v1778 = vunpack.c.l.b16 %v507
    %v1779 = vunpack.c.h.b16 %v507
    %v1780 = vunpack.c.l.b16 %v508
    %v1781 = vunpack.c.h.b16 %v508
    %v1782 = vunpack.c.l.b16 %v509
    %v1783 = vunpack.c.h.b16 %v509
    %v1784 = vunpack.c.l.b16 %v510
    %v1785 = vunpack.c.h.b16 %v510
    %v1786 = vunpack.c.l.b16 %v511
    %v1787 = vunpack.c.h.b16 %v511
    %v1788 = vunpack.c.l.b16 %v512
    %v1789 = vunpack.c.h.b16 %v512
    %v1790 = vunpack.c.l.b16 %v513
    %v1791 = vunpack.c.h.b16 %v513
    %v1792 = vunpack.c.l.b16 %v514
    %v1793 = vunpack.c.h.b16 %v514
    %v1794 = vunpack.c.l.b16 %v515
    %v1795 = vunpack.c.h.b16 %v515
    %v1796 = vunpack.c.l.b16 %v516
    %v1797 = vunpack.c.h.b16 %v516
    %v1798 = vunpack.c.l.b16 %v517
    %v1799 = vunpack.c.h.b16 %v517
    %v1800 = vunpack.c.l.b16 %v518
    %v1801 = vunpack.c.h.b16 %v518
    %v1802 = vunpack.c.l.b16 %v519
    %v1803 = vunpack.c.h.b16 %v519
    %v1804 = vunpack.c.l.b16 %v520
    %v1805 = vunpack.c.h.b16 %v520
    %v1806 = vunpack.c.l.b16 %v521
    %v1807 = vunpack.c.h.b16 %v521
    %v1808 = vunpack.c.l.b16 %v522
    %v1809 = vunpack.c.h.b16 %v522
    %v1810 = vunpack.c.l.b16 %v523
    %v1811 = vunpack.c.h.b16 %v523
    %v1812 = vunpack.c.l.b16 %v524
    %v1813 = vunpack.c.h.b16 %v524
    %v1814 = vunpack.c.l.b16 %v525
    %v1815 = vunpack.c.h.b16 %v525
    %v1816 = vunpack.c.l.b16 %v526
    %v1817 = vunpack.c.h.b16 %v526
    %v1818 = vunpack.c.l.b16 %v527
    %v1819 = vunpack.c.h.b16 %v527
    %v1820 = vunpack.c.l.b16 %v528
    %v1821 = vunpack.c.h.b16 %v528
    %v1822 = vunpack.c.l.b16 %v529
    %v1823 = vunpack.c.h.b16 %v529
    %v1824 = vunpack.c.l.b16 %v530
    %v1825 = vunpack.c.h.b16 %v530
    %v1826 = vunpack.c.l.b16 %v531
    %v1827 = vunpack.c.h.b16 %v531
    %v1828 = vunpack.c.l.b16 %v532
    %v1829 = vunpack.c.h.b16 %v532
    %v1830 = vunpack.c.l.b16 %v533
    %v1831 = vunpack.c.h.b16 %v533
    %v1832 = vunpack.c.l.b16 %v534
    %v1833 = vunpack.c.h.b16 %v534
    %v1834 = vunpack.c.l.b16 %v535
    %v1835 = vunpack.c.h.b16 %v535
    %v1836 = vunpack.c.l.b16 %v536
    %v1837 = vunpack.c.h.b16 %v536
    %v1838 = vunpack.c.l.b16 %v537
    %v1839 = vunpack.c.h.b16 %v537
    %v1840 = vunpack.c.l.b16 %v538
    %v1841 = vunpack.c.h.b16 %v538
    %v1842 = vunpack.c.l.b16 %v539
    %v1843 = vunpack.c.h.b16 %v539
    %v1844 = vunpack.c.l.b16 %v540
    %v1845 = vunpack.c.h.b16 %v540
    %v1846 = vunpack.c.l.b16 %v541
    %v1847 = vunpack.c.h.b16 %v541
    %v1848 = vunpack.c.l.b16 %v542
    %v1849 = vunpack.c.h.b16 %v542
    %v1850 = vunpack.c.l.b16 %v543
    %v1851 = vunpack.c.h.b16 %v543
    %v1852 = vunpack.c.l.b16 %v544
    %v1853 = vunpack.c.h.b16 %v544
    %v1854 = vunpack.c.l.b16 %v545
    %v1855 = vunpack.c.h.b16 %v545
    %v1856 = vunpack.c.l.b16 %v546
    %v1857 = vunpack.c.h.b16 %v546
    %v1858 = vunpack.c.l.b16 %v547
    %v1859 = vunpack.c.h.b16 %v547
    %v1860 = vunpack.c.l.b16 %v548
    %v1861 = vunpack.c.h.b16 %v548
    %v1862 = vunpack.c.l.b16 %v549
    %v1863 = vunpack.c.h.b16 %v549
    %v1864 = vunpack.c.l.b16 %v550
    %v1865 = vunpack.c.h.b16 %v550
    %v1866 = vunpack.c.l.b16 %v551
    %v1867 = vunpack.c.h.b16 %v551
    %v1868 = vunpack.c.l.b16 %v552
    %v1869 = vunpack.c.h.b16 %v552
    %v1870 = vunpack.c.l.b16 %v553
    %v1871 = vunpack.c.h.b16 %v553
    %v1872 = vunpack.c.l.b16 %v554
    %v1873 = vunpack.c.h.b16 %v554
    %v1874 = vunpack.c.l.b16 %v555
    %v1875 = vunpack.c.h.b16 %v555
    %v1876 = vunpack.c.l.b16 %v556
    %v1877 = vunpack.c.h.b16 %v556
    %v1878 = vunpack.c.l.b16 %v557
    %v1879 = vunpack.c.h.b16 %v557
    %v1880 = vunpack.c.l.b16 %v558
    %v1881 = vunpack.c.h.b16 %v558
    %v1882 = vunpack.c.l.b16 %v559
    %v1883 = vunpack.c.h.b16 %v559
    %v1884 = vunpack.c.l.b16 %v560
    %v1885 = vunpack.c.h.b16 %v560
    %v1886 = vunpack.c.l.b16 %v561
    %v1887 = vunpack.c.h.b16 %v561
    %v1888 = vunpack.c.l.b16 %v562
    %v1889 = vunpack.c.h.b16 %v562
    %v1890 = vunpack.c.l.b16 %v563
    %v1891 = vunpack.c.h.b16 %v563
    %v1892 = vunpack.c.l.b16 %v564
    %v1893 = vunpack.c.h.b16 %v564
    %v1894 = vunpack.c.l.b16 %v565
    %v1895 = vunpack.c.h.b16 %v565
    %v1896 = vunpack.c.l.b16 %v566
    %v1897 = vunpack.c.h.b16 %v566
    %v1898 = vunpack.c.l.b16 %v567
    %v1899 = vunpack.c.h.b16 %v567
    %v1900 = vunpack.c.l.b16 %v568
    %v1901 = vunpack.c.h.b16 %v568
    %v1902 = vunpack.c.l.b16 %v569
    %v1903 = vunpack.c.h.b16 %v569
    %v1904 = vunpack.c.l.b16 %v570
    %v1905 = vunpack.c.h.b16 %v570
    %v1906 = vunpack.c.l.b16 %v571
    %v1907 = vunpack.c.h.b16 %v571
    %v1908 = vunpack.c.l.b16 %v572
    %v1909 = vunpack.c.h.b16 %v572
    %v1910 = vunpack.c.l.b16 %v573
    %v1911 = vunpack.c.h.b16 %v573
    %v1912 = vunpack.c.l.b16 %v574
    %v1913 = vunpack.c.h.b16 %v574
    %v1914 = vunpack.c.l.b16 %v575
    %v1915 = vunpack.c.h.b16 %v575
    %v1916 = vunpack.c.l.b16 %v576
    %v1917 = vunpack.c.h.b16 %v576
    %v1918 = vunpack.c.l.b16 %v577
    %v1919 = vunpack.c.h.b16 %v577
    %v1920 = vunpack.c.l.b16 %v578
    %v1921 = vunpack.c.h.b16 %v578
    %v1922 = vunpack.c.l.b16 %v579
    %v1923 = vunpack.c.h.b16 %v579
    %v1924 = vunpack.c.l.b16 %v580
    %v1925 = vunpack.c.h.b16 %v580
    %v1926 = vunpack.c.l.b16 %v581
    %v1927 = vunpack.c.h.b16 %v581
    %v1928 = vunpack.c.l.b16 %v582
    %v1929 = vunpack.c.h.b16 %v582
    %v1930 = vunpack.c.l.b16 %v583
    %v1931 = vunpack.c.h.b16 %v583
    %v1932 = vunpack.c.l.b16 %v584
    %v1933 = vunpack.c.h.b16 %v584
    %v1934 = vunpack.c.l.b16 %v585
    %v1935 = vunpack.c.h.b16 %v585
    %v1936 = vunpack.c.l.b16 %v586
    %v1937 = vunpack.c.h.b16 %v586
    %v1938 = vunpack.c.l.b16 %v587
    %v1939 = vunpack.c.h.b16 %v587
    %v1940 = vunpack.c.l.b16 %v588
    %v1941 = vunpack.c.h.b16 %v588
    %v1942 = vunpack.c.l.b16 %v589
    %v1943 = vunpack.c.h.b16 %v589
    %v1944 = vunpack.c.l.b16 %v590
    %v1945 = vunpack.c.h.b16 %v590
    %v1946 = vunpack.c.l.b16 %v591
    %v1947 = vunpack.c.h.b16 %v591
    %v1948 = vunpack.c.l.b16 %v592
    %v1949 = vunpack.c.h.b16 %v592
    %v1950 = vunpack.c.l.b16 %v593
    %v1951 = vunpack.c.h.b16 %v593
    %v1952 = vunpack.c.l.b16 %v594
    %v1953 = vunpack.c.h.b16 %v594
    %v1954 = vunpack.c.l.b16 %v595
    %v1955 = vunpack.c.h.b16 %v595
    %v1956 = vunpack.c.l.b16 %v596
    %v1957 = vunpack.c.h.b16 %v596
    %v1958 = vunpack.c.l.b16 %v597
    %v1959 = vunpack.c.h.b16 %v597
    %v1960 = vunpack.c.l.b16 %v598
    %v1961 = vunpack.c.h.b16 %v598
    %v1962 = vunpack.c.l.b16 %v599
    %v1963 = vunpack.c.h.b16 %v599
    %v1964 = vunpack.c.l.b16 %v600
    %v1965 = vunpack.c.h.b16 %v600
    %v1966 = vunpack.c.l.b16 %v601
    %v1967 = vunpack.c.h.b16 %v601
    %v1968 = vunpack.c.l.b16 %v602
    %v1969 = vunpack.c.h.b16 %v602
    %v1970 = vunpack.c.l.b16 %v603
    %v1971 = vunpack.c.h.b16 %v603
    %v1972 = vunpack.c.l.b16 %v604
    %v1973 = vunpack.c.h.b16 %v604
    %v1974 = vunpack.c.l.b16 %v605
    %v1975 = vunpack.c.h.b16 %v605
    %v1976 = vunpack.c.l.b16 %v606
    %v1977 = vunpack.c.h.b16 %v606
    %v1978 = vunpack.c.l.b16 %v607
    %v1979 = vunpack.c.h.b16 %v607
    %v1980 = vunpack.c.l.b16 %v608
    %v1981 = vunpack.c.h.b16 %v608
    %v1982 = vunpack.c.l.b16 %v609
    %v1983 = vunpack.c.h.b16 %v609
    %v1984 = vunpack.c.l.b16 %v610
    %v1985 = vunpack.c.h.b16 %v610
    %v1986 = vunpack.c.l.b16 %v611
    %v1987 = vunpack.c.h.b16 %v611
    %v1988 = vunpack.c.l.b16 %v612
    %v1989 = vunpack.c.h.b16 %v612
    %v1990 = vunpack.c.l.b16 %v613
    %v1991 = vunpack.c.h.b16 %v613
    %v1992 = vunpack.c.l.b16 %v614
    %v1993 = vunpack.c.h.b16 %v614
    %v1994 = vunpack.c.l.b16 %v615
    %v1995 = vunpack.c.h.b16 %v615
    %v1996 = vunpack.c.l.b16 %v616
    %v1997 = vunpack.c.h.b16 %v616
    %v1998 = vunpack.c.l.b16 %v617
    %v1999 = vunpack.c.h.b16 %v617
    %v2000 = vunpack.c.l.b16 %v618
    %v2001 = vunpack.c.h.b16 %v618
    %v2002 = vunpack.c.l.b16 %v619
    %v2003 = vunpack.c.h.b16 %v619
    %v2004 = vunpack.c.l.b16 %v620
    %v2005 = vunpack.c.h.b16 %v620
    %v2006 = vunpack.c.l.b16 %v621
    %v2007 = vunpack.c.h.b16 %v621
    %v2008 = vunpack.c.l.b16 %v622
    %v2009 = vunpack.c.h.b16 %v622
    %v2010 = vunpack.c.l.b16 %v623
    %v2011 = vunpack.c.h.b16 %v623
    %v2012 = vunpack.c.l.b16 %v624
    %v2013 = vunpack.c.h.b16 %v624
    %v2014 = vunpack.c.l.b16 %v625
    %v2015 = vunpack.c.h.b16 %v625
    %v2016 = vunpack.c.l.b16 %v626
    %v2017 = vunpack.c.h.b16 %v626
    %v2018 = vunpack.c.l.b16 %v627
    %v2019 = vunpack.c.h.b16 %v627
    %v2020 = vunpack.c.l.b16 %v628
    %v2021 = vunpack.c.h.b16 %v628
    %v2022 = vunpack.c.l.b16 %v629
    %v2023 = vunpack.c.h.b16 %v629
    %v2024 = vunpack.c.l.b16 %v630
    %v2025 = vunpack.c.h.b16 %v630
    %v2026 = vunpack.c.l.b16 %v631
    %v2027 = vunpack.c.h.b16 %v631
    %v2028 = vunpack.c.l.b16 %v632
    %v2029 = vunpack.c.h.b16 %v632
    %v2030 = vunpack.c.l.b16 %v633
    %v2031 = vunpack.c.h.b16 %v633
    %v2032 = vunpack.c.l.b16 %v634
    %v2033 = vunpack.c.h.b16 %v634
    %v2034 = vunpack.c.l.b16 %v635
    %v2035 = vunpack.c.h.b16 %v635
    %v2036 = vunpack.c.l.b16 %v636
    %v2037 = vunpack.c.h.b16 %v636
    %v2038 = vunpack.c.l.b16 %v637
    %v2039 = vunpack.c.h.b16 %v637
    %v2040 = vunpack.c.l.b16 %v638
    %v2041 = vunpack.c.h.b16 %v638
    %v2042 = vunpack.c.l.b16 %v639
    %v2043 = vunpack.c.h.b16 %v639
    %v2044 = vunpack.c.l.b16 %v640
    %v2045 = vunpack.c.h.b16 %v640
    %v2046 = vunpack.c.l.b16 %v641
    %v2047 = vunpack.c.h.b16 %v641
    %v2048 = vunpack.c.l.b16 %v642
    %v2049 = vunpack.c.h.b16 %v642
    %v2050 = vunpack.c.l.b16 %v643
    %v2051 = vunpack.c.h.b16 %v643
    %v2052 = vunpack.c.l.b16 %v644
    %v2053 = vunpack.c.h.b16 %v644
    %v2054 = vunpack.c.l.b16 %v645
    %v2055 = vunpack.c.h.b16 %v645
    %v2056 = vunpack.c.l.b16 %v646
    %v2057 = vunpack.c.h.b16 %v646
    %v2058 = vunpack.c.l.b16 %v647
    %v2059 = vunpack.c.h.b16 %v647
    %v2060 = vunpack.c.l.b16 %v648
    %v2061 = vunpack.c.h.b16 %v648
    %v2062 = vunpack.c.l.b16 %v649
    %v2063 = vunpack.c.h.b16 %v649
    %v2064 = vunpack.c.l.b16 %v650
    %v2065 = vunpack.c.h.b16 %v650
    %v2066 = vunpack.c.l.b16 %v651
    %v2067 = vunpack.c.h.b16 %v651
    %v2068 = vunpack.c.l.b16 %v652
    %v2069 = vunpack.c.h.b16 %v652
    %v2070 = vunpack.c.l.b16 %v653
    %v2071 = vunpack.c.h.b16 %v653
    %v2072 = vunpack.c.l.b16 %v654
    %v2073 = vunpack.c.h.b16 %v654
    %v2074 = vunpack.c.l.b16 %v655
    %v2075 = vunpack.c.h.b16 %v655
    %v2076 = vunpack.c.l.b16 %v656
    %v2077 = vunpack.c.h.b16 %v656
    %v2078 = vunpack.c.l.b16 %v657
    %v2079 = vunpack.c.h.b16 %v657
    %v2080 = vunpack.c.l.b16 %v658
    %v2081 = vunpack.c.h.b16 %v658
    %v2082 = vunpack.c.l.b16 %v659
    %v2083 = vunpack.c.h.b16 %v659
    %v2084 = vunpack.c.l.b16 %v660
    %v2085 = vunpack.c.h.b16 %v660
    %v2086 = vunpack.c.l.b16 %v661
    %v2087 = vunpack.c.h.b16 %v661
    %v2088 = vunpack.c.l.b16 %v662
    %v2089 = vunpack.c.h.b16 %v662
    %v2090 = vunpack.c.l.b16 %v663
    %v2091 = vunpack.c.h.b16 %v663
    %v2092 = vunpack.c.l.b16 %v664
    %v2093 = vunpack.c.h.b16 %v664
    %v2094 = vunpack.c.l.b16 %v665
    %v2095 = vunpack.c.h.b16 %v665
    %v2096 = vunpack.c.l.b16 %v666
    %v2097 = vunpack.c.h.b16 %v666
    %v2098 = vunpack.c.l.b16 %v667
    %v2099 = vunpack.c.h.b16 %v667
    %v2100 = vunpack.c.l.b16 %v668
    %v2101 = vunpack.c.h.b16 %v668
    %v2102 = vunpack.c.l.b16 %v669
    %v2103 = vunpack.c.h.b16 %v669
    %v2104 = vunpack.c.l.b16 %v670
    %v2105 = vunpack.c.h.b16 %v670
    %v2106 = vunpack.c.l.b16 %v671
    %v2107 = vunpack.c.h.b16 %v671
    %v2108 = vunpack.c.l.b16 %v672
    %v2109 = vunpack.c.h.b16 %v672
    %v2110 = vunpack.c.l.b16 %v673
    %v2111 = vunpack.c.h.b16 %v673
    %v2112 = vunpack.c.l.b16 %v674
    %v2113 = vunpack.c.h.b16 %v674
    %v2114 = vunpack.c.l.b16 %v675
    %v2115 = vunpack.c.h.b16 %v675
    %v2116 = vunpack.c.l.b16 %v676
    %v2117 = vunpack.c.h.b16 %v676
    %v2118 = vunpack.c.l.b16 %v677
    %v2119 = vunpack.c.h.b16 %v677
    %v2120 = vunpack.c.l.b16 %v678
    %v2121 = vunpack.c.h.b16 %v678
    %v2122 = vunpack.c.l.b16 %v679
    %v2123 = vunpack.c.h.b16 %v679
    %v2124 = vunpack.c.l.b16 %v680
    %v2125 = vunpack.c.h.b16 %v680
    %v2126 = vunpack.c.l.b16 %v681
    %v2127 = vunpack.c.h.b16 %v681
    %v2128 = vunpack.c.l.b16 %v682
    %v2129 = vunpack.c.h.b16 %v682
    %v2130 = vunpack.c.l.b16 %v683
    %v2131 = vunpack.c.h.b16 %v683
    %v2132 = vunpack.c.l.b16 %v684
    %v2133 = vunpack.c.h.b16 %v684
    %v2134 = vunpack.c.l.b16 %v685
    %v2135 = vunpack.c.h.b16 %v685
    %v2136 = vunpack.c.l.b16 %v686
    %v2137 = vunpack.c.h.b16 %v686
    %v2138 = vunpack.c.l.b16 %v687
    %v2139 = vunpack.c.h.b16 %v687
    %v2140 = vunpack.c.l.b16 %v688
    %v2141 = vunpack.c.h.b16 %v688
    %v2142 = vunpack.c.l.b16 %v689
    %v2143 = vunpack.c.h.b16 %v689
    %v2144 = vunpack.c.l.b16 %v690
    %v2145 = vunpack.c.h.b16 %v690
    %v2146 = vunpack.c.l.b16 %v691
    %v2147 = vunpack.c.h.b16 %v691
    %v2148 = vunpack.c.l.b16 %v692
    %v2149 = vunpack.c.h.b16 %v692
    %v2150 = vunpack.c.l.b16 %v693
    %v2151 = vunpack.c.h.b16 %v693
    %v2152 = vunpack.c.l.b16 %v694
    %v2153 = vunpack.c.h.b16 %v694
    %v2154 = vunpack.c.l.b16 %v695
    %v2155 = vunpack.c.h.b16 %v695
    %v2156 = vunpack.c.l.b16 %v696
    %v2157 = vunpack.c.h.b16 %v696
    %v2158 = vunpack.c.l.b16 %v697
    %v2159 = vunpack.c.h.b16 %v697
    %v2160 = vunpack.c.l.b16 %v698
    %v2161 = vunpack.c.h.b16 %v698
    %v2162 = vunpack.c.l.b16 %v699
    %v2163 = vunpack.c.h.b16 %v699
    %v2164 = vunpack.c.l.b16 %v700
    %v2165 = vunpack.c.h.b16 %v700
    %v2166 = vunpack.c.l.b16 %v701
    %v2167 = vunpack.c.h.b16 %v701
    %v2168 = vunpack.c.l.b16 %v702
    %v2169 = vunpack.c.h.b16 %v702
    %v2170 = vunpack.c.l.b16 %v703
    %v2171 = vunpack.c.h.b16 %v703
    %v2172 = vunpack.c.l.b16 %v704
    %v2173 = vunpack.c.h.b16 %v704
    %v2174 = vunpack.c.l.b16 %v705
    %v2175 = vunpack.c.h.b16 %v705
    %v2176 = vunpack.c.l.b16 %v706
    %v2177 = vunpack.c.h.b16 %v706
    %v2178 = vunpack.c.l.b16 %v707
    %v2179 = vunpack.c.h.b16 %v707
    %v2180 = vunpack.c.l.b16 %v708
    %v2181 = vunpack.c.h.b16 %v708
    %v2182 = vunpack.c.l.b16 %v709
    %v2183 = vunpack.c.h.b16 %v709
    %v2184 = vunpack.c.l.b16 %v710
    %v2185 = vunpack.c.h.b16 %v710
    %v2186 = vunpack.c.l.b16 %v711
    %v2187 = vunpack.c.h.b16 %v711
    %v2188 = vunpack.c.l.b16 %v712
    %v2189 = vunpack.c.h.b16 %v712
    %v2190 = vunpack.c.l.b16 %v713
    %v2191 = vunpack.c.h.b16 %v713
    %v2192 = vunpack.c.l.b16 %v714
    %v2193 = vunpack.c.h.b16 %v714
    %v2194 = vunpack.c.l.b16 %v715
    %v2195 = vunpack.c.h.b16 %v715
    %v2196 = vunpack.c.l.b16 %v716
    %v2197 = vunpack.c.h.b16 %v716
    %v2198 = vunpack.c.l.b16 %v717
    %v2199 = vunpack.c.h.b16 %v717
    %v2200 = vunpack.c.l.b16 %v718
    %v2201 = vunpack.c.h.b16 %v718
    %v2202 = vunpack.c.l.b16 %v719
    %v2203 = vunpack.c.h.b16 %v719
    %v2204 = vunpack.c.l.b16 %v720
    %v2205 = vunpack.c.h.b16 %v720
    %v2206 = vunpack.c.l.b16 %v721
    %v2207 = vunpack.c.h.b16 %v721
    %v2208 = vunpack.c.l.b16 %v722
    %v2209 = vunpack.c.h.b16 %v722
    %v2210 = vunpack.c.l.b16 %v723
    %v2211 = vunpack.c.h.b16 %v723
    %v2212 = vunpack.c.l.b16 %v724
    %v2213 = vunpack.c.h.b16 %v724
    %v2214 = vunpack.c.l.b16 %v725
    %v2215 = vunpack.c.h.b16 %v725
    %v2216 = vunpack.c.l.b16 %v726
    %v2217 = vunpack.c.h.b16 %v726
    %v2218 = vunpack.c.l.b16 %v727
    %v2219 = vunpack.c.h.b16 %v727
    %v2220 = vunpack.c.l.b16 %v728
    %v2221 = vunpack.c.h.b16 %v728
    %v2222 = vunpack.c.l.b16 %v729
    %v2223 = vunpack.c.h.b16 %v729
    %v2224 = vunpack.c.l.b16 %v730
    %v2225 = vunpack.c.h.b16 %v730
    %v2226 = vunpack.c.l.b16 %v731
    %v2227 = vunpack.c.h.b16 %v731
    %v2228 = vunpack.c.l.b16 %v732
    %v2229 = vunpack.c.h.b16 %v732
    %v2230 = vunpack.c.l.b16 %v733
    %v2231 = vunpack.c.h.b16 %v733
    %v2232 = vunpack.c.l.b16 %v734
    %v2233 = vunpack.c.h.b16 %v734
    %v2234 = vunpack.c.l.b16 %v735
    %v2235 = vunpack.c.h.b16 %v735
    %v2236 = vunpack.c.l.b16 %v736
    %v2237 = vunpack.c.h.b16 %v736
    %v2238 = vunpack.c.l.b16 %v737
    %v2239 = vunpack.c.h.b16 %v737
    %v2240 = vunpack.c.l.b16 %v738
    %v2241 = vunpack.c.h.b16 %v738
    %v2242 = vunpack.c.l.b16 %v739
    %v2243 = vunpack.c.h.b16 %v739
    %v2244 = vunpack.c.l.b16 %v740
    %v2245 = vunpack.c.h.b16 %v740
    %v2246 = vunpack.c.l.b16 %v741
    %v2247 = vunpack.c.h.b16 %v741
    %v2248 = vunpack.c.l.b16 %v742
    %v2249 = vunpack.c.h.b16 %v742
    %v2250 = vunpack.c.l.b16 %v743
    %v2251 = vunpack.c.h.b16 %v743
    %v2252 = vunpack.c.l.b16 %v744
    %v2253 = vunpack.c.h.b16 %v744
    %v2254 = vunpack.c.l.b16 %v745
    %v2255 = vunpack.c.h.b16 %v745
    %v2256 = vunpack.c.l.b16 %v746
    %v2257 = vunpack.c.h.b16 %v746
    %v2258 = vunpack.c.l.b16 %v747
    %v2259 = vunpack.c.h.b16 %v747
    %v2260 = vunpack.c.l.b16 %v748
    %v2261 = vunpack.c.h.b16 %v748
    %v2262 = vunpack.c.l.b16 %v749
    %v2263 = vunpack.c.h.b16 %v749
    %v2264 = vunpack.c.l.b16 %v750
    %v2265 = vunpack.c.h.b16 %v750
    %v2266 = vunpack.c.l.b16 %v751
    %v2267 = vunpack.c.h.b16 %v751
    %v2268 = vunpack.c.l.b16 %v752
    %v2269 = vunpack.c.h.b16 %v752
    %v2270 = vunpack.c.l.b16 %v753
    %v2271 = vunpack.c.h.b16 %v753
    %v2272 = vunpack.c.l.b16 %v754
    %v2273 = vunpack.c.h.b16 %v754
    %v2274 = vunpack.c.l.b16 %v755
    %v2275 = vunpack.c.h.b16 %v755
    %v2276 = vunpack.c.l.b16 %v756
    %v2277 = vunpack.c.h.b16 %v756
    %v2278 = vunpack.c.l.b16 %v757
    %v2279 = vunpack.c.h.b16 %v757
    %v2280 = vunpack.c.l.b16 %v758
    %v2281 = vunpack.c.h.b16 %v758
    %v2282 = vunpack.c.l.b16 %v759
    %v2283 = vunpack.c.h.b16 %v759
    %v2284 = vunpack.c.l.b16 %v760
    %v2285 = vunpack.c.h.b16 %v760
    %v2286 = vunpack.c.l.b16 %v761
    %v2287 = vunpack.c.h.b16 %v761
    %v2288 = vunpack.c.l.b16 %v762
    %v2289 = vunpack.c.h.b16 %v762
    %v2290 = vunpack.c.l.b16 %v763
    %v2291 = vunpack.c.h.b16 %v763
    %v2292 = vunpack.c.l.b16 %v764
    %v2293 = vunpack.c.h.b16 %v764
    %v2294 = vunpack.c.l.b16 %v765
    %v2295 = vunpack.c.h.b16 %v765
    %v2296 = vunpack.c.l.b16 %v766
    %v2297 = vunpack.c.h.b16 %v766
    %v2298 = vunpack.c.l.b16 %v767
    %v2299 = vunpack.c.h.b16 %v767
    %v2300 = vunpack.c.l.b16 %v768
    %v2301 = vunpack.c.h.b16 %v768
    %v2302 = vunpack.c.l.b16 %v769
    %v2303 = vunpack.c.h.b16 %v769
    %v2304 = vunpack.c.l.b16 %v770
    %v2305 = vunpack.c.h.b16 %v770
    %v2306 = vunpack.c.l.b16 %v771
    %v2307 = vunpack.c.h.b16 %v771
    %v2308 = vunpack.c.l.b16 %v772
    %v2309 = vunpack.c.h.b16 %v772
    %v2310 = vunpack.c.l.b16 %v773
    %v2311 = vunpack.c.h.b16 %v773
    %v2312 = vunpack.c.l.b16 %v774
    %v2313 = vunpack.c.h.b16 %v774
    %v2314 = vunpack.c.l.b16 %v775
    %v2315 = vunpack.c.h.b16 %v775
    %v2316 = vunpack.c.l.b16 %v776
    %v2317 = vunpack.c.h.b16 %v776
    %v2318 = vunpack.c.l.b16 %v777
    %v2319 = vunpack.c.h.b16 %v777
    %v2320 = vunpack.c.l.b16 %v778
    %v2321 = vunpack.c.h.b16 %v778
    %v2322 = vunpack.c.l.b16 %v779
    %v2323 = vunpack.c.h.b16 %v779
    %v2324 = vunpack.c.l.b16 %v780
    %v2325 = vunpack.c.h.b16 %v780
    %v2326 = vunpack.c.l.b16 %v781
    %v2327 = vunpack.c.h.b16 %v781
    %v2328 = vunpack.c.l.b16 %v782
    %v2329 = vunpack.c.h.b16 %v782
    %v2330 = vunpack.c.l.b16 %v783
    %v2331 = vunpack.c.h.b16 %v783
    %v2332 = vunpack.c.l.b16 %v784
    %v2333 = vunpack.c.h.b16 %v784
    %v2334 = vunpack.c.l.b16 %v785
    %v2335 = vunpack.c.h.b16 %v785
    %v2336 = vunpack.c.l.b16 %v786
    %v2337 = vunpack.c.h.b16 %v786
    %v2338 = vunpack.c.l.b16 %v787
    %v2339 = vunpack.c.h.b16 %v787
    %v2340 = vunpack.c.l.b16 %v788
    %v2341 = vunpack.c.h.b16 %v788
    %v2342 = vunpack.c.l.b16 %v789
    %v2343 = vunpack.c.h.b16 %v789
    %v2344 = vunpack.c.l.b16 %v790
    %v2345 = vunpack.c.h.b16 %v790
    %v2346 = vunpack.c.l.b16 %v791
    %v2347 = vunpack.c.h.b16 %v791
    %v2348 = vunpack.c.l.b16 %v792
    %v2349 = vunpack.c.h.b16 %v792
    %v2350 = vunpack.c.l.b16 %v793
    %v2351 = vunpack.c.h.b16 %v793
    %v2352 = vunpack.c.l.b16 %v794
    %v2353 = vunpack.c.h.b16 %v794
    %v2354 = vunpack.c.l.b16 %v795
    %v2355 = vunpack.c.h.b16 %v795
    %v2356 = vunpack.c.l.b16 %v796
    %v2357 = vunpack.c.h.b16 %v796
    %v2358 = vunpack.c.l.b16 %v797
    %v2359 = vunpack.c.h.b16 %v797
    %v2360 = vunpack.c.l.b16 %v798
    %v2361 = vunpack.c.h.b16 %v798
    %v2362 = vunpack.c.l.b16 %v799
    %v2363 = vunpack.c.h.b16 %v799
    %v2364 = vpack.c.b16 %v1348, %v1340
    %v2365 = vpack.c.b16 %v1349, %v1341
    %v2366 = vpack.c.b16 %v1350, %v1342
    %v2367 = vpack.c.b16 %v1351, %v1343
    %v2368 = vpack.c.b16 %v1352, %v1344
    %v2369 = vpack.c.b16 %v1353, %v1345
    %v2370 = vpack.c.b16 %v1354, %v1346
    %v2371 = vpack.c.b16 %v1355, %v1347
    %v2372 = vpack.c.b16 %v1364, %v1356
    %v2373 = vpack.c.b16 %v1365, %v1357
    %v2374 = vpack.c.b16 %v1366, %v1358
    %v2375 = vpack.c.b16 %v1367, %v1359
    %v2376 = vpack.c.b16 %v1368, %v1360
    %v2377 = vpack.c.b16 %v1369, %v1361
    %v2378 = vpack.c.b16 %v1370, %v1362
    %v2379 = vpack.c.b16 %v1371, %v1363
    %v2380 = vpack.c.b16 %v1380, %v1372
    %v2381 = vpack.c.b16 %v1381, %v1373
    %v2382 = vpack.c.b16 %v1382, %v1374
    %v2383 = vpack.c.b16 %v1383, %v1375
    %v2384 = vpack.c.b16 %v1384, %v1376
    %v2385 = vpack.c.b16 %v1385, %v1377
    %v2386 = vpack.c.b16 %v1386, %v1378
    %v2387 = vpack.c.b16 %v1387, %v1379
    %v2388 = vpack.c.b16 %v1396, %v1388
    %v2389 = vpack.c.b16 %v1397, %v1389
    %v2390 = vpack.c.b16 %v1398, %v1390
    %v2391 = vpack.c.b16 %v1399, %v1391
    %v2392 = vpack.c.b16 %v1400, %v1392
    %v2393 = vpack.c.b16 %v1401, %v1393
    %v2394 = vpack.c.b16 %v1402, %v1394
    %v2395 = vpack.c.b16 %v1403, %v1395
    %v2396 = vpack.c.b16 %v1412, %v1404
    %v2397 = vpack.c.b16 %v1413, %v1405
    %v2398 = vpack.c.b16 %v1414, %v1406
    %v2399 = vpack.c.b16 %v1415, %v1407
    %v2400 = vpack.c.b16 %v1416, %v1408
    %v2401 = vpack.c.b16 %v1417, %v1409
    %v2402 = vpack.c.b16 %v1418, %v1410
    %v2403 = vpack.c.b16 %v1419, %v1411
    %v2404 = vpack.c.b16 %v1428, %v1420
    %v2405 = vpack.c.b16 %v1429, %v1421
    %v2406 = vpack.c.b16 %v1430, %v1422
    %v2407 = vpack.c.b16 %v1431, %v1423
    %v2408 = vpack.c.b16 %v1432, %v1424
    %v2409 = vpack.c.b16 %v1433, %v1425
    %v2410 = vpack.c.b16 %v1434, %v1426
    %v2411 = vpack.c.b16 %v1435, %v1427
    %v2412 = vpack.c.b16 %v1444, %v1436
    %v2413 = vpack.c.b16 %v1445, %v1437
    %v2414 = vpack.c.b16 %v1446, %v1438
    %v2415 = vpack.c.b16 %v1447, %v1439
    %v2416 = vpack.c.b16 %v1448, %v1440
    %v2417 = vpack.c.b16 %v1449, %v1441
    %v2418 = vpack.c.b16 %v1450, %v1442
    %v2419 = vpack.c.b16 %v1451, %v1443
    %v2420 = vpack.c.b16 %v1460, %v1452
    %v2421 = vpack.c.b16 %v1461, %v1453
    %v2422 = vpack.c.b16 %v1462, %v1454
    %v2423 = vpack.c.b16 %v1463, %v1455
    %v2424 = vpack.c.b16 %v1464, %v1456
    %v2425 = vpack.c.b16 %v1465, %v1457
    %v2426 = vpack.c.b16 %v1466, %v1458
    %v2427 = vpack.c.b16 %v1467, %v1459
    %v2428 = vpack.c.b16 %v1476, %v1468
    %v2429 = vpack.c.b16 %v1477, %v1469
    %v2430 = vpack.c.b16 %v1478, %v1470
    %v2431 = vpack.c.b16 %v1479, %v1471
    %v2432 = vpack.c.b16 %v1480, %v1472
    %v2433 = vpack.c.b16 %v1481, %v1473
    %v2434 = vpack.c.b16 %v1482, %v1474
    %v2435 = vpack.c.b16 %v1483, %v1475
    %v2436 = vpack.c.b16 %v1492, %v1484
    %v2437 = vpack.c.b16 %v1493, %v1485
    %v2438 = vpack.c.b16 %v1494, %v1486
    %v2439 = vpack.c.b16 %v1495, %v1487
    %v2440 = vpack.c.b16 %v1496, %v1488
    %v2441 = vpack.c.b16 %v1497, %v1489
    %v2442 = vpack.c.b16 %v1498, %v1490
    %v2443 = vpack.c.b16 %v1499, %v1491
    %v2444 = vpack.c.b16 %v1508, %v1500
    %v2445 = vpack.c.b16 %v1509, %v1501
    %v2446 = vpack.c.b16 %v1510, %v1502
    %v2447 = vpack.c.b16 %v1511, %v1503
    %v2448 = vpack.c.b16 %v1512, %v1504
    %v2449 = vpack.c.b16 %v1513, %v1505
    %v2450 = vpack.c.b16 %v1514, %v1506
    %v2451 = vpack.c.b16 %v1515, %v1507
    %v2452 = vpack.c.b16 %v1524, %v1516
    %v2453 = vpack.c.b16 %v1525, %v1517
    %v2454 = vpack.c.b16 %v1526, %v1518
    %v2455 = vpack.c.b16 %v1527, %v1519
    %v2456 = vpack.c.b16 %v1528, %v1520
    %v2457 = vpack.c.b16 %v1529, %v1521
    %v2458 = vpack.c.b16 %v1530, %v1522
    %v2459 = vpack.c.b16 %v1531, %v1523
    %v2460 = vpack.c.b16 %v1540, %v1532
    %v2461 = vpack.c.b16 %v1541, %v1533
    %v2462 = vpack.c.b16 %v1542, %v1534
    %v2463 = vpack.c.b16 %v1543, %v1535
    %v2464 = vpack.c.b16 %v1544, %v1536
    %v2465 = vpack.c.b16 %v1545, %v1537
    %v2466 = vpack.c.b16 %v1546, %v1538
    %v2467 = vpack.c.b16 %v1547, %v1539
    %v2468 = vpack.c.b16 %v1556, %v1548
    %v2469 = vpack.c.b16 %v1557, %v1549
    %v2470 = vpack.c.b16 %v1558, %v1550
    %v2471 = vpack.c.b16 %v1559, %v1551
    %v2472 = vpack.c.b16 %v1560, %v1552
    %v2473 = vpack.c.b16 %v1561, %v1553
    %v2474 = vpack.c.b16 %v1562, %v1554
    %v2475 = vpack.c.b16 %v1563, %v1555
    %v2476 = vpack.c.b16 %v1572, %v1564
    %v2477 = vpack.c.b16 %v1573, %v1565
    %v2478 = vpack.c.b16 %v1574, %v1566
    %v2479 = vpack.c.b16 %v1575, %v1567
    %v2480 = vpack.c.b16 %v1576, %v1568
    %v2481 = vpack.c.b16 %v1577, %v1569
    %v2482 = vpack.c.b16 %v1578, %v1570
    %v2483 = vpack.c.b16 %v1579, %v1571
    %v2484 = vpack.c.b16 %v1588, %v1580
    %v2485 = vpack.c.b16 %v1589, %v1581
    %v2486 = vpack.c.b16 %v1590, %v1582
    %v2487 = vpack.c.b16 %v1591, %v1583
    %v2488 = vpack.c.b16 %v1592, %v1584
    %v2489 = vpack.c.b16 %v1593, %v1585
    %v2490 = vpack.c.b16 %v1594, %v1586
    %v2491 = vpack.c.b16 %v1595, %v1587
    %v2492 = vpack.c.b16 %v1604, %v1596
    %v2493 = vpack.c.b16 %v1605, %v1597
    %v2494 = vpack.c.b16 %v1606, %v1598
    %v2495 = vpack.c.b16 %v1607, %v1599
    %v2496 = vpack.c.b16 %v1608, %v1600
    %v2497 = vpack.c.b16 %v1609, %v1601
    %v2498 = vpack.c.b16 %v1610, %v1602
    %v2499 = vpack.c.b16 %v1611, %v1603
    %v2500 = vpack.c.b16 %v1620, %v1612
    %v2501 = vpack.c.b16 %v1621, %v1613
    %v2502 = vpack.c.b16 %v1622, %v1614
    %v2503 = vpack.c.b16 %v1623, %v1615
    %v2504 = vpack.c.b16 %v1624, %v1616
    %v2505 = vpack.c.b16 %v1625, %v1617
    %v2506 = vpack.c.b16 %v1626, %v1618
    %v2507 = vpack.c.b16 %v1627, %v1619
    %v2508 = vpack.c.b16 %v1636, %v1628
    %v2509 = vpack.c.b16 %v1637, %v1629
    %v2510 = vpack.c.b16 %v1638, %v1630
    %v2511 = vpack.c.b16 %v1639, %v1631
    %v2512 = vpack.c.b16 %v1640, %v1632
    %v2513 = vpack.c.b16 %v1641, %v1633
    %v2514 = vpack.c.b16 %v1642, %v1634
    %v2515 = vpack.c.b16 %v1643, %v1635
    %v2516 = vpack.c.b16 %v1652, %v1644
    %v2517 = vpack.c.b16 %v1653, %v1645
    %v2518 = vpack.c.b16 %v1654, %v1646
    %v2519 = vpack.c.b16 %v1655, %v1647
    %v2520 = vpack.c.b16 %v1656, %v1648
    %v2521 = vpack.c.b16 %v1657, %v1649
    %v2522 = vpack.c.b16 %v1658, %v1650
    %v2523 = vpack.c.b16 %v1659, %v1651
    %v2524 = vpack.c.b16 %v1668, %v1660
    %v2525 = vpack.c.b16 %v1669, %v1661
    %v2526 = vpack.c.b16 %v1670, %v1662
    %v2527 = vpack.c.b16 %v1671, %v1663
    %v2528 = vpack.c.b16 %v1672, %v1664
    %v2529 = vpack.c.b16 %v1673, %v1665
    %v2530 = vpack.c.b16 %v1674, %v1666
    %v2531 = vpack.c.b16 %v1675, %v1667
    %v2532 = vpack.c.b16 %v1684, %v1676
    %v2533 = vpack.c.b16 %v1685, %v1677
    %v2534 = vpack.c.b16 %v1686, %v1678
    %v2535 = vpack.c.b16 %v1687, %v1679
    %v2536 = vpack.c.b16 %v1688, %v1680
    %v2537 = vpack.c.b16 %v1689, %v1681
    %v2538 = vpack.c.b16 %v1690, %v1682
    %v2539 = vpack.c.b16 %v1691, %v1683
    %v2540 = vpack.c.b16 %v1700, %v1692
    %v2541 = vpack.c.b16 %v1701, %v1693
    %v2542 = vpack.c.b16 %v1702, %v1694
    %v2543 = vpack.c.b16 %v1703, %v1695
    %v2544 = vpack.c.b16 %v1704, %v1696
    %v2545 = vpack.c.b16 %v1705, %v1697
    %v2546 = vpack.c.b16 %v1706, %v1698
    %v2547 = vpack.c.b16 %v1707, %v1699
    %v2548 = vpack.c.b16 %v1716, %v1708
    %v2549 = vpack.c.b16 %v1717, %v1709
    %v2550 = vpack.c.b16 %v1718, %v1710
    %v2551 = vpack.c.b16 %v1719, %v1711
    %v2552 = vpack.c.b16 %v1720, %v1712
    %v2553 = vpack.c.b16 %v1721, %v1713
    %v2554 = vpack.c.b16 %v1722, %v1714
    %v2555 = vpack.c.b16 %v1723, %v1715
    %v2556 = vpack.c.b16 %v1732, %v1724
    %v2557 = vpack.c.b16 %v1733, %v1725
    %v2558 = vpack.c.b16 %v1734, %v1726
    %v2559 = vpack.c.b16 %v1735, %v1727
    %v2560 = vpack.c.b16 %v1736, %v1728
    %v2561 = vpack.c.b16 %v1737, %v1729
    %v2562 = vpack.c.b16 %v1738, %v1730
    %v2563 = vpack.c.b16 %v1739, %v1731
    %v2564 = vpack.c.b16 %v1748, %v1740
    %v2565 = vpack.c.b16 %v1749, %v1741
    %v2566 = vpack.c.b16 %v1750, %v1742
    %v2567 = vpack.c.b16 %v1751, %v1743
    %v2568 = vpack.c.b16 %v1752, %v1744
    %v2569 = vpack.c.b16 %v1753, %v1745
    %v2570 = vpack.c.b16 %v1754, %v1746
    %v2571 = vpack.c.b16 %v1755, %v1747
    %v2572 = vpack.c.b16 %v1764, %v1756
    %v2573 = vpack.c.b16 %v1765, %v1757
    %v2574 = vpack.c.b16 %v1766, %v1758
    %v2575 = vpack.c.b16 %v1767, %v1759
    %v2576 = vpack.c.b16 %v1768, %v1760
    %v2577 = vpack.c.b16 %v1769, %v1761
    %v2578 = vpack.c.b16 %v1770, %v1762
    %v2579 = vpack.c.b16 %v1771, %v1763
    %v2580 = vpack.c.b16 %v1780, %v1772
    %v2581 = vpack.c.b16 %v1781, %v1773
    %v2582 = vpack.c.b16 %v1782, %v1774
    %v2583 = vpack.c.b16 %v1783, %v1775
    %v2584 = vpack.c.b16 %v1784, %v1776
    %v2585 = vpack.c.b16 %v1785, %v1777
    %v2586 = vpack.c.b16 %v1786, %v1778
    %v2587 = vpack.c.b16 %v1787, %v1779
    %v2588 = vpack.c.b16 %v1796, %v1788
    %v2589 = vpack.c.b16 %v1797, %v1789
    %v2590 = vpack.c.b16 %v1798, %v1790
    %v2591 = vpack.c.b16 %v1799, %v1791
    %v2592 = vpack.c.b16 %v1800, %v1792
    %v2593 = vpack.c.b16 %v1801, %v1793
    %v2594 = vpack.c.b16 %v1802, %v1794
    %v2595 = vpack.c.b16 %v1803, %v1795
    %v2596 = vpack.c.b16 %v1812, %v1804
    %v2597 = vpack.c.b16 %v1813, %v1805
    %v2598 = vpack.c.b16 %v1814, %v1806
    %v2599 = vpack.c.b16 %v1815, %v1807
    %v2600 = vpack.c.b16 %v1816, %v1808
    %v2601 = vpack.c.b16 %v1817, %v1809
    %v2602 = vpack.c.b16 %v1818, %v1810
    %v2603 = vpack.c.b16 %v1819, %v1811
    %v2604 = vpack.c.b16 %v1828, %v1820
    %v2605 = vpack.c.b16 %v1829, %v1821
    %v2606 = vpack.c.b16 %v1830, %v1822
    %v2607 = vpack.c.b16 %v1831, %v1823
    %v2608 = vpack.c.b16 %v1832, %v1824
    %v2609 = vpack.c.b16 %v1833, %v1825
    %v2610 = vpack.c.b16 %v1834, %v1826
    %v2611 = vpack.c.b16 %v1835, %v1827
    %v2612 = vpack.c.b16 %v1844, %v1836
    %v2613 = vpack.c.b16 %v1845, %v1837
    %v2614 = vpack.c.b16 %v1846, %v1838
    %v2615 = vpack.c.b16 %v1847, %v1839
    %v2616 = vpack.c.b16 %v1848, %v1840
    %v2617 = vpack.c.b16 %v1849, %v1841
    %v2618 = vpack.c.b16 %v1850, %v1842
    %v2619 = vpack.c.b16 %v1851, %v1843
    %v2620 = vpack.c.b16 %v1860, %v1852
    %v2621 = vpack.c.b16 %v1861, %v1853
    %v2622 = vpack.c.b16 %v1862, %v1854
    %v2623 = vpack.c.b16 %v1863, %v1855
    %v2624 = vpack.c.b16 %v1864, %v1856
    %v2625 = vpack.c.b16 %v1865, %v1857
    %v2626 = vpack.c.b16 %v1866, %v1858
    %v2627 = vpack.c.b16 %v1867, %v1859
    %v2628 = vpack.c.b16 %v1876, %v1868
    %v2629 = vpack.c.b16 %v1877, %v1869
    %v2630 = vpack.c.b16 %v1878, %v1870
    %v2631 = vpack.c.b16 %v1879, %v1871
    %v2632 = vpack.c.b16 %v1880, %v1872
    %v2633 = vpack.c.b16 %v1881, %v1873
    %v2634 = vpack.c.b16 %v1882, %v1874
    %v2635 = vpack.c.b16 %v1883, %v1875
    %v2636 = vpack.c.b16 %v1892, %v1884
    %v2637 = vpack.c.b16 %v1893, %v1885
    %v2638 = vpack.c.b16 %v1894, %v1886
    %v2639 = vpack.c.b16 %v1895, %v1887
    %v2640 = vpack.c.b16 %v1896, %v1888
    %v2641 = vpack.c.b16 %v1897, %v1889
    %v2642 = vpack.c.b16 %v1898, %v1890
    %v2643 = vpack.c.b16 %v1899, %v1891
    %v2644 = vpack.c.b16 %v1908, %v1900
    %v2645 = vpack.c.b16 %v1909, %v1901
    %v2646 = vpack.c.b16 %v1910, %v1902
    %v2647 = vpack.c.b16 %v1911, %v1903
    %v2648 = vpack.c.b16 %v1912, %v1904
    %v2649 = vpack.c.b16 %v1913, %v1905
    %v2650 = vpack.c.b16 %v1914, %v1906
    %v2651 = vpack.c.b16 %v1915, %v1907
    %v2652 = vpack.c.b16 %v1924, %v1916
    %v2653 = vpack.c.b16 %v1925, %v1917
    %v2654 = vpack.c.b16 %v1926, %v1918
    %v2655 = vpack.c.b16 %v1927, %v1919
    %v2656 = vpack.c.b16 %v1928, %v1920
    %v2657 = vpack.c.b16 %v1929, %v1921
    %v2658 = vpack.c.b16 %v1930, %v1922
    %v2659 = vpack.c.b16 %v1931, %v1923
    %v2660 = vpack.c.b16 %v1940, %v1932
    %v2661 = vpack.c.b16 %v1941, %v1933
    %v2662 = vpack.c.b16 %v1942, %v1934
    %v2663 = vpack.c.b16 %v1943, %v1935
    %v2664 = vpack.c.b16 %v1944, %v1936
    %v2665 = vpack.c.b16 %v1945, %v1937
    %v2666 = vpack.c.b16 %v1946, %v1938
    %v2667 = vpack.c.b16 %v1947, %v1939
    %v2668 = vpack.c.b16 %v1956, %v1948
    %v2669 = vpack.c.b16 %v1957, %v1949
    %v2670 = vpack.c.b16 %v1958, %v1950
    %v2671 = vpack.c.b16 %v1959, %v1951
    %v2672 = vpack.c.b16 %v1960, %v1952
    %v2673 = vpack.c.b16 %v1961, %v1953
    %v2674 = vpack.c.b16 %v1962, %v1954
    %v2675 = vpack.c.b16 %v1963, %v1955
    %v2676 = vpack.c.b16 %v1972, %v1964
    %v2677 = vpack.c.b16 %v1973, %v1965
    %v2678 = vpack.c.b16 %v1974, %v1966
    %v2679 = vpack.c.b16 %v1975, %v1967
    %v2680 = vpack.c.b16 %v1976, %v1968
    %v2681 = vpack.c.b16 %v1977, %v1969
    %v2682 = vpack.c.b16 %v1978, %v1970
    %v2683 = vpack.c.b16 %v1979, %v1971
    %v2684 = vpack.c.b16 %v1988, %v1980
    %v2685 = vpack.c.b16 %v1989, %v1981
    %v2686 = vpack.c.b16 %v1990, %v1982
    %v2687 = vpack.c.b16 %v1991, %v1983
    %v2688 = vpack.c.b16 %v1992, %v1984
    %v2689 = vpack.c.b16 %v1993, %v1985
    %v2690 = vpack.c.b16 %v1994, %v1986
    %v2691 = vpack.c.b16 %v1995, %v1987
    %v2692 = vpack.c.b16 %v2004, %v1996
    %v2693 = vpack.c.b16 %v2005, %v1997
    %v2694 = vpack.c.b16 %v2006, %v1998
    %v2695 = vpack.c.b16 %v2007, %v1999
    %v2696 = vpack.c.b16 %v2008, %v2000
    %v2697 = vpack.c.b16 %v2009, %v2001
    %v2698 = vpack.c.b16 %v2010, %v2002
    %v2699 = vpack.c.b16 %v2011, %v2003
    %v2700 = vpack.c.b16 %v2020, %v2012
    %v2701 = vpack.c.b16 %v2021, %v2013
    %v2702 = vpack.c.b16 %v2022, %v2014
    %v2703 = vpack.c.b16 %v2023, %v2015
    %v2704 = vpack.c.b16 %v2024, %v2016
    %v2705 = vpack.c.b16 %v2025, %v2017
    %v2706 = vpack.c.b16 %v2026, %v2018
    %v2707 = vpack.c.b16 %v2027, %v2019
    %v2708 = vpack.c.b16 %v2036, %v2028
    %v2709 = vpack.c.b16 %v2037, %v2029
    %v2710 = vpack.c.b16 %v2038, %v2030
    %v2711 = vpack.c.b16 %v2039, %v2031
    %v2712 = vpack.c.b16 %v2040, %v2032
    %v2713 = vpack.c.b16 %v2041, %v2033
    %v2714 = vpack.c.b16 %v2042, %v2034
    %v2715 = vpack.c.b16 %v2043, %v2035
    %v2716 = vpack.c.b16 %v2052, %v2044
    %v2717 = vpack.c.b16 %v2053, %v2045
    %v2718 = vpack.c.b16 %v2054, %v2046
    %v2719 = vpack.c.b16 %v2055, %v2047
    %v2720 = vpack.c.b16 %v2056, %v2048
    %v2721 = vpack.c.b16 %v2057, %v2049
    %v2722 = vpack.c.b16 %v2058, %v2050
    %v2723 = vpack.c.b16 %v2059, %v2051
    %v2724 = vpack.c.b16 %v2068, %v2060
    %v2725 = vpack.c.b16 %v2069, %v2061
    %v2726 = vpack.c.b16 %v2070, %v2062
    %v2727 = vpack.c.b16 %v2071, %v2063
    %v2728 = vpack.c.b16 %v2072, %v2064
    %v2729 = vpack.c.b16 %v2073, %v2065
    %v2730 = vpack.c.b16 %v2074, %v2066
    %v2731 = vpack.c.b16 %v2075, %v2067
    %v2732 = vpack.c.b16 %v2084, %v2076
    %v2733 = vpack.c.b16 %v2085, %v2077
    %v2734 = vpack.c.b16 %v2086, %v2078
    %v2735 = vpack.c.b16 %v2087, %v2079
    %v2736 = vpack.c.b16 %v2088, %v2080
    %v2737 = vpack.c.b16 %v2089, %v2081
    %v2738 = vpack.c.b16 %v2090, %v2082
    %v2739 = vpack.c.b16 %v2091, %v2083
    %v2740 = vpack.c.b16 %v2100, %v2092
    %v2741 = vpack.c.b16 %v2101, %v2093
    %v2742 = vpack.c.b16 %v2102, %v2094
    %v2743 = vpack.c.b16 %v2103, %v2095
    %v2744 = vpack.c.b16 %v2104, %v2096
    %v2745 = vpack.c.b16 %v2105, %v2097
    %v2746 = vpack.c.b16 %v2106, %v2098
    %v2747 = vpack.c.b16 %v2107, %v2099
    %v2748 = vpack.c.b16 %v2116, %v2108
    %v2749 = vpack.c.b16 %v2117, %v2109
    %v2750 = vpack.c.b16 %v2118, %v2110
    %v2751 = vpack.c.b16 %v2119, %v2111
    %v2752 = vpack.c.b16 %v2120, %v2112
    %v2753 = vpack.c.b16 %v2121, %v2113
    %v2754 = vpack.c.b16 %v2122, %v2114
    %v2755 = vpack.c.b16 %v2123, %v2115
    %v2756 = vpack.c.b16 %v2132, %v2124
    %v2757 = vpack.c.b16 %v2133, %v2125
    %v2758 = vpack.c.b16 %v2134, %v2126
    %v2759 = vpack.c.b16 %v2135, %v2127
    %v2760 = vpack.c.b16 %v2136, %v2128
    %v2761 = vpack.c.b16 %v2137, %v2129
    %v2762 = vpack.c.b16 %v2138, %v2130
    %v2763 = vpack.c.b16 %v2139, %v2131
    %v2764 = vpack.c.b16 %v2148, %v2140
    %v2765 = vpack.c.b16 %v2149, %v2141
    %v2766 = vpack.c.b16 %v2150, %v2142
    %v2767 = vpack.c.b16 %v2151, %v2143
    %v2768 = vpack.c.b16 %v2152, %v2144
    %v2769 = vpack.c.b16 %v2153, %v2145
    %v2770 = vpack.c.b16 %v2154, %v2146
    %v2771 = vpack.c.b16 %v2155, %v2147
    %v2772 = vpack.c.b16 %v2164, %v2156
    %v2773 = vpack.c.b16 %v2165, %v2157
    %v2774 = vpack.c.b16 %v2166, %v2158
    %v2775 = vpack.c.b16 %v2167, %v2159
    %v2776 = vpack.c.b16 %v2168, %v2160
    %v2777 = vpack.c.b16 %v2169, %v2161
    %v2778 = vpack.c.b16 %v2170, %v2162
    %v2779 = vpack.c.b16 %v2171, %v2163
    %v2780 = vpack.c.b16 %v2180, %v2172
    %v2781 = vpack.c.b16 %v2181, %v2173
    %v2782 = vpack.c.b16 %v2182, %v2174
    %v2783 = vpack.c.b16 %v2183, %v2175
    %v2784 = vpack.c.b16 %v2184, %v2176
    %v2785 = vpack.c.b16 %v2185, %v2177
    %v2786 = vpack.c.b16 %v2186, %v2178
    %v2787 = vpack.c.b16 %v2187, %v2179
    %v2788 = vpack.c.b16 %v2196, %v2188
    %v2789 = vpack.c.b16 %v2197, %v2189
    %v2790 = vpack.c.b16 %v2198, %v2190
    %v2791 = vpack.c.b16 %v2199, %v2191
    %v2792 = vpack.c.b16 %v2200, %v2192
    %v2793 = vpack.c.b16 %v2201, %v2193
    %v2794 = vpack.c.b16 %v2202, %v2194
    %v2795 = vpack.c.b16 %v2203, %v2195
    %v2796 = vpack.c.b16 %v2212, %v2204
    %v2797 = vpack.c.b16 %v2213, %v2205
    %v2798 = vpack.c.b16 %v2214, %v2206
    %v2799 = vpack.c.b16 %v2215, %v2207
    %v2800 = vpack.c.b16 %v2216, %v2208
    %v2801 = vpack.c.b16 %v2217, %v2209
    %v2802 = vpack.c.b16 %v2218, %v2210
    %v2803 = vpack.c.b16 %v2219, %v2211
    %v2804 = vpack.c.b16 %v2228, %v2220
    %v2805 = vpack.c.b16 %v2229, %v2221
    %v2806 = vpack.c.b16 %v2230, %v2222
    %v2807 = vpack.c.b16 %v2231, %v2223
    %v2808 = vpack.c.b16 %v2232, %v2224
    %v2809 = vpack.c.b16 %v2233, %v2225
    %v2810 = vpack.c.b16 %v2234, %v2226
    %v2811 = vpack.c.b16 %v2235, %v2227
    %v2812 = vpack.c.b16 %v2244, %v2236
    %v2813 = vpack.c.b16 %v2245, %v2237
    %v2814 = vpack.c.b16 %v2246, %v2238
    %v2815 = vpack.c.b16 %v2247, %v2239
    %v2816 = vpack.c.b16 %v2248, %v2240
    %v2817 = vpack.c.b16 %v2249, %v2241
    %v2818 = vpack.c.b16 %v2250, %v2242
    %v2819 = vpack.c.b16 %v2251, %v2243
    %v2820 = vpack.c.b16 %v2260, %v2252
    %v2821 = vpack.c.b16 %v2261, %v2253
    %v2822 = vpack.c.b16 %v2262, %v2254
    %v2823 = vpack.c.b16 %v2263, %v2255
    %v2824 = vpack.c.b16 %v2264, %v2256
    %v2825 = vpack.c.b16 %v2265, %v2257
    %v2826 = vpack.c.b16 %v2266, %v2258
    %v2827 = vpack.c.b16 %v2267, %v2259
    %v2828 = vpack.c.b16 %v2276, %v2268
    %v2829 = vpack.c.b16 %v2277, %v2269
    %v2830 = vpack.c.b16 %v2278, %v2270
    %v2831 = vpack.c.b16 %v2279, %v2271
    %v2832 = vpack.c.b16 %v2280, %v2272
    %v2833 = vpack.c.b16 %v2281, %v2273
    %v2834 = vpack.c.b16 %v2282, %v2274
    %v2835 = vpack.c.b16 %v2283, %v2275
    %v2836 = vpack.c.b16 %v2292, %v2284
    %v2837 = vpack.c.b16 %v2293, %v2285
    %v2838 = vpack.c.b16 %v2294, %v2286
    %v2839 = vpack.c.b16 %v2295, %v2287
    %v2840 = vpack.c.b16 %v2296, %v2288
    %v2841 = vpack.c.b16 %v2297, %v2289
    %v2842 = vpack.c.b16 %v2298, %v2290
    %v2843 = vpack.c.b16 %v2299, %v2291
    %v2844 = vpack.c.b16 %v2308, %v2300
    %v2845 = vpack.c.b16 %v2309, %v2301
    %v2846 = vpack.c.b16 %v2310, %v2302
    %v2847 = vpack.c.b16 %v2311, %v2303
    %v2848 = vpack.c.b16 %v2312, %v2304
    %v2849 = vpack.c.b16 %v2313, %v2305
    %v2850 = vpack.c.b16 %v2314, %v2306
    %v2851 = vpack.c.b16 %v2315, %v2307
    %v2852 = vpack.c.b16 %v2324, %v2316
    %v2853 = vpack.c.b16 %v2325, %v2317
    %v2854 = vpack.c.b16 %v2326, %v2318
    %v2855 = vpack.c.b16 %v2327, %v2319
    %v2856 = vpack.c.b16 %v2328, %v2320
    %v2857 = vpack.c.b16 %v2329, %v2321
    %v2858 = vpack.c.b16 %v2330, %v2322
    %v2859 = vpack.c.b16 %v2331, %v2323
    %v2860 = vpack.c.b16 %v2340, %v2332
    %v2861 = vpack.c.b16 %v2341, %v2333
    %v2862 = vpack.c.b16 %v2342, %v2334
    %v2863 = vpack.c.b16 %v2343, %v2335
    %v2864 = vpack.c.b16 %v2344, %v2336
    %v2865 = vpack.c.b16 %v2345, %v2337
    %v2866 = vpack.c.b16 %v2346, %v2338
    %v2867 = vpack.c.b16 %v2347, %v2339
    %v2868 = vpack.c.b16 %v2356, %v2348
    %v2869 = vpack.c.b16 %v2357, %v2349
    %v2870 = vpack.c.b16 %v2358, %v2350
    %v2871 = vpack.c.b16 %v2359, %v2351
    %v2872 = vpack.c.b16 %v2360, %v2352
    %v2873 = vpack.c.b16 %v2361, %v2353
    %v2874 = vpack.c.b16 %v2362, %v2354
    %v2875 = vpack.c.b16 %v2363, %v2355
    %3388 = vmatprep.subr.bf16.mxu0 %v2421
    %3389 = vmatpush1.bf16.msra.mxu0 %v2420
    %3390 = vmatprep.subr.bf16.mxu0 %v2413
    %3391 = vmatpush1.bf16.msra.mxu0 %v2412
    %3392 = vmatprep.subr.bf16.mxu0 %v2405
    %3393 = vmatpush1.bf16.msra.mxu0 %v2404
    %3394 = vmatprep.subr.bf16.mxu0 %v2397
    %3395 = vmatpush1.bf16.msra.mxu0 %v2396
    %3396 = vmatprep.subr.bf16.mxu0 %v2389
    %3397 = vmatpush1.bf16.msra.mxu0 %v2388
    %3398 = vmatprep.subr.bf16.mxu0 %v2381
    %3399 = vmatpush1.bf16.msra.mxu0 %v2380
    %3400 = vmatprep.subr.bf16.mxu0 %v2373
    %3401 = vmatpush1.bf16.msra.mxu0 %v2372
    %3402 = vmatprep.subr.bf16.mxu0 %v2365
    %3403 = vmatpush1.bf16.msra.mxu0 %v2364
    %3404 = vmatprep.subr.bf16.mxu0 %v2485
    %3405 = vmatpush2.bf16.msra.mxu0 %v2484
    %3406 = vmatprep.subr.bf16.mxu0 %v2477
    %3407 = vmatpush2.bf16.msra.mxu0 %v2476
    %3408 = vmatprep.subr.bf16.mxu0 %v2469
    %3409 = vmatpush2.bf16.msra.mxu0 %v2468
    %3410 = vmatprep.subr.bf16.mxu0 %v2461
    %3411 = vmatpush2.bf16.msra.mxu0 %v2460
    %3412 = vmatprep.subr.bf16.mxu0 %v2453
    %3413 = vmatpush2.bf16.msra.mxu0 %v2452
    %3414 = vmatprep.subr.bf16.mxu0 %v2445
    %3415 = vmatpush2.bf16.msra.mxu0 %v2444
    %3416 = vmatprep.subr.bf16.mxu0 %v2437
    %3417 = vmatpush2.bf16.msra.mxu0 %v2436
    %3418 = vmatprep.subr.bf16.mxu0 %v2429
    %3419 = vmatpush2.bf16.msra.mxu0 %v2428
    %3420 = vmatprep.mubr.bf16.mxu0 %v813
    %3421 = vmatmul.mubr.bf16.gmra.mxu0 %v812
    %v3422 = vpop.f32.mrf.mxu0
    %v3423 = vadd.f32 0.0, %v3422
    %v3424 = vpop.f32.mrf.mxu0
    %v3425 = vadd.f32 0.0, %v3424
    %v3426 = vpop.f32.mrf.mxu0
    %v3427 = vpop.f32.mrf.mxu0
    %3428 = vdwg.mxu0
    %3429 = vmatprep.subr.bf16.mxu0 %v2549
    %3430 = vmatpush1.bf16.msra.mxu0 %v2548
    %3431 = vmatprep.subr.bf16.mxu0 %v2541
    %3432 = vmatpush1.bf16.msra.mxu0 %v2540
    %3433 = vmatprep.subr.bf16.mxu0 %v2533
    %3434 = vmatpush1.bf16.msra.mxu0 %v2532
    %3435 = vmatprep.subr.bf16.mxu0 %v2525
    %3436 = vmatpush1.bf16.msra.mxu0 %v2524
    %3437 = vmatprep.subr.bf16.mxu0 %v2517
    %3438 = vmatpush1.bf16.msra.mxu0 %v2516
    %3439 = vmatprep.subr.bf16.mxu0 %v2509
    %3440 = vmatpush1.bf16.msra.mxu0 %v2508
    %3441 = vmatprep.subr.bf16.mxu0 %v2501
    %3442 = vmatpush1.bf16.msra.mxu0 %v2500
    %3443 = vmatprep.subr.bf16.mxu0 %v2493
    %3444 = vmatpush1.bf16.msra.mxu0 %v2492
    %3445 = vmatprep.subr.bf16.mxu0 %v2613
    %3446 = vmatpush2.bf16.msra.mxu0 %v2612
    %3447 = vmatprep.subr.bf16.mxu0 %v2605
    %3448 = vmatpush2.bf16.msra.mxu0 %v2604
    %3449 = vmatprep.subr.bf16.mxu0 %v2597
    %3450 = vmatpush2.bf16.msra.mxu0 %v2596
    %3451 = vmatprep.subr.bf16.mxu0 %v2589
    %3452 = vmatpush2.bf16.msra.mxu0 %v2588
    %3453 = vmatprep.subr.bf16.mxu0 %v2581
    %3454 = vmatpush2.bf16.msra.mxu0 %v2580
    %3455 = vmatprep.subr.bf16.mxu0 %v2573
    %3456 = vmatpush2.bf16.msra.mxu0 %v2572
    %3457 = vmatprep.subr.bf16.mxu0 %v2565
    %3458 = vmatpush2.bf16.msra.mxu0 %v2564
    %3459 = vmatprep.subr.bf16.mxu0 %v2557
    %3460 = vmatpush2.bf16.msra.mxu0 %v2556
    %3461 = vmatprep.mubr.bf16.mxu0 %v815
    %3462 = vmatmul.mubr.bf16.gmra.mxu0 %v814
    %v3463 = vpop.f32.mrf.mxu0
    %v3464 = vadd.f32 %v3423, %v3463
    %v3465 = vpop.f32.mrf.mxu0
    %v3466 = vadd.f32 %v3425, %v3465
    %v3467 = vpop.f32.mrf.mxu0
    %v3468 = vpop.f32.mrf.mxu0
    %3469 = vdwg.mxu0
    %3470 = vmatprep.subr.bf16.mxu0 %v2677
    %3471 = vmatpush1.bf16.msra.mxu0 %v2676
    %3472 = vmatprep.subr.bf16.mxu0 %v2669
    %3473 = vmatpush1.bf16.msra.mxu0 %v2668
    %3474 = vmatprep.subr.bf16.mxu0 %v2661
    %3475 = vmatpush1.bf16.msra.mxu0 %v2660
    %3476 = vmatprep.subr.bf16.mxu0 %v2653
    %3477 = vmatpush1.bf16.msra.mxu0 %v2652
    %3478 = vmatprep.subr.bf16.mxu0 %v2645
    %3479 = vmatpush1.bf16.msra.mxu0 %v2644
    %3480 = vmatprep.subr.bf16.mxu0 %v2637
    %3481 = vmatpush1.bf16.msra.mxu0 %v2636
    %3482 = vmatprep.subr.bf16.mxu0 %v2629
    %3483 = vmatpush1.bf16.msra.mxu0 %v2628
    %3484 = vmatprep.subr.bf16.mxu0 %v2621
    %3485 = vmatpush1.bf16.msra.mxu0 %v2620
    %3486 = vmatprep.subr.bf16.mxu0 %v2741
    %3487 = vmatpush2.bf16.msra.mxu0 %v2740
    %3488 = vmatprep.subr.bf16.mxu0 %v2733
    %3489 = vmatpush2.bf16.msra.mxu0 %v2732
    %3490 = vmatprep.subr.bf16.mxu0 %v2725
    %3491 = vmatpush2.bf16.msra.mxu0 %v2724
    %3492 = vmatprep.subr.bf16.mxu0 %v2717
    %3493 = vmatpush2.bf16.msra.mxu0 %v2716
    %3494 = vmatprep.subr.bf16.mxu0 %v2709
    %3495 = vmatpush2.bf16.msra.mxu0 %v2708
    %3496 = vmatprep.subr.bf16.mxu0 %v2701
    %3497 = vmatpush2.bf16.msra.mxu0 %v2700
    %3498 = vmatprep.subr.bf16.mxu0 %v2693
    %3499 = vmatpush2.bf16.msra.mxu0 %v2692
    %3500 = vmatprep.subr.bf16.mxu0 %v2685
    %3501 = vmatpush2.bf16.msra.mxu0 %v2684
    %3502 = vmatprep.mubr.bf16.mxu0 %v817
    %3503 = vmatmul.mubr.bf16.gmra.mxu0 %v816
    %v3504 = vpop.f32.mrf.mxu0
    %v3505 = vadd.f32 %v3464, %v3504
    %v3506 = vpop.f32.mrf.mxu0
    %v3507 = vadd.f32 %v3466, %v3506
    %v3508 = vpop.f32.mrf.mxu0
    %v3509 = vpop.f32.mrf.mxu0
    %3510 = vdwg.mxu0
    %3511 = vmatprep.subr.bf16.mxu0 %v2805
    %3512 = vmatpush1.bf16.msra.mxu0 %v2804
    %3513 = vmatprep.subr.bf16.mxu0 %v2797
    %3514 = vmatpush1.bf16.msra.mxu0 %v2796
    %3515 = vmatprep.subr.bf16.mxu0 %v2789
    %3516 = vmatpush1.bf16.msra.mxu0 %v2788
    %3517 = vmatprep.subr.bf16.mxu0 %v2781
    %3518 = vmatpush1.bf16.msra.mxu0 %v2780
    %3519 = vmatprep.subr.bf16.mxu0 %v2773
    %3520 = vmatpush1.bf16.msra.mxu0 %v2772
    %3521 = vmatprep.subr.bf16.mxu0 %v2765
    %3522 = vmatpush1.bf16.msra.mxu0 %v2764
    %3523 = vmatprep.subr.bf16.mxu0 %v2757
    %3524 = vmatpush1.bf16.msra.mxu0 %v2756
    %3525 = vmatprep.subr.bf16.mxu0 %v2749
    %3526 = vmatpush1.bf16.msra.mxu0 %v2748
    %3527 = vmatprep.subr.bf16.mxu0 %v2869
    %3528 = vmatpush2.bf16.msra.mxu0 %v2868
    %3529 = vmatprep.subr.bf16.mxu0 %v2861
    %3530 = vmatpush2.bf16.msra.mxu0 %v2860
    %3531 = vmatprep.subr.bf16.mxu0 %v2853
    %3532 = vmatpush2.bf16.msra.mxu0 %v2852
    %3533 = vmatprep.subr.bf16.mxu0 %v2845
    %3534 = vmatpush2.bf16.msra.mxu0 %v2844
    %3535 = vmatprep.subr.bf16.mxu0 %v2837
    %3536 = vmatpush2.bf16.msra.mxu0 %v2836
    %3537 = vmatprep.subr.bf16.mxu0 %v2829
    %3538 = vmatpush2.bf16.msra.mxu0 %v2828
    %3539 = vmatprep.subr.bf16.mxu0 %v2821
    %3540 = vmatpush2.bf16.msra.mxu0 %v2820
    %3541 = vmatprep.subr.bf16.mxu0 %v2813
    %3542 = vmatpush2.bf16.msra.mxu0 %v2812
    %3543 = vmatprep.mubr.bf16.mxu0 %v819
    %3544 = vmatmul.mubr.bf16.gmra.mxu0 %v818
    %v3545 = vpop.f32.mrf.mxu0
    %v3546 = vadd.f32 %v3505, %v3545
    %v3547 = vpop.f32.mrf.mxu0
    %v3548 = vadd.f32 %v3507, %v3547
    %v3549 = vpop.f32.mrf.mxu0
    %v3550 = vpop.f32.mrf.mxu0
    %3551 = vdwg.mxu0
    %3552 = vmatprep.subr.bf16.mxu0 %v2423
    %3553 = vmatpush1.bf16.msra.mxu0 %v2422
    %3554 = vmatprep.subr.bf16.mxu0 %v2415
    %3555 = vmatpush1.bf16.msra.mxu0 %v2414
    %3556 = vmatprep.subr.bf16.mxu0 %v2407
    %3557 = vmatpush1.bf16.msra.mxu0 %v2406
    %3558 = vmatprep.subr.bf16.mxu0 %v2399
    %3559 = vmatpush1.bf16.msra.mxu0 %v2398
    %3560 = vmatprep.subr.bf16.mxu0 %v2391
    %3561 = vmatpush1.bf16.msra.mxu0 %v2390
    %3562 = vmatprep.subr.bf16.mxu0 %v2383
    %3563 = vmatpush1.bf16.msra.mxu0 %v2382
    %3564 = vmatprep.subr.bf16.mxu0 %v2375
    %3565 = vmatpush1.bf16.msra.mxu0 %v2374
    %3566 = vmatprep.subr.bf16.mxu0 %v2367
    %3567 = vmatpush1.bf16.msra.mxu0 %v2366
    %3568 = vmatprep.subr.bf16.mxu0 %v2487
    %3569 = vmatpush2.bf16.msra.mxu0 %v2486
    %3570 = vmatprep.subr.bf16.mxu0 %v2479
    %3571 = vmatpush2.bf16.msra.mxu0 %v2478
    %3572 = vmatprep.subr.bf16.mxu0 %v2471
    %3573 = vmatpush2.bf16.msra.mxu0 %v2470
    %3574 = vmatprep.subr.bf16.mxu0 %v2463
    %3575 = vmatpush2.bf16.msra.mxu0 %v2462
    %3576 = vmatprep.subr.bf16.mxu0 %v2455
    %3577 = vmatpush2.bf16.msra.mxu0 %v2454
    %3578 = vmatprep.subr.bf16.mxu0 %v2447
    %3579 = vmatpush2.bf16.msra.mxu0 %v2446
    %3580 = vmatprep.subr.bf16.mxu0 %v2439
    %3581 = vmatpush2.bf16.msra.mxu0 %v2438
    %3582 = vmatprep.subr.bf16.mxu0 %v2431
    %3583 = vmatpush2.bf16.msra.mxu0 %v2430
    %3584 = vmatprep.mubr.bf16.mxu0 %v813
    %3585 = vmatmul.mubr.bf16.gmra.mxu0 %v812
    %v3586 = vpop.f32.mrf.mxu0
    %v3587 = vadd.f32 0.0, %v3586
    %v3588 = vpop.f32.mrf.mxu0
    %v3589 = vadd.f32 0.0, %v3588
    %v3590 = vpop.f32.mrf.mxu0
    %v3591 = vpop.f32.mrf.mxu0
    %3592 = vdwg.mxu0
    %3593 = vmatprep.subr.bf16.mxu0 %v2551
    %3594 = vmatpush1.bf16.msra.mxu0 %v2550
    %3595 = vmatprep.subr.bf16.mxu0 %v2543
    %3596 = vmatpush1.bf16.msra.mxu0 %v2542
    %3597 = vmatprep.subr.bf16.mxu0 %v2535
    %3598 = vmatpush1.bf16.msra.mxu0 %v2534
    %3599 = vmatprep.subr.bf16.mxu0 %v2527
    %3600 = vmatpush1.bf16.msra.mxu0 %v2526
    %3601 = vmatprep.subr.bf16.mxu0 %v2519
    %3602 = vmatpush1.bf16.msra.mxu0 %v2518
    %3603 = vmatprep.subr.bf16.mxu0 %v2511
    %3604 = vmatpush1.bf16.msra.mxu0 %v2510
    %3605 = vmatprep.subr.bf16.mxu0 %v2503
    %3606 = vmatpush1.bf16.msra.mxu0 %v2502
    %3607 = vmatprep.subr.bf16.mxu0 %v2495
    %3608 = vmatpush1.bf16.msra.mxu0 %v2494
    %3609 = vmatprep.subr.bf16.mxu0 %v2615
    %3610 = vmatpush2.bf16.msra.mxu0 %v2614
    %3611 = vmatprep.subr.bf16.mxu0 %v2607
    %3612 = vmatpush2.bf16.msra.mxu0 %v2606
    %3613 = vmatprep.subr.bf16.mxu0 %v2599
    %3614 = vmatpush2.bf16.msra.mxu0 %v2598
    %3615 = vmatprep.subr.bf16.mxu0 %v2591
    %3616 = vmatpush2.bf16.msra.mxu0 %v2590
    %3617 = vmatprep.subr.bf16.mxu0 %v2583
    %3618 = vmatpush2.bf16.msra.mxu0 %v2582
    %3619 = vmatprep.subr.bf16.mxu0 %v2575
    %3620 = vmatpush2.bf16.msra.mxu0 %v2574
    %3621 = vmatprep.subr.bf16.mxu0 %v2567
    %3622 = vmatpush2.bf16.msra.mxu0 %v2566
    %3623 = vmatprep.subr.bf16.mxu0 %v2559
    %3624 = vmatpush2.bf16.msra.mxu0 %v2558
    %3625 = vmatprep.mubr.bf16.mxu0 %v815
    %3626 = vmatmul.mubr.bf16.gmra.mxu0 %v814
    %v3627 = vpop.f32.mrf.mxu0
    %v3628 = vadd.f32 %v3587, %v3627
    %v3629 = vpop.f32.mrf.mxu0
    %v3630 = vadd.f32 %v3589, %v3629
    %v3631 = vpop.f32.mrf.mxu0
    %v3632 = vpop.f32.mrf.mxu0
    %3633 = vdwg.mxu0
    %3634 = vmatprep.subr.bf16.mxu0 %v2679
    %3635 = vmatpush1.bf16.msra.mxu0 %v2678
    %3636 = vmatprep.subr.bf16.mxu0 %v2671
    %3637 = vmatpush1.bf16.msra.mxu0 %v2670
    %3638 = vmatprep.subr.bf16.mxu0 %v2663
    %3639 = vmatpush1.bf16.msra.mxu0 %v2662
    %3640 = vmatprep.subr.bf16.mxu0 %v2655
    %3641 = vmatpush1.bf16.msra.mxu0 %v2654
    %3642 = vmatprep.subr.bf16.mxu0 %v2647
    %3643 = vmatpush1.bf16.msra.mxu0 %v2646
    %3644 = vmatprep.subr.bf16.mxu0 %v2639
    %3645 = vmatpush1.bf16.msra.mxu0 %v2638
    %3646 = vmatprep.subr.bf16.mxu0 %v2631
    %3647 = vmatpush1.bf16.msra.mxu0 %v2630
    %3648 = vmatprep.subr.bf16.mxu0 %v2623
    %3649 = vmatpush1.bf16.msra.mxu0 %v2622
    %3650 = vmatprep.subr.bf16.mxu0 %v2743
    %3651 = vmatpush2.bf16.msra.mxu0 %v2742
    %3652 = vmatprep.subr.bf16.mxu0 %v2735
    %3653 = vmatpush2.bf16.msra.mxu0 %v2734
    %3654 = vmatprep.subr.bf16.mxu0 %v2727
    %3655 = vmatpush2.bf16.msra.mxu0 %v2726
    %3656 = vmatprep.subr.bf16.mxu0 %v2719
    %3657 = vmatpush2.bf16.msra.mxu0 %v2718
    %3658 = vmatprep.subr.bf16.mxu0 %v2711
    %3659 = vmatpush2.bf16.msra.mxu0 %v2710
    %3660 = vmatprep.subr.bf16.mxu0 %v2703
    %3661 = vmatpush2.bf16.msra.mxu0 %v2702
    %3662 = vmatprep.subr.bf16.mxu0 %v2695
    %3663 = vmatpush2.bf16.msra.mxu0 %v2694
    %3664 = vmatprep.subr.bf16.mxu0 %v2687
    %3665 = vmatpush2.bf16.msra.mxu0 %v2686
    %3666 = vmatprep.mubr.bf16.mxu0 %v817
    %3667 = vmatmul.mubr.bf16.gmra.mxu0 %v816
    %v3668 = vpop.f32.mrf.mxu0
    %v3669 = vadd.f32 %v3628, %v3668
    %v3670 = vpop.f32.mrf.mxu0
    %v3671 = vadd.f32 %v3630, %v3670
    %v3672 = vpop.f32.mrf.mxu0
    %v3673 = vpop.f32.mrf.mxu0
    %3674 = vdwg.mxu0
    %3675 = vmatprep.subr.bf16.mxu0 %v2807
    %3676 = vmatpush1.bf16.msra.mxu0 %v2806
    %3677 = vmatprep.subr.bf16.mxu0 %v2799
    %3678 = vmatpush1.bf16.msra.mxu0 %v2798
    %3679 = vmatprep.subr.bf16.mxu0 %v2791
    %3680 = vmatpush1.bf16.msra.mxu0 %v2790
    %3681 = vmatprep.subr.bf16.mxu0 %v2783
    %3682 = vmatpush1.bf16.msra.mxu0 %v2782
    %3683 = vmatprep.subr.bf16.mxu0 %v2775
    %3684 = vmatpush1.bf16.msra.mxu0 %v2774
    %3685 = vmatprep.subr.bf16.mxu0 %v2767
    %3686 = vmatpush1.bf16.msra.mxu0 %v2766
    %3687 = vmatprep.subr.bf16.mxu0 %v2759
    %3688 = vmatpush1.bf16.msra.mxu0 %v2758
    %3689 = vmatprep.subr.bf16.mxu0 %v2751
    %3690 = vmatpush1.bf16.msra.mxu0 %v2750
    %3691 = vmatprep.subr.bf16.mxu0 %v2871
    %3692 = vmatpush2.bf16.msra.mxu0 %v2870
    %3693 = vmatprep.subr.bf16.mxu0 %v2863
    %3694 = vmatpush2.bf16.msra.mxu0 %v2862
    %3695 = vmatprep.subr.bf16.mxu0 %v2855
    %3696 = vmatpush2.bf16.msra.mxu0 %v2854
    %3697 = vmatprep.subr.bf16.mxu0 %v2847
    %3698 = vmatpush2.bf16.msra.mxu0 %v2846
    %3699 = vmatprep.subr.bf16.mxu0 %v2839
    %3700 = vmatpush2.bf16.msra.mxu0 %v2838
    %3701 = vmatprep.subr.bf16.mxu0 %v2831
    %3702 = vmatpush2.bf16.msra.mxu0 %v2830
    %3703 = vmatprep.subr.bf16.mxu0 %v2823
    %3704 = vmatpush2.bf16.msra.mxu0 %v2822
    %3705 = vmatprep.subr.bf16.mxu0 %v2815
    %3706 = vmatpush2.bf16.msra.mxu0 %v2814
    %3707 = vmatprep.mubr.bf16.mxu0 %v819
    %3708 = vmatmul.mubr.bf16.gmra.mxu0 %v818
    %v3709 = vpop.f32.mrf.mxu0
    %v3710 = vadd.f32 %v3669, %v3709
    %v3711 = vpop.f32.mrf.mxu0
    %v3712 = vadd.f32 %v3671, %v3711
    %v3713 = vpop.f32.mrf.mxu0
    %v3714 = vpop.f32.mrf.mxu0
    %3715 = vdwg.mxu0
    %3716 = vmatprep.subr.bf16.mxu0 %v2425
    %3717 = vmatpush1.bf16.msra.mxu0 %v2424
    %3718 = vmatprep.subr.bf16.mxu0 %v2417
    %3719 = vmatpush1.bf16.msra.mxu0 %v2416
    %3720 = vmatprep.subr.bf16.mxu0 %v2409
    %3721 = vmatpush1.bf16.msra.mxu0 %v2408
    %3722 = vmatprep.subr.bf16.mxu0 %v2401
    %3723 = vmatpush1.bf16.msra.mxu0 %v2400
    %3724 = vmatprep.subr.bf16.mxu0 %v2393
    %3725 = vmatpush1.bf16.msra.mxu0 %v2392
    %3726 = vmatprep.subr.bf16.mxu0 %v2385
    %3727 = vmatpush1.bf16.msra.mxu0 %v2384
    %3728 = vmatprep.subr.bf16.mxu0 %v2377
    %3729 = vmatpush1.bf16.msra.mxu0 %v2376
    %3730 = vmatprep.subr.bf16.mxu0 %v2369
    %3731 = vmatpush1.bf16.msra.mxu0 %v2368
    %3732 = vmatprep.subr.bf16.mxu0 %v2489
    %3733 = vmatpush2.bf16.msra.mxu0 %v2488
    %3734 = vmatprep.subr.bf16.mxu0 %v2481
    %3735 = vmatpush2.bf16.msra.mxu0 %v2480
    %3736 = vmatprep.subr.bf16.mxu0 %v2473
    %3737 = vmatpush2.bf16.msra.mxu0 %v2472
    %3738 = vmatprep.subr.bf16.mxu0 %v2465
    %3739 = vmatpush2.bf16.msra.mxu0 %v2464
    %3740 = vmatprep.subr.bf16.mxu0 %v2457
    %3741 = vmatpush2.bf16.msra.mxu0 %v2456
    %3742 = vmatprep.subr.bf16.mxu0 %v2449
    %3743 = vmatpush2.bf16.msra.mxu0 %v2448
    %3744 = vmatprep.subr.bf16.mxu0 %v2441
    %3745 = vmatpush2.bf16.msra.mxu0 %v2440
    %3746 = vmatprep.subr.bf16.mxu0 %v2433
    %3747 = vmatpush2.bf16.msra.mxu0 %v2432
    %3748 = vmatprep.mubr.bf16.mxu0 %v813
    %3749 = vmatmul.mubr.bf16.gmra.mxu0 %v812
    %v3750 = vpop.f32.mrf.mxu0
    %v3751 = vadd.f32 0.0, %v3750
    %v3752 = vpop.f32.mrf.mxu0
    %v3753 = vadd.f32 0.0, %v3752
    %v3754 = vpop.f32.mrf.mxu0
    %v3755 = vpop.f32.mrf.mxu0
    %3756 = vdwg.mxu0
    %3757 = vmatprep.subr.bf16.mxu0 %v2553
    %3758 = vmatpush1.bf16.msra.mxu0 %v2552
    %3759 = vmatprep.subr.bf16.mxu0 %v2545
    %3760 = vmatpush1.bf16.msra.mxu0 %v2544
    %3761 = vmatprep.subr.bf16.mxu0 %v2537
    %3762 = vmatpush1.bf16.msra.mxu0 %v2536
    %3763 = vmatprep.subr.bf16.mxu0 %v2529
    %3764 = vmatpush1.bf16.msra.mxu0 %v2528
    %3765 = vmatprep.subr.bf16.mxu0 %v2521
    %3766 = vmatpush1.bf16.msra.mxu0 %v2520
    %3767 = vmatprep.subr.bf16.mxu0 %v2513
    %3768 = vmatpush1.bf16.msra.mxu0 %v2512
    %3769 = vmatprep.subr.bf16.mxu0 %v2505
    %3770 = vmatpush1.bf16.msra.mxu0 %v2504
    %3771 = vmatprep.subr.bf16.mxu0 %v2497
    %3772 = vmatpush1.bf16.msra.mxu0 %v2496
    %3773 = vmatprep.subr.bf16.mxu0 %v2617
    %3774 = vmatpush2.bf16.msra.mxu0 %v2616
    %3775 = vmatprep.subr.bf16.mxu0 %v2609
    %3776 = vmatpush2.bf16.msra.mxu0 %v2608
    %3777 = vmatprep.subr.bf16.mxu0 %v2601
    %3778 = vmatpush2.bf16.msra.mxu0 %v2600
    %3779 = vmatprep.subr.bf16.mxu0 %v2593
    %3780 = vmatpush2.bf16.msra.mxu0 %v2592
    %3781 = vmatprep.subr.bf16.mxu0 %v2585
    %3782 = vmatpush2.bf16.msra.mxu0 %v2584
    %3783 = vmatprep.subr.bf16.mxu0 %v2577
    %3784 = vmatpush2.bf16.msra.mxu0 %v2576
    %3785 = vmatprep.subr.bf16.mxu0 %v2569
    %3786 = vmatpush2.bf16.msra.mxu0 %v2568
    %3787 = vmatprep.subr.bf16.mxu0 %v2561
    %3788 = vmatpush2.bf16.msra.mxu0 %v2560
    %3789 = vmatprep.mubr.bf16.mxu0 %v815
    %3790 = vmatmul.mubr.bf16.gmra.mxu0 %v814
    %v3791 = vpop.f32.mrf.mxu0
    %v3792 = vadd.f32 %v3751, %v3791
    %v3793 = vpop.f32.mrf.mxu0
    %v3794 = vadd.f32 %v3753, %v3793
    %v3795 = vpop.f32.mrf.mxu0
    %v3796 = vpop.f32.mrf.mxu0
    %3797 = vdwg.mxu0
    %3798 = vmatprep.subr.bf16.mxu0 %v2681
    %3799 = vmatpush1.bf16.msra.mxu0 %v2680
    %3800 = vmatprep.subr.bf16.mxu0 %v2673
    %3801 = vmatpush1.bf16.msra.mxu0 %v2672
    %3802 = vmatprep.subr.bf16.mxu0 %v2665
    %3803 = vmatpush1.bf16.msra.mxu0 %v2664
    %3804 = vmatprep.subr.bf16.mxu0 %v2657
    %3805 = vmatpush1.bf16.msra.mxu0 %v2656
    %3806 = vmatprep.subr.bf16.mxu0 %v2649
    %3807 = vmatpush1.bf16.msra.mxu0 %v2648
    %3808 = vmatprep.subr.bf16.mxu0 %v2641
    %3809 = vmatpush1.bf16.msra.mxu0 %v2640
    %3810 = vmatprep.subr.bf16.mxu0 %v2633
    %3811 = vmatpush1.bf16.msra.mxu0 %v2632
    %3812 = vmatprep.subr.bf16.mxu0 %v2625
    %3813 = vmatpush1.bf16.msra.mxu0 %v2624
    %3814 = vmatprep.subr.bf16.mxu0 %v2745
    %3815 = vmatpush2.bf16.msra.mxu0 %v2744
    %3816 = vmatprep.subr.bf16.mxu0 %v2737
    %3817 = vmatpush2.bf16.msra.mxu0 %v2736
    %3818 = vmatprep.subr.bf16.mxu0 %v2729
    %3819 = vmatpush2.bf16.msra.mxu0 %v2728
    %3820 = vmatprep.subr.bf16.mxu0 %v2721
    %3821 = vmatpush2.bf16.msra.mxu0 %v2720
    %3822 = vmatprep.subr.bf16.mxu0 %v2713
    %3823 = vmatpush2.bf16.msra.mxu0 %v2712
    %3824 = vmatprep.subr.bf16.mxu0 %v2705
    %3825 = vmatpush2.bf16.msra.mxu0 %v2704
    %3826 = vmatprep.subr.bf16.mxu0 %v2697
    %3827 = vmatpush2.bf16.msra.mxu0 %v2696
    %3828 = vmatprep.subr.bf16.mxu0 %v2689
    %3829 = vmatpush2.bf16.msra.mxu0 %v2688
    %3830 = vmatprep.mubr.bf16.mxu0 %v817
    %3831 = vmatmul.mubr.bf16.gmra.mxu0 %v816
    %v3832 = vpop.f32.mrf.mxu0
    %v3833 = vadd.f32 %v3792, %v3832
    %v3834 = vpop.f32.mrf.mxu0
    %v3835 = vadd.f32 %v3794, %v3834
    %v3836 = vpop.f32.mrf.mxu0
    %v3837 = vpop.f32.mrf.mxu0
    %3838 = vdwg.mxu0
    %3839 = vmatprep.subr.bf16.mxu0 %v2809
    %3840 = vmatpush1.bf16.msra.mxu0 %v2808
    %3841 = vmatprep.subr.bf16.mxu0 %v2801
    %3842 = vmatpush1.bf16.msra.mxu0 %v2800
    %3843 = vmatprep.subr.bf16.mxu0 %v2793
    %3844 = vmatpush1.bf16.msra.mxu0 %v2792
    %3845 = vmatprep.subr.bf16.mxu0 %v2785
    %3846 = vmatpush1.bf16.msra.mxu0 %v2784
    %3847 = vmatprep.subr.bf16.mxu0 %v2777
    %3848 = vmatpush1.bf16.msra.mxu0 %v2776
    %3849 = vmatprep.subr.bf16.mxu0 %v2769
    %3850 = vmatpush1.bf16.msra.mxu0 %v2768
    %3851 = vmatprep.subr.bf16.mxu0 %v2761
    %3852 = vmatpush1.bf16.msra.mxu0 %v2760
    %3853 = vmatprep.subr.bf16.mxu0 %v2753
    %3854 = vmatpush1.bf16.msra.mxu0 %v2752
    %3855 = vmatprep.subr.bf16.mxu0 %v2873
    %3856 = vmatpush2.bf16.msra.mxu0 %v2872
    %3857 = vmatprep.subr.bf16.mxu0 %v2865
    %3858 = vmatpush2.bf16.msra.mxu0 %v2864
    %3859 = vmatprep.subr.bf16.mxu0 %v2857
    %3860 = vmatpush2.bf16.msra.mxu0 %v2856
    %3861 = vmatprep.subr.bf16.mxu0 %v2849
    %3862 = vmatpush2.bf16.msra.mxu0 %v2848
    %3863 = vmatprep.subr.bf16.mxu0 %v2841
    %3864 = vmatpush2.bf16.msra.mxu0 %v2840
    %3865 = vmatprep.subr.bf16.mxu0 %v2833
    %3866 = vmatpush2.bf16.msra.mxu0 %v2832
    %3867 = vmatprep.subr.bf16.mxu0 %v2825
    %3868 = vmatpush2.bf16.msra.mxu0 %v2824
    %3869 = vmatprep.subr.bf16.mxu0 %v2817
    %3870 = vmatpush2.bf16.msra.mxu0 %v2816
    %3871 = vmatprep.mubr.bf16.mxu0 %v819
    %3872 = vmatmul.mubr.bf16.gmra.mxu0 %v818
    %v3873 = vpop.f32.mrf.mxu0
    %v3874 = vadd.f32 %v3833, %v3873
    %v3875 = vpop.f32.mrf.mxu0
    %v3876 = vadd.f32 %v3835, %v3875
    %v3877 = vpop.f32.mrf.mxu0
    %v3878 = vpop.f32.mrf.mxu0
    %3879 = vdwg.mxu0
    %3880 = vmatprep.subr.bf16.mxu0 %v2427
    %3881 = vmatpush1.bf16.msra.mxu0 %v2426
    %3882 = vmatprep.subr.bf16.mxu0 %v2419
    %3883 = vmatpush1.bf16.msra.mxu0 %v2418
    %3884 = vmatprep.subr.bf16.mxu0 %v2411
    %3885 = vmatpush1.bf16.msra.mxu0 %v2410
    %3886 = vmatprep.subr.bf16.mxu0 %v2403
    %3887 = vmatpush1.bf16.msra.mxu0 %v2402
    %3888 = vmatprep.subr.bf16.mxu0 %v2395
    %3889 = vmatpush1.bf16.msra.mxu0 %v2394
    %3890 = vmatprep.subr.bf16.mxu0 %v2387
    %3891 = vmatpush1.bf16.msra.mxu0 %v2386
    %3892 = vmatprep.subr.bf16.mxu0 %v2379
    %3893 = vmatpush1.bf16.msra.mxu0 %v2378
    %3894 = vmatprep.subr.bf16.mxu0 %v2371
    %3895 = vmatpush1.bf16.msra.mxu0 %v2370
    %3896 = vmatprep.subr.bf16.mxu0 %v2491
    %3897 = vmatpush2.bf16.msra.mxu0 %v2490
    %3898 = vmatprep.subr.bf16.mxu0 %v2483
    %3899 = vmatpush2.bf16.msra.mxu0 %v2482
    %3900 = vmatprep.subr.bf16.mxu0 %v2475
    %3901 = vmatpush2.bf16.msra.mxu0 %v2474
    %3902 = vmatprep.subr.bf16.mxu0 %v2467
    %3903 = vmatpush2.bf16.msra.mxu0 %v2466
    %3904 = vmatprep.subr.bf16.mxu0 %v2459
    %3905 = vmatpush2.bf16.msra.mxu0 %v2458
    %3906 = vmatprep.subr.bf16.mxu0 %v2451
    %3907 = vmatpush2.bf16.msra.mxu0 %v2450
    %3908 = vmatprep.subr.bf16.mxu0 %v2443
    %3909 = vmatpush2.bf16.msra.mxu0 %v2442
    %3910 = vmatprep.subr.bf16.mxu0 %v2435
    %3911 = vmatpush2.bf16.msra.mxu0 %v2434
    %3912 = vmatprep.mubr.bf16.mxu0 %v813
    %3913 = vmatmul.mubr.bf16.gmra.mxu0 %v812
    %v3914 = vpop.f32.mrf.mxu0
    %v3915 = vadd.f32 0.0, %v3914
    %v3916 = vpop.f32.mrf.mxu0
    %v3917 = vadd.f32 0.0, %v3916
    %v3918 = vpop.f32.mrf.mxu0
    %v3919 = vpop.f32.mrf.mxu0
    %3920 = vdwg.mxu0
    %3921 = vmatprep.subr.bf16.mxu0 %v2555
    %3922 = vmatpush1.bf16.msra.mxu0 %v2554
    %3923 = vmatprep.subr.bf16.mxu0 %v2547
    %3924 = vmatpush1.bf16.msra.mxu0 %v2546
    %3925 = vmatprep.subr.bf16.mxu0 %v2539
    %3926 = vmatpush1.bf16.msra.mxu0 %v2538
    %3927 = vmatprep.subr.bf16.mxu0 %v2531
    %3928 = vmatpush1.bf16.msra.mxu0 %v2530
    %3929 = vmatprep.subr.bf16.mxu0 %v2523
    %3930 = vmatpush1.bf16.msra.mxu0 %v2522
    %3931 = vmatprep.subr.bf16.mxu0 %v2515
    %3932 = vmatpush1.bf16.msra.mxu0 %v2514
    %3933 = vmatprep.subr.bf16.mxu0 %v2507
    %3934 = vmatpush1.bf16.msra.mxu0 %v2506
    %3935 = vmatprep.subr.bf16.mxu0 %v2499
    %3936 = vmatpush1.bf16.msra.mxu0 %v2498
    %3937 = vmatprep.subr.bf16.mxu0 %v2619
    %3938 = vmatpush2.bf16.msra.mxu0 %v2618
    %3939 = vmatprep.subr.bf16.mxu0 %v2611
    %3940 = vmatpush2.bf16.msra.mxu0 %v2610
    %3941 = vmatprep.subr.bf16.mxu0 %v2603
    %3942 = vmatpush2.bf16.msra.mxu0 %v2602
    %3943 = vmatprep.subr.bf16.mxu0 %v2595
    %3944 = vmatpush2.bf16.msra.mxu0 %v2594
    %3945 = vmatprep.subr.bf16.mxu0 %v2587
    %3946 = vmatpush2.bf16.msra.mxu0 %v2586
    %3947 = vmatprep.subr.bf16.mxu0 %v2579
    %3948 = vmatpush2.bf16.msra.mxu0 %v2578
    %3949 = vmatprep.subr.bf16.mxu0 %v2571
    %3950 = vmatpush2.bf16.msra.mxu0 %v2570
    %3951 = vmatprep.subr.bf16.mxu0 %v2563
    %3952 = vmatpush2.bf16.msra.mxu0 %v2562
    %3953 = vmatprep.mubr.bf16.mxu0 %v815
    %3954 = vmatmul.mubr.bf16.gmra.mxu0 %v814
    %v3955 = vpop.f32.mrf.mxu0
    %v3956 = vadd.f32 %v3915, %v3955
    %v3957 = vpop.f32.mrf.mxu0
    %v3958 = vadd.f32 %v3917, %v3957
    %v3959 = vpop.f32.mrf.mxu0
    %v3960 = vpop.f32.mrf.mxu0
    %3961 = vdwg.mxu0
    %3962 = vmatprep.subr.bf16.mxu0 %v2683
    %3963 = vmatpush1.bf16.msra.mxu0 %v2682
    %3964 = vmatprep.subr.bf16.mxu0 %v2675
    %3965 = vmatpush1.bf16.msra.mxu0 %v2674
    %3966 = vmatprep.subr.bf16.mxu0 %v2667
    %3967 = vmatpush1.bf16.msra.mxu0 %v2666
    %3968 = vmatprep.subr.bf16.mxu0 %v2659
    %3969 = vmatpush1.bf16.msra.mxu0 %v2658
    %3970 = vmatprep.subr.bf16.mxu0 %v2651
    %3971 = vmatpush1.bf16.msra.mxu0 %v2650
    %3972 = vmatprep.subr.bf16.mxu0 %v2643
    %3973 = vmatpush1.bf16.msra.mxu0 %v2642
    %3974 = vmatprep.subr.bf16.mxu0 %v2635
    %3975 = vmatpush1.bf16.msra.mxu0 %v2634
    %3976 = vmatprep.subr.bf16.mxu0 %v2627
    %3977 = vmatpush1.bf16.msra.mxu0 %v2626
    %3978 = vmatprep.subr.bf16.mxu0 %v2747
    %3979 = vmatpush2.bf16.msra.mxu0 %v2746
    %3980 = vmatprep.subr.bf16.mxu0 %v2739
    %3981 = vmatpush2.bf16.msra.mxu0 %v2738
    %3982 = vmatprep.subr.bf16.mxu0 %v2731
    %3983 = vmatpush2.bf16.msra.mxu0 %v2730
    %3984 = vmatprep.subr.bf16.mxu0 %v2723
    %3985 = vmatpush2.bf16.msra.mxu0 %v2722
    %3986 = vmatprep.subr.bf16.mxu0 %v2715
    %3987 = vmatpush2.bf16.msra.mxu0 %v2714
    %3988 = vmatprep.subr.bf16.mxu0 %v2707
    %3989 = vmatpush2.bf16.msra.mxu0 %v2706
    %3990 = vmatprep.subr.bf16.mxu0 %v2699
    %3991 = vmatpush2.bf16.msra.mxu0 %v2698
    %3992 = vmatprep.subr.bf16.mxu0 %v2691
    %3993 = vmatpush2.bf16.msra.mxu0 %v2690
    %3994 = vmatprep.mubr.bf16.mxu0 %v817
    %3995 = vmatmul.mubr.bf16.gmra.mxu0 %v816
    %v3996 = vpop.f32.mrf.mxu0
    %v3997 = vadd.f32 %v3956, %v3996
    %v3998 = vpop.f32.mrf.mxu0
    %v3999 = vadd.f32 %v3958, %v3998
    %v4000 = vpop.f32.mrf.mxu0
    %v4001 = vpop.f32.mrf.mxu0
    %4002 = vdwg.mxu0
    %4003 = vmatprep.subr.bf16.mxu0 %v2811
    %4004 = vmatpush1.bf16.msra.mxu0 %v2810
    %4005 = vmatprep.subr.bf16.mxu0 %v2803
    %4006 = vmatpush1.bf16.msra.mxu0 %v2802
    %4007 = vmatprep.subr.bf16.mxu0 %v2795
    %4008 = vmatpush1.bf16.msra.mxu0 %v2794
    %4009 = vmatprep.subr.bf16.mxu0 %v2787
    %4010 = vmatpush1.bf16.msra.mxu0 %v2786
    %4011 = vmatprep.subr.bf16.mxu0 %v2779
    %4012 = vmatpush1.bf16.msra.mxu0 %v2778
    %4013 = vmatprep.subr.bf16.mxu0 %v2771
    %4014 = vmatpush1.bf16.msra.mxu0 %v2770
    %4015 = vmatprep.subr.bf16.mxu0 %v2763
    %4016 = vmatpush1.bf16.msra.mxu0 %v2762
    %4017 = vmatprep.subr.bf16.mxu0 %v2755
    %4018 = vmatpush1.bf16.msra.mxu0 %v2754
    %4019 = vmatprep.subr.bf16.mxu0 %v2875
    %4020 = vmatpush2.bf16.msra.mxu0 %v2874
    %4021 = vmatprep.subr.bf16.mxu0 %v2867
    %4022 = vmatpush2.bf16.msra.mxu0 %v2866
    %4023 = vmatprep.subr.bf16.mxu0 %v2859
    %4024 = vmatpush2.bf16.msra.mxu0 %v2858
    %4025 = vmatprep.subr.bf16.mxu0 %v2851
    %4026 = vmatpush2.bf16.msra.mxu0 %v2850
    %4027 = vmatprep.subr.bf16.mxu0 %v2843
    %4028 = vmatpush2.bf16.msra.mxu0 %v2842
    %4029 = vmatprep.subr.bf16.mxu0 %v2835
    %4030 = vmatpush2.bf16.msra.mxu0 %v2834
    %4031 = vmatprep.subr.bf16.mxu0 %v2827
    %4032 = vmatpush2.bf16.msra.mxu0 %v2826
    %4033 = vmatprep.subr.bf16.mxu0 %v2819
    %4034 = vmatpush2.bf16.msra.mxu0 %v2818
    %4035 = vmatprep.mubr.bf16.mxu0 %v819
    %4036 = vmatmul.mubr.bf16.gmra.mxu0 %v818
    %v4037 = vpop.f32.mrf.mxu0
    %v4038 = vadd.f32 %v3997, %v4037
    %v4039 = vpop.f32.mrf.mxu0
    %v4040 = vadd.f32 %v3999, %v4039
    %v4041 = vpop.f32.mrf.mxu0
    %v4042 = vpop.f32.mrf.mxu0
    %4043 = vdwg.mxu0
    %v4044 = vadd.f32 %v276, %v3546
    %v4045 = vadd.f32 %v277, %v3548
    %v4046 = vadd.f32 %v278, %v3710
    %v4047 = vadd.f32 %v279, %v3712
    %v4048 = vadd.f32 %v280, %v3874
    %v4049 = vadd.f32 %v281, %v3876
    %v4050 = vadd.f32 %v282, %v4038
    %v4051 = vadd.f32 %v283, %v4040
    %4052 = vst [vmem:[#allocation2] sm:$0xff] %v4044
    %4053 = vst [vmem:[#allocation2 + $0x8] sm:$0xff] %v4045
    %4054 = vst [vmem:[#allocation2 + $0x10] sm:$0xff] %v4046
    %4055 = vst [vmem:[#allocation2 + $0x18] sm:$0xff] %v4047
    %4056 = vst [vmem:[#allocation2 + $0x20] sm:$0xff] %v4048
    %4057 = vst [vmem:[#allocation2 + $0x28] sm:$0xff] %v4049
    %4058 = vst [vmem:[#allocation2 + $0x30] sm:$0xff] %v4050
    %4059 = vst [vmem:[#allocation2 + $0x38] sm:$0xff] %v4051
    // Predicated region
    $region142: #{tpu_custom_call.1} parent=1 // pred_check
      %p4060 = pneg %p264
    $region143: #{tpu_custom_call.1} parent=1 // pred_check_branch
      %4062 = sbr.rel (%p4060) target = $region145
    $region144: #{tpu_custom_call.1} parent=1 // pred_region
      %v4063 = vlaneseq
      %v4064 = vshrl.u32 %v4063, 7
      %vm4065 = vcmp.lt.s32.totalorder %v4064, 2
      %v4066 = vsel %vm4065, 1, 0
      %v4067 = vcvt.s32.f32 %v4066
      %v4068 = vld [vmem:[#allocation2] sm:$0xff]
      %v4069 = vld [vmem:[#allocation2 + $0x8] sm:$0xff]
      %v4070 = vld [vmem:[#allocation2 + $0x10] sm:$0xff]
      %v4071 = vld [vmem:[#allocation2 + $0x18] sm:$0xff]
      %v4072 = vld [vmem:[#allocation2 + $0x20] sm:$0xff]
      %v4073 = vld [vmem:[#allocation2 + $0x28] sm:$0xff]
      %v4074 = vld [vmem:[#allocation2 + $0x30] sm:$0xff]
      %v4075 = vld [vmem:[#allocation2 + $0x38] sm:$0xff]
      %v4076 = vld [vmem:[#allocation8] sm:$0xff]
      %v4078 = vlaneseq
      %v4079 = vshrl.u32 %v4078, 7
      %v4080 = vsub.s32 0, %v4079
      %v4081 = vrot.slane %v4076, %v4080
      %v4082 = vlaneseq
      %v4083 = vshrl.u32 %v4082, 7
      %v4084 = vsub.s32 1, %v4083
      %v4085 = vrot.slane %v4076, %v4084
      %v4086 = vlaneseq
      %v4087 = vshrl.u32 %v4086, 7
      %v4088 = vsub.s32 2, %v4087
      %v4089 = vrot.slane %v4076, %v4088
      %v4090 = vlaneseq
      %v4091 = vshrl.u32 %v4090, 7
      %v4092 = vsub.s32 3, %v4091
      %v4093 = vrot.slane %v4076, %v4092
      %v4094 = vlaneseq
      %v4095 = vshrl.u32 %v4094, 7
      %v4096 = vsub.s32 4, %v4095
      %v4097 = vrot.slane %v4076, %v4096
      %v4098 = vlaneseq
      %v4099 = vshrl.u32 %v4098, 7
      %v4100 = vsub.s32 5, %v4099
      %v4101 = vrot.slane %v4076, %v4100
      %v4102 = vlaneseq
      %v4103 = vshrl.u32 %v4102, 7
      %v4104 = vsub.s32 6, %v4103
      %v4105 = vrot.slane %v4076, %v4104
      %v4106 = vlaneseq
      %v4107 = vshrl.u32 %v4106, 7
      %v4108 = vsub.s32 7, %v4107
      %v4109 = vrot.slane %v4076, %v4108
      %v4118 = vadd.f32 %v4068, %v4081
      %v4119 = vadd.f32 %v4069, %v4085
      %v4120 = vadd.f32 %v4070, %v4089
      %v4121 = vadd.f32 %v4071, %v4093
      %v4122 = vadd.f32 %v4072, %v4097
      %v4123 = vadd.f32 %v4073, %v4101
      %v4124 = vadd.f32 %v4074, %v4105
      %v4125 = vadd.f32 %v4075, %v4109
      %vm4126 = vcmp.gt.f32.partialorder %v4118, 0.0
      %vm4127 = vcmp.gt.f32.partialorder %v4119, 0.0
      %vm4128 = vcmp.gt.f32.partialorder %v4120, 0.0
      %vm4129 = vcmp.gt.f32.partialorder %v4121, 0.0
      %vm4130 = vcmp.gt.f32.partialorder %v4122, 0.0
      %vm4131 = vcmp.gt.f32.partialorder %v4123, 0.0
      %vm4132 = vcmp.gt.f32.partialorder %v4124, 0.0
      %vm4133 = vcmp.gt.f32.partialorder %v4125, 0.0
      %v4134 = vmul.f32 %v4118, 0.2
      %v4135 = vmul.f32 %v4119, 0.2
      %v4136 = vmul.f32 %v4120, 0.2
      %v4137 = vmul.f32 %v4121, 0.2
      %v4138 = vmul.f32 %v4122, 0.2
      %v4139 = vmul.f32 %v4123, 0.2
      %v4140 = vmul.f32 %v4124, 0.2
      %v4141 = vmul.f32 %v4125, 0.2
      %v4142 = vsel %vm4126, %v4118, %v4134
      %v4143 = vsel %vm4127, %v4119, %v4135
      %v4144 = vsel %vm4128, %v4120, %v4136
      %v4145 = vsel %vm4129, %v4121, %v4137
      %v4146 = vsel %vm4130, %v4122, %v4138
      %v4147 = vsel %vm4131, %v4123, %v4139
      %v4148 = vsel %vm4132, %v4124, %v4140
      %v4149 = vsel %vm4133, %v4125, %v4141
      %v4150 = vpack.c.bf16 %v4142, %v4142
      %v4151 = vpack.c.bf16 %v4143, %v4143
      %v4152 = vpack.c.bf16 %v4144, %v4144
      %v4153 = vpack.c.bf16 %v4145, %v4145
      %v4154 = vpack.c.bf16 %v4146, %v4146
      %v4155 = vpack.c.bf16 %v4147, %v4147
      %v4156 = vpack.c.bf16 %v4148, %v4148
      %v4157 = vpack.c.bf16 %v4149, %v4149
      %v4158 = vld [vmem:[#allocation9] sm:$0xff]
      %v4159 = vld [vmem:[#allocation9 + $0x8] sm:$0xff]
      %v4160 = vld [vmem:[#allocation9 + $0x10] sm:$0xff]
      %v4161 = vld [vmem:[#allocation9 + $0x18] sm:$0xff]
      %v4162 = vld [vmem:[#allocation9 + $0x20] sm:$0xff]
      %v4163 = vld [vmem:[#allocation9 + $0x28] sm:$0xff]
      %v4164 = vld [vmem:[#allocation9 + $0x30] sm:$0xff]
      %v4165 = vld [vmem:[#allocation9 + $0x38] sm:$0xff]
      %v4166 = vld [vmem:[#allocation9 + $0x40] sm:$0xff]
      %v4167 = vld [vmem:[#allocation9 + $0x48] sm:$0xff]
      %v4168 = vld [vmem:[#allocation9 + $0x50] sm:$0xff]
      %v4169 = vld [vmem:[#allocation9 + $0x58] sm:$0xff]
      %v4170 = vld [vmem:[#allocation9 + $0x60] sm:$0xff]
      %v4171 = vld [vmem:[#allocation9 + $0x68] sm:$0xff]
      %v4172 = vld [vmem:[#allocation9 + $0x70] sm:$0xff]
      %v4173 = vld [vmem:[#allocation9 + $0x78] sm:$0xff]
      %v4174 = vld [vmem:[#allocation9 + $0x80] sm:$0xff]
      %v4175 = vld [vmem:[#allocation9 + $0x88] sm:$0xff]
      %v4176 = vld [vmem:[#allocation9 + $0x90] sm:$0xff]
      %v4177 = vld [vmem:[#allocation9 + $0x98] sm:$0xff]
      %v4178 = vld [vmem:[#allocation9 + $0xa0] sm:$0xff]
      %v4179 = vld [vmem:[#allocation9 + $0xa8] sm:$0xff]
      %v4180 = vld [vmem:[#allocation9 + $0xb0] sm:$0xff]
      %v4181 = vld [vmem:[#allocation9 + $0xb8] sm:$0xff]
      %v4182 = vld [vmem:[#allocation9 + $0xc0] sm:$0xff]
      %v4183 = vld [vmem:[#allocation9 + $0xc8] sm:$0xff]
      %v4184 = vld [vmem:[#allocation9 + $0xd0] sm:$0xff]
      %v4185 = vld [vmem:[#allocation9 + $0xd8] sm:$0xff]
      %v4186 = vld [vmem:[#allocation9 + $0xe0] sm:$0xff]
      %v4187 = vld [vmem:[#allocation9 + $0xe8] sm:$0xff]
      %v4188 = vld [vmem:[#allocation9 + $0xf0] sm:$0xff]
      %v4189 = vld [vmem:[#allocation9 + $0xf8] sm:$0xff]
      %v4190 = vld [vmem:[#allocation9 + $0x100] sm:$0xff]
      %v4191 = vld [vmem:[#allocation9 + $0x108] sm:$0xff]
      %v4192 = vld [vmem:[#allocation9 + $0x110] sm:$0xff]
      %v4193 = vld [vmem:[#allocation9 + $0x118] sm:$0xff]
      %v4194 = vld [vmem:[#allocation9 + $0x120] sm:$0xff]
      %v4195 = vld [vmem:[#allocation9 + $0x128] sm:$0xff]
      %v4196 = vld [vmem:[#allocation9 + $0x130] sm:$0xff]
      %v4197 = vld [vmem:[#allocation9 + $0x138] sm:$0xff]
      %v4198 = vld [vmem:[#allocation9 + $0x140] sm:$0xff]
      %v4199 = vld [vmem:[#allocation9 + $0x148] sm:$0xff]
      %v4200 = vld [vmem:[#allocation9 + $0x150] sm:$0xff]
      %v4201 = vld [vmem:[#allocation9 + $0x158] sm:$0xff]
      %v4202 = vld [vmem:[#allocation9 + $0x160] sm:$0xff]
      %v4203 = vld [vmem:[#allocation9 + $0x168] sm:$0xff]
      %v4204 = vld [vmem:[#allocation9 + $0x170] sm:$0xff]
      %v4205 = vld [vmem:[#allocation9 + $0x178] sm:$0xff]
      %v4206 = vld [vmem:[#allocation9 + $0x180] sm:$0xff]
      %v4207 = vld [vmem:[#allocation9 + $0x188] sm:$0xff]
      %v4208 = vld [vmem:[#allocation9 + $0x190] sm:$0xff]
      %v4209 = vld [vmem:[#allocation9 + $0x198] sm:$0xff]
      %v4210 = vld [vmem:[#allocation9 + $0x1a0] sm:$0xff]
      %v4211 = vld [vmem:[#allocation9 + $0x1a8] sm:$0xff]
      %v4212 = vld [vmem:[#allocation9 + $0x1b0] sm:$0xff]
      %v4213 = vld [vmem:[#allocation9 + $0x1b8] sm:$0xff]
      %v4214 = vld [vmem:[#allocation9 + $0x1c0] sm:$0xff]
      %v4215 = vld [vmem:[#allocation9 + $0x1c8] sm:$0xff]
      %v4216 = vld [vmem:[#allocation9 + $0x1d0] sm:$0xff]
      %v4217 = vld [vmem:[#allocation9 + $0x1d8] sm:$0xff]
      %v4218 = vld [vmem:[#allocation9 + $0x1e0] sm:$0xff]
      %v4219 = vld [vmem:[#allocation9 + $0x1e8] sm:$0xff]
      %v4220 = vld [vmem:[#allocation9 + $0x1f0] sm:$0xff]
      %v4221 = vld [vmem:[#allocation9 + $0x1f8] sm:$0xff]
      %v4222 = vld [vmem:[#allocation9 + $0x200] sm:$0xff]
      %v4223 = vld [vmem:[#allocation9 + $0x208] sm:$0xff]
      %v4224 = vld [vmem:[#allocation9 + $0x210] sm:$0xff]
      %v4225 = vld [vmem:[#allocation9 + $0x218] sm:$0xff]
      %v4226 = vld [vmem:[#allocation9 + $0x220] sm:$0xff]
      %v4227 = vld [vmem:[#allocation9 + $0x228] sm:$0xff]
      %v4228 = vld [vmem:[#allocation9 + $0x230] sm:$0xff]
      %v4229 = vld [vmem:[#allocation9 + $0x238] sm:$0xff]
      %v4230 = vld [vmem:[#allocation9 + $0x240] sm:$0xff]
      %v4231 = vld [vmem:[#allocation9 + $0x248] sm:$0xff]
      %v4232 = vld [vmem:[#allocation9 + $0x250] sm:$0xff]
      %v4233 = vld [vmem:[#allocation9 + $0x258] sm:$0xff]
      %v4234 = vld [vmem:[#allocation9 + $0x260] sm:$0xff]
      %v4235 = vld [vmem:[#allocation9 + $0x268] sm:$0xff]
      %v4236 = vld [vmem:[#allocation9 + $0x270] sm:$0xff]
      %v4237 = vld [vmem:[#allocation9 + $0x278] sm:$0xff]
      %v4238 = vld [vmem:[#allocation9 + $0x280] sm:$0xff]
      %v4239 = vld [vmem:[#allocation9 + $0x288] sm:$0xff]
      %v4240 = vld [vmem:[#allocation9 + $0x290] sm:$0xff]
      %v4241 = vld [vmem:[#allocation9 + $0x298] sm:$0xff]
      %v4242 = vld [vmem:[#allocation9 + $0x2a0] sm:$0xff]
      %v4243 = vld [vmem:[#allocation9 + $0x2a8] sm:$0xff]
      %v4244 = vld [vmem:[#allocation9 + $0x2b0] sm:$0xff]
      %v4245 = vld [vmem:[#allocation9 + $0x2b8] sm:$0xff]
      %v4246 = vld [vmem:[#allocation9 + $0x2c0] sm:$0xff]
      %v4247 = vld [vmem:[#allocation9 + $0x2c8] sm:$0xff]
      %v4248 = vld [vmem:[#allocation9 + $0x2d0] sm:$0xff]
      %v4249 = vld [vmem:[#allocation9 + $0x2d8] sm:$0xff]
      %v4250 = vld [vmem:[#allocation9 + $0x2e0] sm:$0xff]
      %v4251 = vld [vmem:[#allocation9 + $0x2e8] sm:$0xff]
      %v4252 = vld [vmem:[#allocation9 + $0x2f0] sm:$0xff]
      %v4253 = vld [vmem:[#allocation9 + $0x2f8] sm:$0xff]
      %v4254 = vld [vmem:[#allocation9 + $0x300] sm:$0xff]
      %v4255 = vld [vmem:[#allocation9 + $0x308] sm:$0xff]
      %v4256 = vld [vmem:[#allocation9 + $0x310] sm:$0xff]
      %v4257 = vld [vmem:[#allocation9 + $0x318] sm:$0xff]
      %v4258 = vld [vmem:[#allocation9 + $0x320] sm:$0xff]
      %v4259 = vld [vmem:[#allocation9 + $0x328] sm:$0xff]
      %v4260 = vld [vmem:[#allocation9 + $0x330] sm:$0xff]
      %v4261 = vld [vmem:[#allocation9 + $0x338] sm:$0xff]
      %v4262 = vld [vmem:[#allocation9 + $0x340] sm:$0xff]
      %v4263 = vld [vmem:[#allocation9 + $0x348] sm:$0xff]
      %v4264 = vld [vmem:[#allocation9 + $0x350] sm:$0xff]
      %v4265 = vld [vmem:[#allocation9 + $0x358] sm:$0xff]
      %v4266 = vld [vmem:[#allocation9 + $0x360] sm:$0xff]
      %v4267 = vld [vmem:[#allocation9 + $0x368] sm:$0xff]
      %v4268 = vld [vmem:[#allocation9 + $0x370] sm:$0xff]
      %v4269 = vld [vmem:[#allocation9 + $0x378] sm:$0xff]
      %v4270 = vld [vmem:[#allocation9 + $0x380] sm:$0xff]
      %v4271 = vld [vmem:[#allocation9 + $0x388] sm:$0xff]
      %v4272 = vld [vmem:[#allocation9 + $0x390] sm:$0xff]
      %v4273 = vld [vmem:[#allocation9 + $0x398] sm:$0xff]
      %v4274 = vld [vmem:[#allocation9 + $0x3a0] sm:$0xff]
      %v4275 = vld [vmem:[#allocation9 + $0x3a8] sm:$0xff]
      %v4276 = vld [vmem:[#allocation9 + $0x3b0] sm:$0xff]
      %v4277 = vld [vmem:[#allocation9 + $0x3b8] sm:$0xff]
      %v4278 = vld [vmem:[#allocation9 + $0x3c0] sm:$0xff]
      %v4279 = vld [vmem:[#allocation9 + $0x3c8] sm:$0xff]
      %v4280 = vld [vmem:[#allocation9 + $0x3d0] sm:$0xff]
      %v4281 = vld [vmem:[#allocation9 + $0x3d8] sm:$0xff]
      %v4282 = vld [vmem:[#allocation9 + $0x3e0] sm:$0xff]
      %v4283 = vld [vmem:[#allocation9 + $0x3e8] sm:$0xff]
      %v4284 = vld [vmem:[#allocation9 + $0x3f0] sm:$0xff]
      %v4285 = vld [vmem:[#allocation9 + $0x3f8] sm:$0xff]
      %v4286 = vld [vmem:[#allocation9 + $0x400] sm:$0xff]
      %v4287 = vld [vmem:[#allocation9 + $0x408] sm:$0xff]
      %v4288 = vld [vmem:[#allocation9 + $0x410] sm:$0xff]
      %v4289 = vld [vmem:[#allocation9 + $0x418] sm:$0xff]
      %v4290 = vld [vmem:[#allocation9 + $0x420] sm:$0xff]
      %v4291 = vld [vmem:[#allocation9 + $0x428] sm:$0xff]
      %v4292 = vld [vmem:[#allocation9 + $0x430] sm:$0xff]
      %v4293 = vld [vmem:[#allocation9 + $0x438] sm:$0xff]
      %v4294 = vld [vmem:[#allocation9 + $0x440] sm:$0xff]
      %v4295 = vld [vmem:[#allocation9 + $0x448] sm:$0xff]
      %v4296 = vld [vmem:[#allocation9 + $0x450] sm:$0xff]
      %v4297 = vld [vmem:[#allocation9 + $0x458] sm:$0xff]
      %v4298 = vld [vmem:[#allocation9 + $0x460] sm:$0xff]
      %v4299 = vld [vmem:[#allocation9 + $0x468] sm:$0xff]
      %v4300 = vld [vmem:[#allocation9 + $0x470] sm:$0xff]
      %v4301 = vld [vmem:[#allocation9 + $0x478] sm:$0xff]
      %v4302 = vld [vmem:[#allocation9 + $0x480] sm:$0xff]
      %v4303 = vld [vmem:[#allocation9 + $0x488] sm:$0xff]
      %v4304 = vld [vmem:[#allocation9 + $0x490] sm:$0xff]
      %v4305 = vld [vmem:[#allocation9 + $0x498] sm:$0xff]
      %v4306 = vld [vmem:[#allocation9 + $0x4a0] sm:$0xff]
      %v4307 = vld [vmem:[#allocation9 + $0x4a8] sm:$0xff]
      %v4308 = vld [vmem:[#allocation9 + $0x4b0] sm:$0xff]
      %v4309 = vld [vmem:[#allocation9 + $0x4b8] sm:$0xff]
      %v4310 = vld [vmem:[#allocation9 + $0x4c0] sm:$0xff]
      %v4311 = vld [vmem:[#allocation9 + $0x4c8] sm:$0xff]
      %v4312 = vld [vmem:[#allocation9 + $0x4d0] sm:$0xff]
      %v4313 = vld [vmem:[#allocation9 + $0x4d8] sm:$0xff]
      %v4314 = vld [vmem:[#allocation9 + $0x4e0] sm:$0xff]
      %v4315 = vld [vmem:[#allocation9 + $0x4e8] sm:$0xff]
      %v4316 = vld [vmem:[#allocation9 + $0x4f0] sm:$0xff]
      %v4317 = vld [vmem:[#allocation9 + $0x4f8] sm:$0xff]
      %v4318 = vld [vmem:[#allocation9 + $0x500] sm:$0xff]
      %v4319 = vld [vmem:[#allocation9 + $0x508] sm:$0xff]
      %v4320 = vld [vmem:[#allocation9 + $0x510] sm:$0xff]
      %v4321 = vld [vmem:[#allocation9 + $0x518] sm:$0xff]
      %v4322 = vld [vmem:[#allocation9 + $0x520] sm:$0xff]
      %v4323 = vld [vmem:[#allocation9 + $0x528] sm:$0xff]
      %v4324 = vld [vmem:[#allocation9 + $0x530] sm:$0xff]
      %v4325 = vld [vmem:[#allocation9 + $0x538] sm:$0xff]
      %v4326 = vld [vmem:[#allocation9 + $0x540] sm:$0xff]
      %v4327 = vld [vmem:[#allocation9 + $0x548] sm:$0xff]
      %v4328 = vld [vmem:[#allocation9 + $0x550] sm:$0xff]
      %v4329 = vld [vmem:[#allocation9 + $0x558] sm:$0xff]
      %v4330 = vld [vmem:[#allocation9 + $0x560] sm:$0xff]
      %v4331 = vld [vmem:[#allocation9 + $0x568] sm:$0xff]
      %v4332 = vld [vmem:[#allocation9 + $0x570] sm:$0xff]
      %v4333 = vld [vmem:[#allocation9 + $0x578] sm:$0xff]
      %v4334 = vld [vmem:[#allocation9 + $0x580] sm:$0xff]
      %v4335 = vld [vmem:[#allocation9 + $0x588] sm:$0xff]
      %v4336 = vld [vmem:[#allocation9 + $0x590] sm:$0xff]
      %v4337 = vld [vmem:[#allocation9 + $0x598] sm:$0xff]
      %v4338 = vld [vmem:[#allocation9 + $0x5a0] sm:$0xff]
      %v4339 = vld [vmem:[#allocation9 + $0x5a8] sm:$0xff]
      %v4340 = vld [vmem:[#allocation9 + $0x5b0] sm:$0xff]
      %v4341 = vld [vmem:[#allocation9 + $0x5b8] sm:$0xff]
      %v4342 = vld [vmem:[#allocation9 + $0x5c0] sm:$0xff]
      %v4343 = vld [vmem:[#allocation9 + $0x5c8] sm:$0xff]
      %v4344 = vld [vmem:[#allocation9 + $0x5d0] sm:$0xff]
      %v4345 = vld [vmem:[#allocation9 + $0x5d8] sm:$0xff]
      %v4346 = vld [vmem:[#allocation9 + $0x5e0] sm:$0xff]
      %v4347 = vld [vmem:[#allocation9 + $0x5e8] sm:$0xff]
      %v4348 = vld [vmem:[#allocation9 + $0x5f0] sm:$0xff]
      %v4349 = vld [vmem:[#allocation9 + $0x5f8] sm:$0xff]
      %v4350 = vld [vmem:[#allocation9 + $0x600] sm:$0xff]
      %v4351 = vld [vmem:[#allocation9 + $0x608] sm:$0xff]
      %v4352 = vld [vmem:[#allocation9 + $0x610] sm:$0xff]
      %v4353 = vld [vmem:[#allocation9 + $0x618] sm:$0xff]
      %v4354 = vld [vmem:[#allocation9 + $0x620] sm:$0xff]
      %v4355 = vld [vmem:[#allocation9 + $0x628] sm:$0xff]
      %v4356 = vld [vmem:[#allocation9 + $0x630] sm:$0xff]
      %v4357 = vld [vmem:[#allocation9 + $0x638] sm:$0xff]
      %v4358 = vld [vmem:[#allocation9 + $0x640] sm:$0xff]
      %v4359 = vld [vmem:[#allocation9 + $0x648] sm:$0xff]
      %v4360 = vld [vmem:[#allocation9 + $0x650] sm:$0xff]
      %v4361 = vld [vmem:[#allocation9 + $0x658] sm:$0xff]
      %v4362 = vld [vmem:[#allocation9 + $0x660] sm:$0xff]
      %v4363 = vld [vmem:[#allocation9 + $0x668] sm:$0xff]
      %v4364 = vld [vmem:[#allocation9 + $0x670] sm:$0xff]
      %v4365 = vld [vmem:[#allocation9 + $0x678] sm:$0xff]
      %v4366 = vld [vmem:[#allocation9 + $0x680] sm:$0xff]
      %v4367 = vld [vmem:[#allocation9 + $0x688] sm:$0xff]
      %v4368 = vld [vmem:[#allocation9 + $0x690] sm:$0xff]
      %v4369 = vld [vmem:[#allocation9 + $0x698] sm:$0xff]
      %v4370 = vld [vmem:[#allocation9 + $0x6a0] sm:$0xff]
      %v4371 = vld [vmem:[#allocation9 + $0x6a8] sm:$0xff]
      %v4372 = vld [vmem:[#allocation9 + $0x6b0] sm:$0xff]
      %v4373 = vld [vmem:[#allocation9 + $0x6b8] sm:$0xff]
      %v4374 = vld [vmem:[#allocation9 + $0x6c0] sm:$0xff]
      %v4375 = vld [vmem:[#allocation9 + $0x6c8] sm:$0xff]
      %v4376 = vld [vmem:[#allocation9 + $0x6d0] sm:$0xff]
      %v4377 = vld [vmem:[#allocation9 + $0x6d8] sm:$0xff]
      %v4378 = vld [vmem:[#allocation9 + $0x6e0] sm:$0xff]
      %v4379 = vld [vmem:[#allocation9 + $0x6e8] sm:$0xff]
      %v4380 = vld [vmem:[#allocation9 + $0x6f0] sm:$0xff]
      %v4381 = vld [vmem:[#allocation9 + $0x6f8] sm:$0xff]
      %v4382 = vld [vmem:[#allocation9 + $0x700] sm:$0xff]
      %v4383 = vld [vmem:[#allocation9 + $0x708] sm:$0xff]
      %v4384 = vld [vmem:[#allocation9 + $0x710] sm:$0xff]
      %v4385 = vld [vmem:[#allocation9 + $0x718] sm:$0xff]
      %v4386 = vld [vmem:[#allocation9 + $0x720] sm:$0xff]
      %v4387 = vld [vmem:[#allocation9 + $0x728] sm:$0xff]
      %v4388 = vld [vmem:[#allocation9 + $0x730] sm:$0xff]
      %v4389 = vld [vmem:[#allocation9 + $0x738] sm:$0xff]
      %v4390 = vld [vmem:[#allocation9 + $0x740] sm:$0xff]
      %v4391 = vld [vmem:[#allocation9 + $0x748] sm:$0xff]
      %v4392 = vld [vmem:[#allocation9 + $0x750] sm:$0xff]
      %v4393 = vld [vmem:[#allocation9 + $0x758] sm:$0xff]
      %v4394 = vld [vmem:[#allocation9 + $0x760] sm:$0xff]
      %v4395 = vld [vmem:[#allocation9 + $0x768] sm:$0xff]
      %v4396 = vld [vmem:[#allocation9 + $0x770] sm:$0xff]
      %v4397 = vld [vmem:[#allocation9 + $0x778] sm:$0xff]
      %v4398 = vld [vmem:[#allocation9 + $0x780] sm:$0xff]
      %v4399 = vld [vmem:[#allocation9 + $0x788] sm:$0xff]
      %v4400 = vld [vmem:[#allocation9 + $0x790] sm:$0xff]
      %v4401 = vld [vmem:[#allocation9 + $0x798] sm:$0xff]
      %v4402 = vld [vmem:[#allocation9 + $0x7a0] sm:$0xff]
      %v4403 = vld [vmem:[#allocation9 + $0x7a8] sm:$0xff]
      %v4404 = vld [vmem:[#allocation9 + $0x7b0] sm:$0xff]
      %v4405 = vld [vmem:[#allocation9 + $0x7b8] sm:$0xff]
      %v4406 = vld [vmem:[#allocation9 + $0x7c0] sm:$0xff]
      %v4407 = vld [vmem:[#allocation9 + $0x7c8] sm:$0xff]
      %v4408 = vld [vmem:[#allocation9 + $0x7d0] sm:$0xff]
      %v4409 = vld [vmem:[#allocation9 + $0x7d8] sm:$0xff]
      %v4410 = vld [vmem:[#allocation9 + $0x7e0] sm:$0xff]
      %v4411 = vld [vmem:[#allocation9 + $0x7e8] sm:$0xff]
      %v4412 = vld [vmem:[#allocation9 + $0x7f0] sm:$0xff]
      %v4413 = vld [vmem:[#allocation9 + $0x7f8] sm:$0xff]
      %v4414 = vld [vmem:[#allocation11] sm:$0xf]
      %v4416 = vlaneseq
      %v4417 = vshrl.u32 %v4416, 7
      %v4418 = vsub.s32 0, %v4417
      %v4419 = vrot.slane %v4414, %v4418
      %v4420 = vlaneseq
      %v4421 = vshrl.u32 %v4420, 7
      %v4422 = vsub.s32 1, %v4421
      %v4423 = vrot.slane %v4414, %v4422
      %v4424 = vlaneseq
      %v4425 = vshrl.u32 %v4424, 7
      %v4426 = vsub.s32 2, %v4425
      %v4427 = vrot.slane %v4414, %v4426
      %v4428 = vlaneseq
      %v4429 = vshrl.u32 %v4428, 7
      %v4430 = vsub.s32 3, %v4429
      %v4431 = vrot.slane %v4414, %v4430
      %v4692 = vunpack.c.l.b16 %v4158
      %v4693 = vunpack.c.h.b16 %v4158
      %v4694 = vunpack.c.l.b16 %v4159
      %v4695 = vunpack.c.h.b16 %v4159
      %v4696 = vunpack.c.l.b16 %v4160
      %v4697 = vunpack.c.h.b16 %v4160
      %v4698 = vunpack.c.l.b16 %v4161
      %v4699 = vunpack.c.h.b16 %v4161
      %v4700 = vunpack.c.l.b16 %v4162
      %v4701 = vunpack.c.h.b16 %v4162
      %v4702 = vunpack.c.l.b16 %v4163
      %v4703 = vunpack.c.h.b16 %v4163
      %v4704 = vunpack.c.l.b16 %v4164
      %v4705 = vunpack.c.h.b16 %v4164
      %v4706 = vunpack.c.l.b16 %v4165
      %v4707 = vunpack.c.h.b16 %v4165
      %v4708 = vunpack.c.l.b16 %v4166
      %v4709 = vunpack.c.h.b16 %v4166
      %v4710 = vunpack.c.l.b16 %v4167
      %v4711 = vunpack.c.h.b16 %v4167
      %v4712 = vunpack.c.l.b16 %v4168
      %v4713 = vunpack.c.h.b16 %v4168
      %v4714 = vunpack.c.l.b16 %v4169
      %v4715 = vunpack.c.h.b16 %v4169
      %v4716 = vunpack.c.l.b16 %v4170
      %v4717 = vunpack.c.h.b16 %v4170
      %v4718 = vunpack.c.l.b16 %v4171
      %v4719 = vunpack.c.h.b16 %v4171
      %v4720 = vunpack.c.l.b16 %v4172
      %v4721 = vunpack.c.h.b16 %v4172
      %v4722 = vunpack.c.l.b16 %v4173
      %v4723 = vunpack.c.h.b16 %v4173
      %v4724 = vunpack.c.l.b16 %v4174
      %v4725 = vunpack.c.h.b16 %v4174
      %v4726 = vunpack.c.l.b16 %v4175
      %v4727 = vunpack.c.h.b16 %v4175
      %v4728 = vunpack.c.l.b16 %v4176
      %v4729 = vunpack.c.h.b16 %v4176
      %v4730 = vunpack.c.l.b16 %v4177
      %v4731 = vunpack.c.h.b16 %v4177
      %v4732 = vunpack.c.l.b16 %v4178
      %v4733 = vunpack.c.h.b16 %v4178
      %v4734 = vunpack.c.l.b16 %v4179
      %v4735 = vunpack.c.h.b16 %v4179
      %v4736 = vunpack.c.l.b16 %v4180
      %v4737 = vunpack.c.h.b16 %v4180
      %v4738 = vunpack.c.l.b16 %v4181
      %v4739 = vunpack.c.h.b16 %v4181
      %v4740 = vunpack.c.l.b16 %v4182
      %v4741 = vunpack.c.h.b16 %v4182
      %v4742 = vunpack.c.l.b16 %v4183
      %v4743 = vunpack.c.h.b16 %v4183
      %v4744 = vunpack.c.l.b16 %v4184
      %v4745 = vunpack.c.h.b16 %v4184
      %v4746 = vunpack.c.l.b16 %v4185
      %v4747 = vunpack.c.h.b16 %v4185
      %v4748 = vunpack.c.l.b16 %v4186
      %v4749 = vunpack.c.h.b16 %v4186
      %v4750 = vunpack.c.l.b16 %v4187
      %v4751 = vunpack.c.h.b16 %v4187
      %v4752 = vunpack.c.l.b16 %v4188
      %v4753 = vunpack.c.h.b16 %v4188
      %v4754 = vunpack.c.l.b16 %v4189
      %v4755 = vunpack.c.h.b16 %v4189
      %v4756 = vunpack.c.l.b16 %v4190
      %v4757 = vunpack.c.h.b16 %v4190
      %v4758 = vunpack.c.l.b16 %v4191
      %v4759 = vunpack.c.h.b16 %v4191
      %v4760 = vunpack.c.l.b16 %v4192
      %v4761 = vunpack.c.h.b16 %v4192
      %v4762 = vunpack.c.l.b16 %v4193
      %v4763 = vunpack.c.h.b16 %v4193
      %v4764 = vunpack.c.l.b16 %v4194
      %v4765 = vunpack.c.h.b16 %v4194
      %v4766 = vunpack.c.l.b16 %v4195
      %v4767 = vunpack.c.h.b16 %v4195
      %v4768 = vunpack.c.l.b16 %v4196
      %v4769 = vunpack.c.h.b16 %v4196
      %v4770 = vunpack.c.l.b16 %v4197
      %v4771 = vunpack.c.h.b16 %v4197
      %v4772 = vunpack.c.l.b16 %v4198
      %v4773 = vunpack.c.h.b16 %v4198
      %v4774 = vunpack.c.l.b16 %v4199
      %v4775 = vunpack.c.h.b16 %v4199
      %v4776 = vunpack.c.l.b16 %v4200
      %v4777 = vunpack.c.h.b16 %v4200
      %v4778 = vunpack.c.l.b16 %v4201
      %v4779 = vunpack.c.h.b16 %v4201
      %v4780 = vunpack.c.l.b16 %v4202
      %v4781 = vunpack.c.h.b16 %v4202
      %v4782 = vunpack.c.l.b16 %v4203
      %v4783 = vunpack.c.h.b16 %v4203
      %v4784 = vunpack.c.l.b16 %v4204
      %v4785 = vunpack.c.h.b16 %v4204
      %v4786 = vunpack.c.l.b16 %v4205
      %v4787 = vunpack.c.h.b16 %v4205
      %v4788 = vunpack.c.l.b16 %v4206
      %v4789 = vunpack.c.h.b16 %v4206
      %v4790 = vunpack.c.l.b16 %v4207
      %v4791 = vunpack.c.h.b16 %v4207
      %v4792 = vunpack.c.l.b16 %v4208
      %v4793 = vunpack.c.h.b16 %v4208
      %v4794 = vunpack.c.l.b16 %v4209
      %v4795 = vunpack.c.h.b16 %v4209
      %v4796 = vunpack.c.l.b16 %v4210
      %v4797 = vunpack.c.h.b16 %v4210
      %v4798 = vunpack.c.l.b16 %v4211
      %v4799 = vunpack.c.h.b16 %v4211
      %v4800 = vunpack.c.l.b16 %v4212
      %v4801 = vunpack.c.h.b16 %v4212
      %v4802 = vunpack.c.l.b16 %v4213
      %v4803 = vunpack.c.h.b16 %v4213
      %v4804 = vunpack.c.l.b16 %v4214
      %v4805 = vunpack.c.h.b16 %v4214
      %v4806 = vunpack.c.l.b16 %v4215
      %v4807 = vunpack.c.h.b16 %v4215
      %v4808 = vunpack.c.l.b16 %v4216
      %v4809 = vunpack.c.h.b16 %v4216
      %v4810 = vunpack.c.l.b16 %v4217
      %v4811 = vunpack.c.h.b16 %v4217
      %v4812 = vunpack.c.l.b16 %v4218
      %v4813 = vunpack.c.h.b16 %v4218
      %v4814 = vunpack.c.l.b16 %v4219
      %v4815 = vunpack.c.h.b16 %v4219
      %v4816 = vunpack.c.l.b16 %v4220
      %v4817 = vunpack.c.h.b16 %v4220
      %v4818 = vunpack.c.l.b16 %v4221
      %v4819 = vunpack.c.h.b16 %v4221
      %v4820 = vunpack.c.l.b16 %v4222
      %v4821 = vunpack.c.h.b16 %v4222
      %v4822 = vunpack.c.l.b16 %v4223
      %v4823 = vunpack.c.h.b16 %v4223
      %v4824 = vunpack.c.l.b16 %v4224
      %v4825 = vunpack.c.h.b16 %v4224
      %v4826 = vunpack.c.l.b16 %v4225
      %v4827 = vunpack.c.h.b16 %v4225
      %v4828 = vunpack.c.l.b16 %v4226
      %v4829 = vunpack.c.h.b16 %v4226
      %v4830 = vunpack.c.l.b16 %v4227
      %v4831 = vunpack.c.h.b16 %v4227
      %v4832 = vunpack.c.l.b16 %v4228
      %v4833 = vunpack.c.h.b16 %v4228
      %v4834 = vunpack.c.l.b16 %v4229
      %v4835 = vunpack.c.h.b16 %v4229
      %v4836 = vunpack.c.l.b16 %v4230
      %v4837 = vunpack.c.h.b16 %v4230
      %v4838 = vunpack.c.l.b16 %v4231
      %v4839 = vunpack.c.h.b16 %v4231
      %v4840 = vunpack.c.l.b16 %v4232
      %v4841 = vunpack.c.h.b16 %v4232
      %v4842 = vunpack.c.l.b16 %v4233
      %v4843 = vunpack.c.h.b16 %v4233
      %v4844 = vunpack.c.l.b16 %v4234
      %v4845 = vunpack.c.h.b16 %v4234
      %v4846 = vunpack.c.l.b16 %v4235
      %v4847 = vunpack.c.h.b16 %v4235
      %v4848 = vunpack.c.l.b16 %v4236
      %v4849 = vunpack.c.h.b16 %v4236
      %v4850 = vunpack.c.l.b16 %v4237
      %v4851 = vunpack.c.h.b16 %v4237
      %v4852 = vunpack.c.l.b16 %v4238
      %v4853 = vunpack.c.h.b16 %v4238
      %v4854 = vunpack.c.l.b16 %v4239
      %v4855 = vunpack.c.h.b16 %v4239
      %v4856 = vunpack.c.l.b16 %v4240
      %v4857 = vunpack.c.h.b16 %v4240
      %v4858 = vunpack.c.l.b16 %v4241
      %v4859 = vunpack.c.h.b16 %v4241
      %v4860 = vunpack.c.l.b16 %v4242
      %v4861 = vunpack.c.h.b16 %v4242
      %v4862 = vunpack.c.l.b16 %v4243
      %v4863 = vunpack.c.h.b16 %v4243
      %v4864 = vunpack.c.l.b16 %v4244
      %v4865 = vunpack.c.h.b16 %v4244
      %v4866 = vunpack.c.l.b16 %v4245
      %v4867 = vunpack.c.h.b16 %v4245
      %v4868 = vunpack.c.l.b16 %v4246
      %v4869 = vunpack.c.h.b16 %v4246
      %v4870 = vunpack.c.l.b16 %v4247
      %v4871 = vunpack.c.h.b16 %v4247
      %v4872 = vunpack.c.l.b16 %v4248
      %v4873 = vunpack.c.h.b16 %v4248
      %v4874 = vunpack.c.l.b16 %v4249
      %v4875 = vunpack.c.h.b16 %v4249
      %v4876 = vunpack.c.l.b16 %v4250
      %v4877 = vunpack.c.h.b16 %v4250
      %v4878 = vunpack.c.l.b16 %v4251
      %v4879 = vunpack.c.h.b16 %v4251
      %v4880 = vunpack.c.l.b16 %v4252
      %v4881 = vunpack.c.h.b16 %v4252
      %v4882 = vunpack.c.l.b16 %v4253
      %v4883 = vunpack.c.h.b16 %v4253
      %v4884 = vunpack.c.l.b16 %v4254
      %v4885 = vunpack.c.h.b16 %v4254
      %v4886 = vunpack.c.l.b16 %v4255
      %v4887 = vunpack.c.h.b16 %v4255
      %v4888 = vunpack.c.l.b16 %v4256
      %v4889 = vunpack.c.h.b16 %v4256
      %v4890 = vunpack.c.l.b16 %v4257
      %v4891 = vunpack.c.h.b16 %v4257
      %v4892 = vunpack.c.l.b16 %v4258
      %v4893 = vunpack.c.h.b16 %v4258
      %v4894 = vunpack.c.l.b16 %v4259
      %v4895 = vunpack.c.h.b16 %v4259
      %v4896 = vunpack.c.l.b16 %v4260
      %v4897 = vunpack.c.h.b16 %v4260
      %v4898 = vunpack.c.l.b16 %v4261
      %v4899 = vunpack.c.h.b16 %v4261
      %v4900 = vunpack.c.l.b16 %v4262
      %v4901 = vunpack.c.h.b16 %v4262
      %v4902 = vunpack.c.l.b16 %v4263
      %v4903 = vunpack.c.h.b16 %v4263
      %v4904 = vunpack.c.l.b16 %v4264
      %v4905 = vunpack.c.h.b16 %v4264
      %v4906 = vunpack.c.l.b16 %v4265
      %v4907 = vunpack.c.h.b16 %v4265
      %v4908 = vunpack.c.l.b16 %v4266
      %v4909 = vunpack.c.h.b16 %v4266
      %v4910 = vunpack.c.l.b16 %v4267
      %v4911 = vunpack.c.h.b16 %v4267
      %v4912 = vunpack.c.l.b16 %v4268
      %v4913 = vunpack.c.h.b16 %v4268
      %v4914 = vunpack.c.l.b16 %v4269
      %v4915 = vunpack.c.h.b16 %v4269
      %v4916 = vunpack.c.l.b16 %v4270
      %v4917 = vunpack.c.h.b16 %v4270
      %v4918 = vunpack.c.l.b16 %v4271
      %v4919 = vunpack.c.h.b16 %v4271
      %v4920 = vunpack.c.l.b16 %v4272
      %v4921 = vunpack.c.h.b16 %v4272
      %v4922 = vunpack.c.l.b16 %v4273
      %v4923 = vunpack.c.h.b16 %v4273
      %v4924 = vunpack.c.l.b16 %v4274
      %v4925 = vunpack.c.h.b16 %v4274
      %v4926 = vunpack.c.l.b16 %v4275
      %v4927 = vunpack.c.h.b16 %v4275
      %v4928 = vunpack.c.l.b16 %v4276
      %v4929 = vunpack.c.h.b16 %v4276
      %v4930 = vunpack.c.l.b16 %v4277
      %v4931 = vunpack.c.h.b16 %v4277
      %v4932 = vunpack.c.l.b16 %v4278
      %v4933 = vunpack.c.h.b16 %v4278
      %v4934 = vunpack.c.l.b16 %v4279
      %v4935 = vunpack.c.h.b16 %v4279
      %v4936 = vunpack.c.l.b16 %v4280
      %v4937 = vunpack.c.h.b16 %v4280
      %v4938 = vunpack.c.l.b16 %v4281
      %v4939 = vunpack.c.h.b16 %v4281
      %v4940 = vunpack.c.l.b16 %v4282
      %v4941 = vunpack.c.h.b16 %v4282
      %v4942 = vunpack.c.l.b16 %v4283
      %v4943 = vunpack.c.h.b16 %v4283
      %v4944 = vunpack.c.l.b16 %v4284
      %v4945 = vunpack.c.h.b16 %v4284
      %v4946 = vunpack.c.l.b16 %v4285
      %v4947 = vunpack.c.h.b16 %v4285
      %v4948 = vunpack.c.l.b16 %v4286
      %v4949 = vunpack.c.h.b16 %v4286
      %v4950 = vunpack.c.l.b16 %v4287
      %v4951 = vunpack.c.h.b16 %v4287
      %v4952 = vunpack.c.l.b16 %v4288
      %v4953 = vunpack.c.h.b16 %v4288
      %v4954 = vunpack.c.l.b16 %v4289
      %v4955 = vunpack.c.h.b16 %v4289
      %v4956 = vunpack.c.l.b16 %v4290
      %v4957 = vunpack.c.h.b16 %v4290
      %v4958 = vunpack.c.l.b16 %v4291
      %v4959 = vunpack.c.h.b16 %v4291
      %v4960 = vunpack.c.l.b16 %v4292
      %v4961 = vunpack.c.h.b16 %v4292
      %v4962 = vunpack.c.l.b16 %v4293
      %v4963 = vunpack.c.h.b16 %v4293
      %v4964 = vunpack.c.l.b16 %v4294
      %v4965 = vunpack.c.h.b16 %v4294
      %v4966 = vunpack.c.l.b16 %v4295
      %v4967 = vunpack.c.h.b16 %v4295
      %v4968 = vunpack.c.l.b16 %v4296
      %v4969 = vunpack.c.h.b16 %v4296
      %v4970 = vunpack.c.l.b16 %v4297
      %v4971 = vunpack.c.h.b16 %v4297
      %v4972 = vunpack.c.l.b16 %v4298
      %v4973 = vunpack.c.h.b16 %v4298
      %v4974 = vunpack.c.l.b16 %v4299
      %v4975 = vunpack.c.h.b16 %v4299
      %v4976 = vunpack.c.l.b16 %v4300
      %v4977 = vunpack.c.h.b16 %v4300
      %v4978 = vunpack.c.l.b16 %v4301
      %v4979 = vunpack.c.h.b16 %v4301
      %v4980 = vunpack.c.l.b16 %v4302
      %v4981 = vunpack.c.h.b16 %v4302
      %v4982 = vunpack.c.l.b16 %v4303
      %v4983 = vunpack.c.h.b16 %v4303
      %v4984 = vunpack.c.l.b16 %v4304
      %v4985 = vunpack.c.h.b16 %v4304
      %v4986 = vunpack.c.l.b16 %v4305
      %v4987 = vunpack.c.h.b16 %v4305
      %v4988 = vunpack.c.l.b16 %v4306
      %v4989 = vunpack.c.h.b16 %v4306
      %v4990 = vunpack.c.l.b16 %v4307
      %v4991 = vunpack.c.h.b16 %v4307
      %v4992 = vunpack.c.l.b16 %v4308
      %v4993 = vunpack.c.h.b16 %v4308
      %v4994 = vunpack.c.l.b16 %v4309
      %v4995 = vunpack.c.h.b16 %v4309
      %v4996 = vunpack.c.l.b16 %v4310
      %v4997 = vunpack.c.h.b16 %v4310
      %v4998 = vunpack.c.l.b16 %v4311
      %v4999 = vunpack.c.h.b16 %v4311
      %v5000 = vunpack.c.l.b16 %v4312
      %v5001 = vunpack.c.h.b16 %v4312
      %v5002 = vunpack.c.l.b16 %v4313
      %v5003 = vunpack.c.h.b16 %v4313
      %v5004 = vunpack.c.l.b16 %v4314
      %v5005 = vunpack.c.h.b16 %v4314
      %v5006 = vunpack.c.l.b16 %v4315
      %v5007 = vunpack.c.h.b16 %v4315
      %v5008 = vunpack.c.l.b16 %v4316
      %v5009 = vunpack.c.h.b16 %v4316
      %v5010 = vunpack.c.l.b16 %v4317
      %v5011 = vunpack.c.h.b16 %v4317
      %v5012 = vunpack.c.l.b16 %v4318
      %v5013 = vunpack.c.h.b16 %v4318
      %v5014 = vunpack.c.l.b16 %v4319
      %v5015 = vunpack.c.h.b16 %v4319
      %v5016 = vunpack.c.l.b16 %v4320
      %v5017 = vunpack.c.h.b16 %v4320
      %v5018 = vunpack.c.l.b16 %v4321
      %v5019 = vunpack.c.h.b16 %v4321
      %v5020 = vunpack.c.l.b16 %v4322
      %v5021 = vunpack.c.h.b16 %v4322
      %v5022 = vunpack.c.l.b16 %v4323
      %v5023 = vunpack.c.h.b16 %v4323
      %v5024 = vunpack.c.l.b16 %v4324
      %v5025 = vunpack.c.h.b16 %v4324
      %v5026 = vunpack.c.l.b16 %v4325
      %v5027 = vunpack.c.h.b16 %v4325
      %v5028 = vunpack.c.l.b16 %v4326
      %v5029 = vunpack.c.h.b16 %v4326
      %v5030 = vunpack.c.l.b16 %v4327
      %v5031 = vunpack.c.h.b16 %v4327
      %v5032 = vunpack.c.l.b16 %v4328
      %v5033 = vunpack.c.h.b16 %v4328
      %v5034 = vunpack.c.l.b16 %v4329
      %v5035 = vunpack.c.h.b16 %v4329
      %v5036 = vunpack.c.l.b16 %v4330
      %v5037 = vunpack.c.h.b16 %v4330
      %v5038 = vunpack.c.l.b16 %v4331
      %v5039 = vunpack.c.h.b16 %v4331
      %v5040 = vunpack.c.l.b16 %v4332
      %v5041 = vunpack.c.h.b16 %v4332
      %v5042 = vunpack.c.l.b16 %v4333
      %v5043 = vunpack.c.h.b16 %v4333
      %v5044 = vunpack.c.l.b16 %v4334
      %v5045 = vunpack.c.h.b16 %v4334
      %v5046 = vunpack.c.l.b16 %v4335
      %v5047 = vunpack.c.h.b16 %v4335
      %v5048 = vunpack.c.l.b16 %v4336
      %v5049 = vunpack.c.h.b16 %v4336
      %v5050 = vunpack.c.l.b16 %v4337
      %v5051 = vunpack.c.h.b16 %v4337
      %v5052 = vunpack.c.l.b16 %v4338
      %v5053 = vunpack.c.h.b16 %v4338
      %v5054 = vunpack.c.l.b16 %v4339
      %v5055 = vunpack.c.h.b16 %v4339
      %v5056 = vunpack.c.l.b16 %v4340
      %v5057 = vunpack.c.h.b16 %v4340
      %v5058 = vunpack.c.l.b16 %v4341
      %v5059 = vunpack.c.h.b16 %v4341
      %v5060 = vunpack.c.l.b16 %v4342
      %v5061 = vunpack.c.h.b16 %v4342
      %v5062 = vunpack.c.l.b16 %v4343
      %v5063 = vunpack.c.h.b16 %v4343
      %v5064 = vunpack.c.l.b16 %v4344
      %v5065 = vunpack.c.h.b16 %v4344
      %v5066 = vunpack.c.l.b16 %v4345
      %v5067 = vunpack.c.h.b16 %v4345
      %v5068 = vunpack.c.l.b16 %v4346
      %v5069 = vunpack.c.h.b16 %v4346
      %v5070 = vunpack.c.l.b16 %v4347
      %v5071 = vunpack.c.h.b16 %v4347
      %v5072 = vunpack.c.l.b16 %v4348
      %v5073 = vunpack.c.h.b16 %v4348
      %v5074 = vunpack.c.l.b16 %v4349
      %v5075 = vunpack.c.h.b16 %v4349
      %v5076 = vunpack.c.l.b16 %v4350
      %v5077 = vunpack.c.h.b16 %v4350
      %v5078 = vunpack.c.l.b16 %v4351
      %v5079 = vunpack.c.h.b16 %v4351
      %v5080 = vunpack.c.l.b16 %v4352
      %v5081 = vunpack.c.h.b16 %v4352
      %v5082 = vunpack.c.l.b16 %v4353
      %v5083 = vunpack.c.h.b16 %v4353
      %v5084 = vunpack.c.l.b16 %v4354
      %v5085 = vunpack.c.h.b16 %v4354
      %v5086 = vunpack.c.l.b16 %v4355
      %v5087 = vunpack.c.h.b16 %v4355
      %v5088 = vunpack.c.l.b16 %v4356
      %v5089 = vunpack.c.h.b16 %v4356
      %v5090 = vunpack.c.l.b16 %v4357
      %v5091 = vunpack.c.h.b16 %v4357
      %v5092 = vunpack.c.l.b16 %v4358
      %v5093 = vunpack.c.h.b16 %v4358
      %v5094 = vunpack.c.l.b16 %v4359
      %v5095 = vunpack.c.h.b16 %v4359
      %v5096 = vunpack.c.l.b16 %v4360
      %v5097 = vunpack.c.h.b16 %v4360
      %v5098 = vunpack.c.l.b16 %v4361
      %v5099 = vunpack.c.h.b16 %v4361
      %v5100 = vunpack.c.l.b16 %v4362
      %v5101 = vunpack.c.h.b16 %v4362
      %v5102 = vunpack.c.l.b16 %v4363
      %v5103 = vunpack.c.h.b16 %v4363
      %v5104 = vunpack.c.l.b16 %v4364
      %v5105 = vunpack.c.h.b16 %v4364
      %v5106 = vunpack.c.l.b16 %v4365
      %v5107 = vunpack.c.h.b16 %v4365
      %v5108 = vunpack.c.l.b16 %v4366
      %v5109 = vunpack.c.h.b16 %v4366
      %v5110 = vunpack.c.l.b16 %v4367
      %v5111 = vunpack.c.h.b16 %v4367
      %v5112 = vunpack.c.l.b16 %v4368
      %v5113 = vunpack.c.h.b16 %v4368
      %v5114 = vunpack.c.l.b16 %v4369
      %v5115 = vunpack.c.h.b16 %v4369
      %v5116 = vunpack.c.l.b16 %v4370
      %v5117 = vunpack.c.h.b16 %v4370
      %v5118 = vunpack.c.l.b16 %v4371
      %v5119 = vunpack.c.h.b16 %v4371
      %v5120 = vunpack.c.l.b16 %v4372
      %v5121 = vunpack.c.h.b16 %v4372
      %v5122 = vunpack.c.l.b16 %v4373
      %v5123 = vunpack.c.h.b16 %v4373
      %v5124 = vunpack.c.l.b16 %v4374
      %v5125 = vunpack.c.h.b16 %v4374
      %v5126 = vunpack.c.l.b16 %v4375
      %v5127 = vunpack.c.h.b16 %v4375
      %v5128 = vunpack.c.l.b16 %v4376
      %v5129 = vunpack.c.h.b16 %v4376
      %v5130 = vunpack.c.l.b16 %v4377
      %v5131 = vunpack.c.h.b16 %v4377
      %v5132 = vunpack.c.l.b16 %v4378
      %v5133 = vunpack.c.h.b16 %v4378
      %v5134 = vunpack.c.l.b16 %v4379
      %v5135 = vunpack.c.h.b16 %v4379
      %v5136 = vunpack.c.l.b16 %v4380
      %v5137 = vunpack.c.h.b16 %v4380
      %v5138 = vunpack.c.l.b16 %v4381
      %v5139 = vunpack.c.h.b16 %v4381
      %v5140 = vunpack.c.l.b16 %v4382
      %v5141 = vunpack.c.h.b16 %v4382
      %v5142 = vunpack.c.l.b16 %v4383
      %v5143 = vunpack.c.h.b16 %v4383
      %v5144 = vunpack.c.l.b16 %v4384
      %v5145 = vunpack.c.h.b16 %v4384
      %v5146 = vunpack.c.l.b16 %v4385
      %v5147 = vunpack.c.h.b16 %v4385
      %v5148 = vunpack.c.l.b16 %v4386
      %v5149 = vunpack.c.h.b16 %v4386
      %v5150 = vunpack.c.l.b16 %v4387
      %v5151 = vunpack.c.h.b16 %v4387
      %v5152 = vunpack.c.l.b16 %v4388
      %v5153 = vunpack.c.h.b16 %v4388
      %v5154 = vunpack.c.l.b16 %v4389
      %v5155 = vunpack.c.h.b16 %v4389
      %v5156 = vunpack.c.l.b16 %v4390
      %v5157 = vunpack.c.h.b16 %v4390
      %v5158 = vunpack.c.l.b16 %v4391
      %v5159 = vunpack.c.h.b16 %v4391
      %v5160 = vunpack.c.l.b16 %v4392
      %v5161 = vunpack.c.h.b16 %v4392
      %v5162 = vunpack.c.l.b16 %v4393
      %v5163 = vunpack.c.h.b16 %v4393
      %v5164 = vunpack.c.l.b16 %v4394
      %v5165 = vunpack.c.h.b16 %v4394
      %v5166 = vunpack.c.l.b16 %v4395
      %v5167 = vunpack.c.h.b16 %v4395
      %v5168 = vunpack.c.l.b16 %v4396
      %v5169 = vunpack.c.h.b16 %v4396
      %v5170 = vunpack.c.l.b16 %v4397
      %v5171 = vunpack.c.h.b16 %v4397
      %v5172 = vunpack.c.l.b16 %v4398
      %v5173 = vunpack.c.h.b16 %v4398
      %v5174 = vunpack.c.l.b16 %v4399
      %v5175 = vunpack.c.h.b16 %v4399
      %v5176 = vunpack.c.l.b16 %v4400
      %v5177 = vunpack.c.h.b16 %v4400
      %v5178 = vunpack.c.l.b16 %v4401
      %v5179 = vunpack.c.h.b16 %v4401
      %v5180 = vunpack.c.l.b16 %v4402
      %v5181 = vunpack.c.h.b16 %v4402
      %v5182 = vunpack.c.l.b16 %v4403
      %v5183 = vunpack.c.h.b16 %v4403
      %v5184 = vunpack.c.l.b16 %v4404
      %v5185 = vunpack.c.h.b16 %v4404
      %v5186 = vunpack.c.l.b16 %v4405
      %v5187 = vunpack.c.h.b16 %v4405
      %v5188 = vunpack.c.l.b16 %v4406
      %v5189 = vunpack.c.h.b16 %v4406
      %v5190 = vunpack.c.l.b16 %v4407
      %v5191 = vunpack.c.h.b16 %v4407
      %v5192 = vunpack.c.l.b16 %v4408
      %v5193 = vunpack.c.h.b16 %v4408
      %v5194 = vunpack.c.l.b16 %v4409
      %v5195 = vunpack.c.h.b16 %v4409
      %v5196 = vunpack.c.l.b16 %v4410
      %v5197 = vunpack.c.h.b16 %v4410
      %v5198 = vunpack.c.l.b16 %v4411
      %v5199 = vunpack.c.h.b16 %v4411
      %v5200 = vunpack.c.l.b16 %v4412
      %v5201 = vunpack.c.h.b16 %v4412
      %v5202 = vunpack.c.l.b16 %v4413
      %v5203 = vunpack.c.h.b16 %v4413
      %v5204 = vpack.c.b16 %v4696, %v4692
      %v5205 = vpack.c.b16 %v4697, %v4693
      %v5206 = vpack.c.b16 %v4698, %v4694
      %v5207 = vpack.c.b16 %v4699, %v4695
      %v5208 = vpack.c.b16 %v4704, %v4700
      %v5209 = vpack.c.b16 %v4705, %v4701
      %v5210 = vpack.c.b16 %v4706, %v4702
      %v5211 = vpack.c.b16 %v4707, %v4703
      %v5212 = vpack.c.b16 %v4712, %v4708
      %v5213 = vpack.c.b16 %v4713, %v4709
      %v5214 = vpack.c.b16 %v4714, %v4710
      %v5215 = vpack.c.b16 %v4715, %v4711
      %v5216 = vpack.c.b16 %v4720, %v4716
      %v5217 = vpack.c.b16 %v4721, %v4717
      %v5218 = vpack.c.b16 %v4722, %v4718
      %v5219 = vpack.c.b16 %v4723, %v4719
      %v5220 = vpack.c.b16 %v4728, %v4724
      %v5221 = vpack.c.b16 %v4729, %v4725
      %v5222 = vpack.c.b16 %v4730, %v4726
      %v5223 = vpack.c.b16 %v4731, %v4727
      %v5224 = vpack.c.b16 %v4736, %v4732
      %v5225 = vpack.c.b16 %v4737, %v4733
      %v5226 = vpack.c.b16 %v4738, %v4734
      %v5227 = vpack.c.b16 %v4739, %v4735
      %v5228 = vpack.c.b16 %v4744, %v4740
      %v5229 = vpack.c.b16 %v4745, %v4741
      %v5230 = vpack.c.b16 %v4746, %v4742
      %v5231 = vpack.c.b16 %v4747, %v4743
      %v5232 = vpack.c.b16 %v4752, %v4748
      %v5233 = vpack.c.b16 %v4753, %v4749
      %v5234 = vpack.c.b16 %v4754, %v4750
      %v5235 = vpack.c.b16 %v4755, %v4751
      %v5236 = vpack.c.b16 %v4760, %v4756
      %v5237 = vpack.c.b16 %v4761, %v4757
      %v5238 = vpack.c.b16 %v4762, %v4758
      %v5239 = vpack.c.b16 %v4763, %v4759
      %v5240 = vpack.c.b16 %v4768, %v4764
      %v5241 = vpack.c.b16 %v4769, %v4765
      %v5242 = vpack.c.b16 %v4770, %v4766
      %v5243 = vpack.c.b16 %v4771, %v4767
      %v5244 = vpack.c.b16 %v4776, %v4772
      %v5245 = vpack.c.b16 %v4777, %v4773
      %v5246 = vpack.c.b16 %v4778, %v4774
      %v5247 = vpack.c.b16 %v4779, %v4775
      %v5248 = vpack.c.b16 %v4784, %v4780
      %v5249 = vpack.c.b16 %v4785, %v4781
      %v5250 = vpack.c.b16 %v4786, %v4782
      %v5251 = vpack.c.b16 %v4787, %v4783
      %v5252 = vpack.c.b16 %v4792, %v4788
      %v5253 = vpack.c.b16 %v4793, %v4789
      %v5254 = vpack.c.b16 %v4794, %v4790
      %v5255 = vpack.c.b16 %v4795, %v4791
      %v5256 = vpack.c.b16 %v4800, %v4796
      %v5257 = vpack.c.b16 %v4801, %v4797
      %v5258 = vpack.c.b16 %v4802, %v4798
      %v5259 = vpack.c.b16 %v4803, %v4799
      %v5260 = vpack.c.b16 %v4808, %v4804
      %v5261 = vpack.c.b16 %v4809, %v4805
      %v5262 = vpack.c.b16 %v4810, %v4806
      %v5263 = vpack.c.b16 %v4811, %v4807
      %v5264 = vpack.c.b16 %v4816, %v4812
      %v5265 = vpack.c.b16 %v4817, %v4813
      %v5266 = vpack.c.b16 %v4818, %v4814
      %v5267 = vpack.c.b16 %v4819, %v4815
      %v5268 = vpack.c.b16 %v4824, %v4820
      %v5269 = vpack.c.b16 %v4825, %v4821
      %v5270 = vpack.c.b16 %v4826, %v4822
      %v5271 = vpack.c.b16 %v4827, %v4823
      %v5272 = vpack.c.b16 %v4832, %v4828
      %v5273 = vpack.c.b16 %v4833, %v4829
      %v5274 = vpack.c.b16 %v4834, %v4830
      %v5275 = vpack.c.b16 %v4835, %v4831
      %v5276 = vpack.c.b16 %v4840, %v4836
      %v5277 = vpack.c.b16 %v4841, %v4837
      %v5278 = vpack.c.b16 %v4842, %v4838
      %v5279 = vpack.c.b16 %v4843, %v4839
      %v5280 = vpack.c.b16 %v4848, %v4844
      %v5281 = vpack.c.b16 %v4849, %v4845
      %v5282 = vpack.c.b16 %v4850, %v4846
      %v5283 = vpack.c.b16 %v4851, %v4847
      %v5284 = vpack.c.b16 %v4856, %v4852
      %v5285 = vpack.c.b16 %v4857, %v4853
      %v5286 = vpack.c.b16 %v4858, %v4854
      %v5287 = vpack.c.b16 %v4859, %v4855
      %v5288 = vpack.c.b16 %v4864, %v4860
      %v5289 = vpack.c.b16 %v4865, %v4861
      %v5290 = vpack.c.b16 %v4866, %v4862
      %v5291 = vpack.c.b16 %v4867, %v4863
      %v5292 = vpack.c.b16 %v4872, %v4868
      %v5293 = vpack.c.b16 %v4873, %v4869
      %v5294 = vpack.c.b16 %v4874, %v4870
      %v5295 = vpack.c.b16 %v4875, %v4871
      %v5296 = vpack.c.b16 %v4880, %v4876
      %v5297 = vpack.c.b16 %v4881, %v4877
      %v5298 = vpack.c.b16 %v4882, %v4878
      %v5299 = vpack.c.b16 %v4883, %v4879
      %v5300 = vpack.c.b16 %v4888, %v4884
      %v5301 = vpack.c.b16 %v4889, %v4885
      %v5302 = vpack.c.b16 %v4890, %v4886
      %v5303 = vpack.c.b16 %v4891, %v4887
      %v5304 = vpack.c.b16 %v4896, %v4892
      %v5305 = vpack.c.b16 %v4897, %v4893
      %v5306 = vpack.c.b16 %v4898, %v4894
      %v5307 = vpack.c.b16 %v4899, %v4895
      %v5308 = vpack.c.b16 %v4904, %v4900
      %v5309 = vpack.c.b16 %v4905, %v4901
      %v5310 = vpack.c.b16 %v4906, %v4902
      %v5311 = vpack.c.b16 %v4907, %v4903
      %v5312 = vpack.c.b16 %v4912, %v4908
      %v5313 = vpack.c.b16 %v4913, %v4909
      %v5314 = vpack.c.b16 %v4914, %v4910
      %v5315 = vpack.c.b16 %v4915, %v4911
      %v5316 = vpack.c.b16 %v4920, %v4916
      %v5317 = vpack.c.b16 %v4921, %v4917
      %v5318 = vpack.c.b16 %v4922, %v4918
      %v5319 = vpack.c.b16 %v4923, %v4919
      %v5320 = vpack.c.b16 %v4928, %v4924
      %v5321 = vpack.c.b16 %v4929, %v4925
      %v5322 = vpack.c.b16 %v4930, %v4926
      %v5323 = vpack.c.b16 %v4931, %v4927
      %v5324 = vpack.c.b16 %v4936, %v4932
      %v5325 = vpack.c.b16 %v4937, %v4933
      %v5326 = vpack.c.b16 %v4938, %v4934
      %v5327 = vpack.c.b16 %v4939, %v4935
      %v5328 = vpack.c.b16 %v4944, %v4940
      %v5329 = vpack.c.b16 %v4945, %v4941
      %v5330 = vpack.c.b16 %v4946, %v4942
      %v5331 = vpack.c.b16 %v4947, %v4943
      %v5332 = vpack.c.b16 %v4952, %v4948
      %v5333 = vpack.c.b16 %v4953, %v4949
      %v5334 = vpack.c.b16 %v4954, %v4950
      %v5335 = vpack.c.b16 %v4955, %v4951
      %v5336 = vpack.c.b16 %v4960, %v4956
      %v5337 = vpack.c.b16 %v4961, %v4957
      %v5338 = vpack.c.b16 %v4962, %v4958
      %v5339 = vpack.c.b16 %v4963, %v4959
      %v5340 = vpack.c.b16 %v4968, %v4964
      %v5341 = vpack.c.b16 %v4969, %v4965
      %v5342 = vpack.c.b16 %v4970, %v4966
      %v5343 = vpack.c.b16 %v4971, %v4967
      %v5344 = vpack.c.b16 %v4976, %v4972
      %v5345 = vpack.c.b16 %v4977, %v4973
      %v5346 = vpack.c.b16 %v4978, %v4974
      %v5347 = vpack.c.b16 %v4979, %v4975
      %v5348 = vpack.c.b16 %v4984, %v4980
      %v5349 = vpack.c.b16 %v4985, %v4981
      %v5350 = vpack.c.b16 %v4986, %v4982
      %v5351 = vpack.c.b16 %v4987, %v4983
      %v5352 = vpack.c.b16 %v4992, %v4988
      %v5353 = vpack.c.b16 %v4993, %v4989
      %v5354 = vpack.c.b16 %v4994, %v4990
      %v5355 = vpack.c.b16 %v4995, %v4991
      %v5356 = vpack.c.b16 %v5000, %v4996
      %v5357 = vpack.c.b16 %v5001, %v4997
      %v5358 = vpack.c.b16 %v5002, %v4998
      %v5359 = vpack.c.b16 %v5003, %v4999
      %v5360 = vpack.c.b16 %v5008, %v5004
      %v5361 = vpack.c.b16 %v5009, %v5005
      %v5362 = vpack.c.b16 %v5010, %v5006
      %v5363 = vpack.c.b16 %v5011, %v5007
      %v5364 = vpack.c.b16 %v5016, %v5012
      %v5365 = vpack.c.b16 %v5017, %v5013
      %v5366 = vpack.c.b16 %v5018, %v5014
      %v5367 = vpack.c.b16 %v5019, %v5015
      %v5368 = vpack.c.b16 %v5024, %v5020
      %v5369 = vpack.c.b16 %v5025, %v5021
      %v5370 = vpack.c.b16 %v5026, %v5022
      %v5371 = vpack.c.b16 %v5027, %v5023
      %v5372 = vpack.c.b16 %v5032, %v5028
      %v5373 = vpack.c.b16 %v5033, %v5029
      %v5374 = vpack.c.b16 %v5034, %v5030
      %v5375 = vpack.c.b16 %v5035, %v5031
      %v5376 = vpack.c.b16 %v5040, %v5036
      %v5377 = vpack.c.b16 %v5041, %v5037
      %v5378 = vpack.c.b16 %v5042, %v5038
      %v5379 = vpack.c.b16 %v5043, %v5039
      %v5380 = vpack.c.b16 %v5048, %v5044
      %v5381 = vpack.c.b16 %v5049, %v5045
      %v5382 = vpack.c.b16 %v5050, %v5046
      %v5383 = vpack.c.b16 %v5051, %v5047
      %v5384 = vpack.c.b16 %v5056, %v5052
      %v5385 = vpack.c.b16 %v5057, %v5053
      %v5386 = vpack.c.b16 %v5058, %v5054
      %v5387 = vpack.c.b16 %v5059, %v5055
      %v5388 = vpack.c.b16 %v5064, %v5060
      %v5389 = vpack.c.b16 %v5065, %v5061
      %v5390 = vpack.c.b16 %v5066, %v5062
      %v5391 = vpack.c.b16 %v5067, %v5063
      %v5392 = vpack.c.b16 %v5072, %v5068
      %v5393 = vpack.c.b16 %v5073, %v5069
      %v5394 = vpack.c.b16 %v5074, %v5070
      %v5395 = vpack.c.b16 %v5075, %v5071
      %v5396 = vpack.c.b16 %v5080, %v5076
      %v5397 = vpack.c.b16 %v5081, %v5077
      %v5398 = vpack.c.b16 %v5082, %v5078
      %v5399 = vpack.c.b16 %v5083, %v5079
      %v5400 = vpack.c.b16 %v5088, %v5084
      %v5401 = vpack.c.b16 %v5089, %v5085
      %v5402 = vpack.c.b16 %v5090, %v5086
      %v5403 = vpack.c.b16 %v5091, %v5087
      %v5404 = vpack.c.b16 %v5096, %v5092
      %v5405 = vpack.c.b16 %v5097, %v5093
      %v5406 = vpack.c.b16 %v5098, %v5094
      %v5407 = vpack.c.b16 %v5099, %v5095
      %v5408 = vpack.c.b16 %v5104, %v5100
      %v5409 = vpack.c.b16 %v5105, %v5101
      %v5410 = vpack.c.b16 %v5106, %v5102
      %v5411 = vpack.c.b16 %v5107, %v5103
      %v5412 = vpack.c.b16 %v5112, %v5108
      %v5413 = vpack.c.b16 %v5113, %v5109
      %v5414 = vpack.c.b16 %v5114, %v5110
      %v5415 = vpack.c.b16 %v5115, %v5111
      %v5416 = vpack.c.b16 %v5120, %v5116
      %v5417 = vpack.c.b16 %v5121, %v5117
      %v5418 = vpack.c.b16 %v5122, %v5118
      %v5419 = vpack.c.b16 %v5123, %v5119
      %v5420 = vpack.c.b16 %v5128, %v5124
      %v5421 = vpack.c.b16 %v5129, %v5125
      %v5422 = vpack.c.b16 %v5130, %v5126
      %v5423 = vpack.c.b16 %v5131, %v5127
      %v5424 = vpack.c.b16 %v5136, %v5132
      %v5425 = vpack.c.b16 %v5137, %v5133
      %v5426 = vpack.c.b16 %v5138, %v5134
      %v5427 = vpack.c.b16 %v5139, %v5135
      %v5428 = vpack.c.b16 %v5144, %v5140
      %v5429 = vpack.c.b16 %v5145, %v5141
      %v5430 = vpack.c.b16 %v5146, %v5142
      %v5431 = vpack.c.b16 %v5147, %v5143
      %v5432 = vpack.c.b16 %v5152, %v5148
      %v5433 = vpack.c.b16 %v5153, %v5149
      %v5434 = vpack.c.b16 %v5154, %v5150
      %v5435 = vpack.c.b16 %v5155, %v5151
      %v5436 = vpack.c.b16 %v5160, %v5156
      %v5437 = vpack.c.b16 %v5161, %v5157
      %v5438 = vpack.c.b16 %v5162, %v5158
      %v5439 = vpack.c.b16 %v5163, %v5159
      %v5440 = vpack.c.b16 %v5168, %v5164
      %v5441 = vpack.c.b16 %v5169, %v5165
      %v5442 = vpack.c.b16 %v5170, %v5166
      %v5443 = vpack.c.b16 %v5171, %v5167
      %v5444 = vpack.c.b16 %v5176, %v5172
      %v5445 = vpack.c.b16 %v5177, %v5173
      %v5446 = vpack.c.b16 %v5178, %v5174
      %v5447 = vpack.c.b16 %v5179, %v5175
      %v5448 = vpack.c.b16 %v5184, %v5180
      %v5449 = vpack.c.b16 %v5185, %v5181
      %v5450 = vpack.c.b16 %v5186, %v5182
      %v5451 = vpack.c.b16 %v5187, %v5183
      %v5452 = vpack.c.b16 %v5192, %v5188
      %v5453 = vpack.c.b16 %v5193, %v5189
      %v5454 = vpack.c.b16 %v5194, %v5190
      %v5455 = vpack.c.b16 %v5195, %v5191
      %v5456 = vpack.c.b16 %v5200, %v5196
      %v5457 = vpack.c.b16 %v5201, %v5197
      %v5458 = vpack.c.b16 %v5202, %v5198
      %v5459 = vpack.c.b16 %v5203, %v5199
      %5716 = vmatprep.subr.bf16.mxu0 %v5233
      %5717 = vmatpush1.bf16.msra.mxu0 %v5232
      %5718 = vmatprep.subr.bf16.mxu0 %v5229
      %5719 = vmatpush1.bf16.msra.mxu0 %v5228
      %5720 = vmatprep.subr.bf16.mxu0 %v5225
      %5721 = vmatpush1.bf16.msra.mxu0 %v5224
      %5722 = vmatprep.subr.bf16.mxu0 %v5221
      %5723 = vmatpush1.bf16.msra.mxu0 %v5220
      %5724 = vmatprep.subr.bf16.mxu0 %v5217
      %5725 = vmatpush1.bf16.msra.mxu0 %v5216
      %5726 = vmatprep.subr.bf16.mxu0 %v5213
      %5727 = vmatpush1.bf16.msra.mxu0 %v5212
      %5728 = vmatprep.subr.bf16.mxu0 %v5209
      %5729 = vmatpush1.bf16.msra.mxu0 %v5208
      %5730 = vmatprep.subr.bf16.mxu0 %v5205
      %5731 = vmatpush1.bf16.msra.mxu0 %v5204
      %5732 = vmatprep.subr.bf16.mxu0 %v5265
      %5733 = vmatpush2.bf16.msra.mxu0 %v5264
      %5734 = vmatprep.subr.bf16.mxu0 %v5261
      %5735 = vmatpush2.bf16.msra.mxu0 %v5260
      %5736 = vmatprep.subr.bf16.mxu0 %v5257
      %5737 = vmatpush2.bf16.msra.mxu0 %v5256
      %5738 = vmatprep.subr.bf16.mxu0 %v5253
      %5739 = vmatpush2.bf16.msra.mxu0 %v5252
      %5740 = vmatprep.subr.bf16.mxu0 %v5249
      %5741 = vmatpush2.bf16.msra.mxu0 %v5248
      %5742 = vmatprep.subr.bf16.mxu0 %v5245
      %5743 = vmatpush2.bf16.msra.mxu0 %v5244
      %5744 = vmatprep.subr.bf16.mxu0 %v5241
      %5745 = vmatpush2.bf16.msra.mxu0 %v5240
      %5746 = vmatprep.subr.bf16.mxu0 %v5237
      %5747 = vmatpush2.bf16.msra.mxu0 %v5236
      %5748 = vmatprep.mubr.bf16.mxu0 %v4151
      %5749 = vmatmul.mubr.bf16.gmra.mxu0 %v4150
      %v5750 = vpop.f32.mrf.mxu0
      %v5751 = vadd.f32 %v4419, %v5750
      %v5752 = vpop.f32.mrf.mxu0
      %v5753 = vadd.f32 %v4423, %v5752
      %v5754 = vpop.f32.mrf.mxu0
      %v5755 = vpop.f32.mrf.mxu0
      %5756 = vdwg.mxu0
      %5757 = vmatprep.subr.bf16.mxu0 %v5297
      %5758 = vmatpush1.bf16.msra.mxu0 %v5296
      %5759 = vmatprep.subr.bf16.mxu0 %v5293
      %5760 = vmatpush1.bf16.msra.mxu0 %v5292
      %5761 = vmatprep.subr.bf16.mxu0 %v5289
      %5762 = vmatpush1.bf16.msra.mxu0 %v5288
      %5763 = vmatprep.subr.bf16.mxu0 %v5285
      %5764 = vmatpush1.bf16.msra.mxu0 %v5284
      %5765 = vmatprep.subr.bf16.mxu0 %v5281
      %5766 = vmatpush1.bf16.msra.mxu0 %v5280
      %5767 = vmatprep.subr.bf16.mxu0 %v5277
      %5768 = vmatpush1.bf16.msra.mxu0 %v5276
      %5769 = vmatprep.subr.bf16.mxu0 %v5273
      %5770 = vmatpush1.bf16.msra.mxu0 %v5272
      %5771 = vmatprep.subr.bf16.mxu0 %v5269
      %5772 = vmatpush1.bf16.msra.mxu0 %v5268
      %5773 = vmatprep.subr.bf16.mxu0 %v5329
      %5774 = vmatpush2.bf16.msra.mxu0 %v5328
      %5775 = vmatprep.subr.bf16.mxu0 %v5325
      %5776 = vmatpush2.bf16.msra.mxu0 %v5324
      %5777 = vmatprep.subr.bf16.mxu0 %v5321
      %5778 = vmatpush2.bf16.msra.mxu0 %v5320
      %5779 = vmatprep.subr.bf16.mxu0 %v5317
      %5780 = vmatpush2.bf16.msra.mxu0 %v5316
      %5781 = vmatprep.subr.bf16.mxu0 %v5313
      %5782 = vmatpush2.bf16.msra.mxu0 %v5312
      %5783 = vmatprep.subr.bf16.mxu0 %v5309
      %5784 = vmatpush2.bf16.msra.mxu0 %v5308
      %5785 = vmatprep.subr.bf16.mxu0 %v5305
      %5786 = vmatpush2.bf16.msra.mxu0 %v5304
      %5787 = vmatprep.subr.bf16.mxu0 %v5301
      %5788 = vmatpush2.bf16.msra.mxu0 %v5300
      %5789 = vmatprep.mubr.bf16.mxu0 %v4153
      %5790 = vmatmul.mubr.bf16.gmra.mxu0 %v4152
      %v5791 = vpop.f32.mrf.mxu0
      %v5792 = vadd.f32 %v5751, %v5791
      %v5793 = vpop.f32.mrf.mxu0
      %v5794 = vadd.f32 %v5753, %v5793
      %v5795 = vpop.f32.mrf.mxu0
      %v5796 = vpop.f32.mrf.mxu0
      %5797 = vdwg.mxu0
      %5798 = vmatprep.subr.bf16.mxu0 %v5361
      %5799 = vmatpush1.bf16.msra.mxu0 %v5360
      %5800 = vmatprep.subr.bf16.mxu0 %v5357
      %5801 = vmatpush1.bf16.msra.mxu0 %v5356
      %5802 = vmatprep.subr.bf16.mxu0 %v5353
      %5803 = vmatpush1.bf16.msra.mxu0 %v5352
      %5804 = vmatprep.subr.bf16.mxu0 %v5349
      %5805 = vmatpush1.bf16.msra.mxu0 %v5348
      %5806 = vmatprep.subr.bf16.mxu0 %v5345
      %5807 = vmatpush1.bf16.msra.mxu0 %v5344
      %5808 = vmatprep.subr.bf16.mxu0 %v5341
      %5809 = vmatpush1.bf16.msra.mxu0 %v5340
      %5810 = vmatprep.subr.bf16.mxu0 %v5337
      %5811 = vmatpush1.bf16.msra.mxu0 %v5336
      %5812 = vmatprep.subr.bf16.mxu0 %v5333
      %5813 = vmatpush1.bf16.msra.mxu0 %v5332
      %5814 = vmatprep.subr.bf16.mxu0 %v5393
      %5815 = vmatpush2.bf16.msra.mxu0 %v5392
      %5816 = vmatprep.subr.bf16.mxu0 %v5389
      %5817 = vmatpush2.bf16.msra.mxu0 %v5388
      %5818 = vmatprep.subr.bf16.mxu0 %v5385
      %5819 = vmatpush2.bf16.msra.mxu0 %v5384
      %5820 = vmatprep.subr.bf16.mxu0 %v5381
      %5821 = vmatpush2.bf16.msra.mxu0 %v5380
      %5822 = vmatprep.subr.bf16.mxu0 %v5377
      %5823 = vmatpush2.bf16.msra.mxu0 %v5376
      %5824 = vmatprep.subr.bf16.mxu0 %v5373
      %5825 = vmatpush2.bf16.msra.mxu0 %v5372
      %5826 = vmatprep.subr.bf16.mxu0 %v5369
      %5827 = vmatpush2.bf16.msra.mxu0 %v5368
      %5828 = vmatprep.subr.bf16.mxu0 %v5365
      %5829 = vmatpush2.bf16.msra.mxu0 %v5364
      %5830 = vmatprep.mubr.bf16.mxu0 %v4155
      %5831 = vmatmul.mubr.bf16.gmra.mxu0 %v4154
      %v5832 = vpop.f32.mrf.mxu0
      %v5833 = vadd.f32 %v5792, %v5832
      %v5834 = vpop.f32.mrf.mxu0
      %v5835 = vadd.f32 %v5794, %v5834
      %v5836 = vpop.f32.mrf.mxu0
      %v5837 = vpop.f32.mrf.mxu0
      %5838 = vdwg.mxu0
      %5839 = vmatprep.subr.bf16.mxu0 %v5425
      %5840 = vmatpush1.bf16.msra.mxu0 %v5424
      %5841 = vmatprep.subr.bf16.mxu0 %v5421
      %5842 = vmatpush1.bf16.msra.mxu0 %v5420
      %5843 = vmatprep.subr.bf16.mxu0 %v5417
      %5844 = vmatpush1.bf16.msra.mxu0 %v5416
      %5845 = vmatprep.subr.bf16.mxu0 %v5413
      %5846 = vmatpush1.bf16.msra.mxu0 %v5412
      %5847 = vmatprep.subr.bf16.mxu0 %v5409
      %5848 = vmatpush1.bf16.msra.mxu0 %v5408
      %5849 = vmatprep.subr.bf16.mxu0 %v5405
      %5850 = vmatpush1.bf16.msra.mxu0 %v5404
      %5851 = vmatprep.subr.bf16.mxu0 %v5401
      %5852 = vmatpush1.bf16.msra.mxu0 %v5400
      %5853 = vmatprep.subr.bf16.mxu0 %v5397
      %5854 = vmatpush1.bf16.msra.mxu0 %v5396
      %5855 = vmatprep.subr.bf16.mxu0 %v5457
      %5856 = vmatpush2.bf16.msra.mxu0 %v5456
      %5857 = vmatprep.subr.bf16.mxu0 %v5453
      %5858 = vmatpush2.bf16.msra.mxu0 %v5452
      %5859 = vmatprep.subr.bf16.mxu0 %v5449
      %5860 = vmatpush2.bf16.msra.mxu0 %v5448
      %5861 = vmatprep.subr.bf16.mxu0 %v5445
      %5862 = vmatpush2.bf16.msra.mxu0 %v5444
      %5863 = vmatprep.subr.bf16.mxu0 %v5441
      %5864 = vmatpush2.bf16.msra.mxu0 %v5440
      %5865 = vmatprep.subr.bf16.mxu0 %v5437
      %5866 = vmatpush2.bf16.msra.mxu0 %v5436
      %5867 = vmatprep.subr.bf16.mxu0 %v5433
      %5868 = vmatpush2.bf16.msra.mxu0 %v5432
      %5869 = vmatprep.subr.bf16.mxu0 %v5429
      %5870 = vmatpush2.bf16.msra.mxu0 %v5428
      %5871 = vmatprep.mubr.bf16.mxu0 %v4157
      %5872 = vmatmul.mubr.bf16.gmra.mxu0 %v4156
      %v5873 = vpop.f32.mrf.mxu0
      %v5874 = vadd.f32 %v5833, %v5873
      %v5875 = vpop.f32.mrf.mxu0
      %v5876 = vadd.f32 %v5835, %v5875
      %v5877 = vpop.f32.mrf.mxu0
      %v5878 = vpop.f32.mrf.mxu0
      %5879 = vdwg.mxu0
      %5880 = vmatprep.subr.bf16.mxu0 %v5235
      %5881 = vmatpush1.bf16.msra.mxu0 %v5234
      %5882 = vmatprep.subr.bf16.mxu0 %v5231
      %5883 = vmatpush1.bf16.msra.mxu0 %v5230
      %5884 = vmatprep.subr.bf16.mxu0 %v5227
      %5885 = vmatpush1.bf16.msra.mxu0 %v5226
      %5886 = vmatprep.subr.bf16.mxu0 %v5223
      %5887 = vmatpush1.bf16.msra.mxu0 %v5222
      %5888 = vmatprep.subr.bf16.mxu0 %v5219
      %5889 = vmatpush1.bf16.msra.mxu0 %v5218
      %5890 = vmatprep.subr.bf16.mxu0 %v5215
      %5891 = vmatpush1.bf16.msra.mxu0 %v5214
      %5892 = vmatprep.subr.bf16.mxu0 %v5211
      %5893 = vmatpush1.bf16.msra.mxu0 %v5210
      %5894 = vmatprep.subr.bf16.mxu0 %v5207
      %5895 = vmatpush1.bf16.msra.mxu0 %v5206
      %5896 = vmatprep.subr.bf16.mxu0 %v5267
      %5897 = vmatpush2.bf16.msra.mxu0 %v5266
      %5898 = vmatprep.subr.bf16.mxu0 %v5263
      %5899 = vmatpush2.bf16.msra.mxu0 %v5262
      %5900 = vmatprep.subr.bf16.mxu0 %v5259
      %5901 = vmatpush2.bf16.msra.mxu0 %v5258
      %5902 = vmatprep.subr.bf16.mxu0 %v5255
      %5903 = vmatpush2.bf16.msra.mxu0 %v5254
      %5904 = vmatprep.subr.bf16.mxu0 %v5251
      %5905 = vmatpush2.bf16.msra.mxu0 %v5250
      %5906 = vmatprep.subr.bf16.mxu0 %v5247
      %5907 = vmatpush2.bf16.msra.mxu0 %v5246
      %5908 = vmatprep.subr.bf16.mxu0 %v5243
      %5909 = vmatpush2.bf16.msra.mxu0 %v5242
      %5910 = vmatprep.subr.bf16.mxu0 %v5239
      %5911 = vmatpush2.bf16.msra.mxu0 %v5238
      %5912 = vmatprep.mubr.bf16.mxu0 %v4151
      %5913 = vmatmul.mubr.bf16.gmra.mxu0 %v4150
      %v5914 = vpop.f32.mrf.mxu0
      %v5915 = vadd.f32 %v4427, %v5914
      %v5916 = vpop.f32.mrf.mxu0
      %v5917 = vadd.f32 %v4431, %v5916
      %v5918 = vpop.f32.mrf.mxu0
      %v5919 = vpop.f32.mrf.mxu0
      %5920 = vdwg.mxu0
      %5921 = vmatprep.subr.bf16.mxu0 %v5299
      %5922 = vmatpush1.bf16.msra.mxu0 %v5298
      %5923 = vmatprep.subr.bf16.mxu0 %v5295
      %5924 = vmatpush1.bf16.msra.mxu0 %v5294
      %5925 = vmatprep.subr.bf16.mxu0 %v5291
      %5926 = vmatpush1.bf16.msra.mxu0 %v5290
      %5927 = vmatprep.subr.bf16.mxu0 %v5287
      %5928 = vmatpush1.bf16.msra.mxu0 %v5286
      %5929 = vmatprep.subr.bf16.mxu0 %v5283
      %5930 = vmatpush1.bf16.msra.mxu0 %v5282
      %5931 = vmatprep.subr.bf16.mxu0 %v5279
      %5932 = vmatpush1.bf16.msra.mxu0 %v5278
      %5933 = vmatprep.subr.bf16.mxu0 %v5275
      %5934 = vmatpush1.bf16.msra.mxu0 %v5274
      %5935 = vmatprep.subr.bf16.mxu0 %v5271
      %5936 = vmatpush1.bf16.msra.mxu0 %v5270
      %5937 = vmatprep.subr.bf16.mxu0 %v5331
      %5938 = vmatpush2.bf16.msra.mxu0 %v5330
      %5939 = vmatprep.subr.bf16.mxu0 %v5327
      %5940 = vmatpush2.bf16.msra.mxu0 %v5326
      %5941 = vmatprep.subr.bf16.mxu0 %v5323
      %5942 = vmatpush2.bf16.msra.mxu0 %v5322
      %5943 = vmatprep.subr.bf16.mxu0 %v5319
      %5944 = vmatpush2.bf16.msra.mxu0 %v5318
      %5945 = vmatprep.subr.bf16.mxu0 %v5315
      %5946 = vmatpush2.bf16.msra.mxu0 %v5314
      %5947 = vmatprep.subr.bf16.mxu0 %v5311
      %5948 = vmatpush2.bf16.msra.mxu0 %v5310
      %5949 = vmatprep.subr.bf16.mxu0 %v5307
      %5950 = vmatpush2.bf16.msra.mxu0 %v5306
      %5951 = vmatprep.subr.bf16.mxu0 %v5303
      %5952 = vmatpush2.bf16.msra.mxu0 %v5302
      %5953 = vmatprep.mubr.bf16.mxu0 %v4153
      %5954 = vmatmul.mubr.bf16.gmra.mxu0 %v4152
      %v5955 = vpop.f32.mrf.mxu0
      %v5956 = vadd.f32 %v5915, %v5955
      %v5957 = vpop.f32.mrf.mxu0
      %v5958 = vadd.f32 %v5917, %v5957
      %v5959 = vpop.f32.mrf.mxu0
      %v5960 = vpop.f32.mrf.mxu0
      %5961 = vdwg.mxu0
      %5962 = vmatprep.subr.bf16.mxu0 %v5363
      %5963 = vmatpush1.bf16.msra.mxu0 %v5362
      %5964 = vmatprep.subr.bf16.mxu0 %v5359
      %5965 = vmatpush1.bf16.msra.mxu0 %v5358
      %5966 = vmatprep.subr.bf16.mxu0 %v5355
      %5967 = vmatpush1.bf16.msra.mxu0 %v5354
      %5968 = vmatprep.subr.bf16.mxu0 %v5351
      %5969 = vmatpush1.bf16.msra.mxu0 %v5350
      %5970 = vmatprep.subr.bf16.mxu0 %v5347
      %5971 = vmatpush1.bf16.msra.mxu0 %v5346
      %5972 = vmatprep.subr.bf16.mxu0 %v5343
      %5973 = vmatpush1.bf16.msra.mxu0 %v5342
      %5974 = vmatprep.subr.bf16.mxu0 %v5339
      %5975 = vmatpush1.bf16.msra.mxu0 %v5338
      %5976 = vmatprep.subr.bf16.mxu0 %v5335
      %5977 = vmatpush1.bf16.msra.mxu0 %v5334
      %5978 = vmatprep.subr.bf16.mxu0 %v5395
      %5979 = vmatpush2.bf16.msra.mxu0 %v5394
      %5980 = vmatprep.subr.bf16.mxu0 %v5391
      %5981 = vmatpush2.bf16.msra.mxu0 %v5390
      %5982 = vmatprep.subr.bf16.mxu0 %v5387
      %5983 = vmatpush2.bf16.msra.mxu0 %v5386
      %5984 = vmatprep.subr.bf16.mxu0 %v5383
      %5985 = vmatpush2.bf16.msra.mxu0 %v5382
      %5986 = vmatprep.subr.bf16.mxu0 %v5379
      %5987 = vmatpush2.bf16.msra.mxu0 %v5378
      %5988 = vmatprep.subr.bf16.mxu0 %v5375
      %5989 = vmatpush2.bf16.msra.mxu0 %v5374
      %5990 = vmatprep.subr.bf16.mxu0 %v5371
      %5991 = vmatpush2.bf16.msra.mxu0 %v5370
      %5992 = vmatprep.subr.bf16.mxu0 %v5367
      %5993 = vmatpush2.bf16.msra.mxu0 %v5366
      %5994 = vmatprep.mubr.bf16.mxu0 %v4155
      %5995 = vmatmul.mubr.bf16.gmra.mxu0 %v4154
      %v5996 = vpop.f32.mrf.mxu0
      %v5997 = vadd.f32 %v5956, %v5996
      %v5998 = vpop.f32.mrf.mxu0
      %v5999 = vadd.f32 %v5958, %v5998
      %v6000 = vpop.f32.mrf.mxu0
      %v6001 = vpop.f32.mrf.mxu0
      %6002 = vdwg.mxu0
      %6003 = vmatprep.subr.bf16.mxu0 %v5427
      %6004 = vmatpush1.bf16.msra.mxu0 %v5426
      %6005 = vmatprep.subr.bf16.mxu0 %v5423
      %6006 = vmatpush1.bf16.msra.mxu0 %v5422
      %6007 = vmatprep.subr.bf16.mxu0 %v5419
      %6008 = vmatpush1.bf16.msra.mxu0 %v5418
      %6009 = vmatprep.subr.bf16.mxu0 %v5415
      %6010 = vmatpush1.bf16.msra.mxu0 %v5414
      %6011 = vmatprep.subr.bf16.mxu0 %v5411
      %6012 = vmatpush1.bf16.msra.mxu0 %v5410
      %6013 = vmatprep.subr.bf16.mxu0 %v5407
      %6014 = vmatpush1.bf16.msra.mxu0 %v5406
      %6015 = vmatprep.subr.bf16.mxu0 %v5403
      %6016 = vmatpush1.bf16.msra.mxu0 %v5402
      %6017 = vmatprep.subr.bf16.mxu0 %v5399
      %6018 = vmatpush1.bf16.msra.mxu0 %v5398
      %6019 = vmatprep.subr.bf16.mxu0 %v5459
      %6020 = vmatpush2.bf16.msra.mxu0 %v5458
      %6021 = vmatprep.subr.bf16.mxu0 %v5455
      %6022 = vmatpush2.bf16.msra.mxu0 %v5454
      %6023 = vmatprep.subr.bf16.mxu0 %v5451
      %6024 = vmatpush2.bf16.msra.mxu0 %v5450
      %6025 = vmatprep.subr.bf16.mxu0 %v5447
      %6026 = vmatpush2.bf16.msra.mxu0 %v5446
      %6027 = vmatprep.subr.bf16.mxu0 %v5443
      %6028 = vmatpush2.bf16.msra.mxu0 %v5442
      %6029 = vmatprep.subr.bf16.mxu0 %v5439
      %6030 = vmatpush2.bf16.msra.mxu0 %v5438
      %6031 = vmatprep.subr.bf16.mxu0 %v5435
      %6032 = vmatpush2.bf16.msra.mxu0 %v5434
      %6033 = vmatprep.subr.bf16.mxu0 %v5431
      %6034 = vmatpush2.bf16.msra.mxu0 %v5430
      %6035 = vmatprep.mubr.bf16.mxu0 %v4157
      %6036 = vmatmul.mubr.bf16.gmra.mxu0 %v4156
      %v6037 = vpop.f32.mrf.mxu0
      %v6038 = vadd.f32 %v5997, %v6037
      %v6039 = vpop.f32.mrf.mxu0
      %v6040 = vadd.f32 %v5999, %v6039
      %v6041 = vpop.f32.mrf.mxu0
      %v6042 = vpop.f32.mrf.mxu0
      %6043 = vdwg.mxu0
      %v6044 = vld [vmem:[#allocation12] sm:$0xf]
      %v6045 = vld [vmem:[#allocation14] sm:$0xf]
      %v6046 = vmul.f32 %v5874, %v4067
      %v6047 = vmul.f32 %v5876, %v4067
      %v6048 = vmul.f32 %v6038, %v4067
      %v6049 = vmul.f32 %v6040, %v4067
      %v6050 = vrot.slane %v6046, 4
      %v6051 = vadd.f32 %v6046, %v6050
      %v6052 = vrot.slane %v6051, 2
      %v6053 = vadd.f32 %v6051, %v6052
      %v6054 = vrot.slane %v6053, 1
      %v6055 = vadd.f32 %v6053, %v6054
      %v6056 = vrot.slane %v6047, 4
      %v6057 = vadd.f32 %v6047, %v6056
      %v6058 = vrot.slane %v6057, 2
      %v6059 = vadd.f32 %v6057, %v6058
      %v6060 = vrot.slane %v6059, 1
      %v6061 = vadd.f32 %v6059, %v6060
      %v6062 = vrot.slane %v6048, 4
      %v6063 = vadd.f32 %v6048, %v6062
      %v6064 = vrot.slane %v6063, 2
      %v6065 = vadd.f32 %v6063, %v6064
      %v6066 = vrot.slane %v6065, 1
      %v6067 = vadd.f32 %v6065, %v6066
      %v6068 = vrot.slane %v6049, 4
      %v6069 = vadd.f32 %v6049, %v6068
      %v6070 = vrot.slane %v6069, 2
      %v6071 = vadd.f32 %v6069, %v6070
      %v6072 = vrot.slane %v6071, 1
      %v6073 = vadd.f32 %v6071, %v6072
      %v6074 = vmul.f32 %v6055, 0.5
      %v6075 = vmul.f32 %v6061, 0.5
      %v6076 = vmul.f32 %v6067, 0.5
      %v6077 = vmul.f32 %v6073, 0.5
      %v6078 = vsub.f32 %v5874, %v6074
      %v6079 = vsub.f32 %v5876, %v6075
      %v6080 = vsub.f32 %v6038, %v6076
      %v6081 = vsub.f32 %v6040, %v6077
      %v6082 = vmul.f32 %v6078, %v4067
      %v6083 = vmul.f32 %v6079, %v4067
      %v6084 = vmul.f32 %v6080, %v4067
      %v6085 = vmul.f32 %v6081, %v4067
      %v6086 = vmul.f32 %v6082, %v6082
      %v6087 = vmul.f32 %v6083, %v6083
      %v6088 = vmul.f32 %v6084, %v6084
      %v6089 = vmul.f32 %v6085, %v6085
      %v6090 = vrot.slane %v6086, 4
      %v6091 = vadd.f32 %v6086, %v6090
      %v6092 = vrot.slane %v6091, 2
      %v6093 = vadd.f32 %v6091, %v6092
      %v6094 = vrot.slane %v6093, 1
      %v6095 = vadd.f32 %v6093, %v6094
      %v6096 = vrot.slane %v6087, 4
      %v6097 = vadd.f32 %v6087, %v6096
      %v6098 = vrot.slane %v6097, 2
      %v6099 = vadd.f32 %v6097, %v6098
      %v6100 = vrot.slane %v6099, 1
      %v6101 = vadd.f32 %v6099, %v6100
      %v6102 = vrot.slane %v6088, 4
      %v6103 = vadd.f32 %v6088, %v6102
      %v6104 = vrot.slane %v6103, 2
      %v6105 = vadd.f32 %v6103, %v6104
      %v6106 = vrot.slane %v6105, 1
      %v6107 = vadd.f32 %v6105, %v6106
      %v6108 = vrot.slane %v6089, 4
      %v6109 = vadd.f32 %v6089, %v6108
      %v6110 = vrot.slane %v6109, 2
      %v6111 = vadd.f32 %v6109, %v6110
      %v6112 = vrot.slane %v6111, 1
      %v6113 = vadd.f32 %v6111, %v6112
      %v6114 = vmul.f32 %v6095, 0.5
      %v6115 = vmul.f32 %v6101, 0.5
      %v6116 = vmul.f32 %v6107, 0.5
      %v6117 = vmul.f32 %v6113, 0.5
      %v6118 = vadd.f32 %v6114, 1e-05
      %v6119 = vadd.f32 %v6115, 1e-05
      %v6120 = vadd.f32 %v6116, 1e-05
      %v6121 = vadd.f32 %v6117, 1e-05
      %v6122 = vrsqrt.pop %v6118
      %v6123 = vrsqrt.pop %v6119
      %v6124 = vrsqrt.pop %v6120
      %v6125 = vrsqrt.pop %v6121
      %v6130 = vcombine.low %v6122, %v6123
      %v6131 = vcombine.low %v6124, %v6125
      %v6133 = vunpack.c.l.s4 1966171168
      %v6134 = vunpack.c.0.s8 %v6133
      %v6135 = vlaneseq
      %v6136 = vshrl.u32 %v6135, 7
      %v6137 = vsub.s32 %v6134, %v6136
      %v6138 = vrot.slane %v6130, %v6137
      %v6140 = vunpack.c.l.s4 1966171168
      %v6141 = vunpack.c.0.s8 %v6140
      %v6142 = vlaneseq
      %v6143 = vshrl.u32 %v6142, 7
      %v6144 = vsub.s32 %v6141, %v6143
      %v6145 = vrot.slane %v6131, %v6144
      %v6146 = vcombine.low %v6138, %v6145
      %v6148 = vunpack.c.l.s4 1966171168
      %v6149 = vunpack.c.0.s8 %v6148
      %v6150 = vlaneseq
      %v6151 = vshrl.u32 %v6150, 7
      %v6152 = vsub.s32 %v6149, %v6151
      %v6153 = vrot.slane %v6146, %v6152
      %v6155 = vmul.f32 %v6044, %v6153
      %v6157 = vlaneseq
      %v6158 = vshrl.u32 %v6157, 7
      %v6159 = vsub.s32 0, %v6158
      %v6160 = vrot.slane %v6155, %v6159
      %v6161 = vlaneseq
      %v6162 = vshrl.u32 %v6161, 7
      %v6163 = vsub.s32 1, %v6162
      %v6164 = vrot.slane %v6155, %v6163
      %v6165 = vlaneseq
      %v6166 = vshrl.u32 %v6165, 7
      %v6167 = vsub.s32 2, %v6166
      %v6168 = vrot.slane %v6155, %v6167
      %v6169 = vlaneseq
      %v6170 = vshrl.u32 %v6169, 7
      %v6171 = vsub.s32 3, %v6170
      %v6172 = vrot.slane %v6155, %v6171
      %v6177 = vmul.f32 %v6074, %v6160
      %v6178 = vmul.f32 %v6075, %v6164
      %v6179 = vmul.f32 %v6076, %v6168
      %v6180 = vmul.f32 %v6077, %v6172
      %v6185 = vcombine.low %v6177, %v6178
      %v6186 = vcombine.low %v6179, %v6180
      %v6188 = vunpack.c.l.s4 1966171168
      %v6189 = vunpack.c.0.s8 %v6188
      %v6190 = vlaneseq
      %v6191 = vshrl.u32 %v6190, 7
      %v6192 = vsub.s32 %v6189, %v6191
      %v6193 = vrot.slane %v6185, %v6192
      %v6195 = vunpack.c.l.s4 1966171168
      %v6196 = vunpack.c.0.s8 %v6195
      %v6197 = vlaneseq
      %v6198 = vshrl.u32 %v6197, 7
      %v6199 = vsub.s32 %v6196, %v6198
      %v6200 = vrot.slane %v6186, %v6199
      %v6201 = vcombine.low %v6193, %v6200
      %v6203 = vunpack.c.l.s4 1966171168
      %v6204 = vunpack.c.0.s8 %v6203
      %v6205 = vlaneseq
      %v6206 = vshrl.u32 %v6205, 7
      %v6207 = vsub.s32 %v6204, %v6206
      %v6208 = vrot.slane %v6201, %v6207
      %v6210 = vsub.f32 %v6045, %v6208
      %v6211 = vmul.f32 %v5874, %v6160
      %v6212 = vmul.f32 %v5876, %v6164
      %v6213 = vmul.f32 %v6038, %v6168
      %v6214 = vmul.f32 %v6040, %v6172
      %v6216 = vlaneseq
      %v6217 = vshrl.u32 %v6216, 7
      %v6218 = vsub.s32 0, %v6217
      %v6219 = vrot.slane %v6210, %v6218
      %v6220 = vlaneseq
      %v6221 = vshrl.u32 %v6220, 7
      %v6222 = vsub.s32 1, %v6221
      %v6223 = vrot.slane %v6210, %v6222
      %v6224 = vlaneseq
      %v6225 = vshrl.u32 %v6224, 7
      %v6226 = vsub.s32 2, %v6225
      %v6227 = vrot.slane %v6210, %v6226
      %v6228 = vlaneseq
      %v6229 = vshrl.u32 %v6228, 7
      %v6230 = vsub.s32 3, %v6229
      %v6231 = vrot.slane %v6210, %v6230
      %v6236 = vadd.f32 %v6211, %v6219
      %v6237 = vadd.f32 %v6212, %v6223
      %v6238 = vadd.f32 %v6213, %v6227
      %v6239 = vadd.f32 %v6214, %v6231
      %vm6240 = vcmp.gt.f32.partialorder %v6236, 0.0
      %vm6241 = vcmp.gt.f32.partialorder %v6237, 0.0
      %vm6242 = vcmp.gt.f32.partialorder %v6238, 0.0
      %vm6243 = vcmp.gt.f32.partialorder %v6239, 0.0
      %v6244 = vmul.f32 %v6236, 0.2
      %v6245 = vmul.f32 %v6237, 0.2
      %v6246 = vmul.f32 %v6238, 0.2
      %v6247 = vmul.f32 %v6239, 0.2
      %v6248 = vsel %vm6240, %v6236, %v6244
      %v6249 = vsel %vm6241, %v6237, %v6245
      %v6250 = vsel %vm6242, %v6238, %v6246
      %v6251 = vsel %vm6243, %v6239, %v6247
      %v6252 = vpack.c.bf16 %v6248, %v6248
      %v6253 = vpack.c.bf16 %v6249, %v6249
      %v6254 = vpack.c.bf16 %v6250, %v6250
      %v6255 = vpack.c.bf16 %v6251, %v6251
      %v6256 = vld [vmem:[#allocation15] sm:$0xff]
      %v6257 = vld [vmem:[#allocation15 + $0x8] sm:$0xff]
      %v6258 = vld [vmem:[#allocation15 + $0x10] sm:$0xff]
      %v6259 = vld [vmem:[#allocation15 + $0x18] sm:$0xff]
      %v6260 = vld [vmem:[#allocation15 + $0x20] sm:$0xff]
      %v6261 = vld [vmem:[#allocation15 + $0x28] sm:$0xff]
      %v6262 = vld [vmem:[#allocation15 + $0x30] sm:$0xff]
      %v6263 = vld [vmem:[#allocation15 + $0x38] sm:$0xff]
      %v6264 = vld [vmem:[#allocation15 + $0x40] sm:$0xff]
      %v6265 = vld [vmem:[#allocation15 + $0x48] sm:$0xff]
      %v6266 = vld [vmem:[#allocation15 + $0x50] sm:$0xff]
      %v6267 = vld [vmem:[#allocation15 + $0x58] sm:$0xff]
      %v6268 = vld [vmem:[#allocation15 + $0x60] sm:$0xff]
      %v6269 = vld [vmem:[#allocation15 + $0x68] sm:$0xff]
      %v6270 = vld [vmem:[#allocation15 + $0x70] sm:$0xff]
      %v6271 = vld [vmem:[#allocation15 + $0x78] sm:$0xff]
      %v6272 = vld [vmem:[#allocation15 + $0x80] sm:$0xff]
      %v6273 = vld [vmem:[#allocation15 + $0x88] sm:$0xff]
      %v6274 = vld [vmem:[#allocation15 + $0x90] sm:$0xff]
      %v6275 = vld [vmem:[#allocation15 + $0x98] sm:$0xff]
      %v6276 = vld [vmem:[#allocation15 + $0xa0] sm:$0xff]
      %v6277 = vld [vmem:[#allocation15 + $0xa8] sm:$0xff]
      %v6278 = vld [vmem:[#allocation15 + $0xb0] sm:$0xff]
      %v6279 = vld [vmem:[#allocation15 + $0xb8] sm:$0xff]
      %v6280 = vld [vmem:[#allocation15 + $0xc0] sm:$0xff]
      %v6281 = vld [vmem:[#allocation15 + $0xc8] sm:$0xff]
      %v6282 = vld [vmem:[#allocation15 + $0xd0] sm:$0xff]
      %v6283 = vld [vmem:[#allocation15 + $0xd8] sm:$0xff]
      %v6284 = vld [vmem:[#allocation15 + $0xe0] sm:$0xff]
      %v6285 = vld [vmem:[#allocation15 + $0xe8] sm:$0xff]
      %v6286 = vld [vmem:[#allocation15 + $0xf0] sm:$0xff]
      %v6287 = vld [vmem:[#allocation15 + $0xf8] sm:$0xff]
      %v6288 = vld [vmem:[#allocation15 + $0x100] sm:$0xff]
      %v6289 = vld [vmem:[#allocation15 + $0x108] sm:$0xff]
      %v6290 = vld [vmem:[#allocation15 + $0x110] sm:$0xff]
      %v6291 = vld [vmem:[#allocation15 + $0x118] sm:$0xff]
      %v6292 = vld [vmem:[#allocation15 + $0x120] sm:$0xff]
      %v6293 = vld [vmem:[#allocation15 + $0x128] sm:$0xff]
      %v6294 = vld [vmem:[#allocation15 + $0x130] sm:$0xff]
      %v6295 = vld [vmem:[#allocation15 + $0x138] sm:$0xff]
      %v6296 = vld [vmem:[#allocation15 + $0x140] sm:$0xff]
      %v6297 = vld [vmem:[#allocation15 + $0x148] sm:$0xff]
      %v6298 = vld [vmem:[#allocation15 + $0x150] sm:$0xff]
      %v6299 = vld [vmem:[#allocation15 + $0x158] sm:$0xff]
      %v6300 = vld [vmem:[#allocation15 + $0x160] sm:$0xff]
      %v6301 = vld [vmem:[#allocation15 + $0x168] sm:$0xff]
      %v6302 = vld [vmem:[#allocation15 + $0x170] sm:$0xff]
      %v6303 = vld [vmem:[#allocation15 + $0x178] sm:$0xff]
      %v6304 = vld [vmem:[#allocation15 + $0x180] sm:$0xff]
      %v6305 = vld [vmem:[#allocation15 + $0x188] sm:$0xff]
      %v6306 = vld [vmem:[#allocation15 + $0x190] sm:$0xff]
      %v6307 = vld [vmem:[#allocation15 + $0x198] sm:$0xff]
      %v6308 = vld [vmem:[#allocation15 + $0x1a0] sm:$0xff]
      %v6309 = vld [vmem:[#allocation15 + $0x1a8] sm:$0xff]
      %v6310 = vld [vmem:[#allocation15 + $0x1b0] sm:$0xff]
      %v6311 = vld [vmem:[#allocation15 + $0x1b8] sm:$0xff]
      %v6312 = vld [vmem:[#allocation15 + $0x1c0] sm:$0xff]
      %v6313 = vld [vmem:[#allocation15 + $0x1c8] sm:$0xff]
      %v6314 = vld [vmem:[#allocation15 + $0x1d0] sm:$0xff]
      %v6315 = vld [vmem:[#allocation15 + $0x1d8] sm:$0xff]
      %v6316 = vld [vmem:[#allocation15 + $0x1e0] sm:$0xff]
      %v6317 = vld [vmem:[#allocation15 + $0x1e8] sm:$0xff]
      %v6318 = vld [vmem:[#allocation15 + $0x1f0] sm:$0xff]
      %v6319 = vld [vmem:[#allocation15 + $0x1f8] sm:$0xff]
      %v6320 = vld [vmem:[#allocation17] sm:$0x3]
      %v6322 = vlaneseq
      %v6323 = vshrl.u32 %v6322, 7
      %v6324 = vsub.s32 0, %v6323
      %v6325 = vrot.slane %v6320, %v6324
      %v6326 = vlaneseq
      %v6327 = vshrl.u32 %v6326, 7
      %v6328 = vsub.s32 1, %v6327
      %v6329 = vrot.slane %v6320, %v6328
      %v6396 = vunpack.c.l.b16 %v6256
      %v6397 = vunpack.c.h.b16 %v6256
      %v6398 = vunpack.c.l.b16 %v6257
      %v6399 = vunpack.c.h.b16 %v6257
      %v6400 = vunpack.c.l.b16 %v6258
      %v6401 = vunpack.c.h.b16 %v6258
      %v6402 = vunpack.c.l.b16 %v6259
      %v6403 = vunpack.c.h.b16 %v6259
      %v6404 = vunpack.c.l.b16 %v6260
      %v6405 = vunpack.c.h.b16 %v6260
      %v6406 = vunpack.c.l.b16 %v6261
      %v6407 = vunpack.c.h.b16 %v6261
      %v6408 = vunpack.c.l.b16 %v6262
      %v6409 = vunpack.c.h.b16 %v6262
      %v6410 = vunpack.c.l.b16 %v6263
      %v6411 = vunpack.c.h.b16 %v6263
      %v6412 = vunpack.c.l.b16 %v6264
      %v6413 = vunpack.c.h.b16 %v6264
      %v6414 = vunpack.c.l.b16 %v6265
      %v6415 = vunpack.c.h.b16 %v6265
      %v6416 = vunpack.c.l.b16 %v6266
      %v6417 = vunpack.c.h.b16 %v6266
      %v6418 = vunpack.c.l.b16 %v6267
      %v6419 = vunpack.c.h.b16 %v6267
      %v6420 = vunpack.c.l.b16 %v6268
      %v6421 = vunpack.c.h.b16 %v6268
      %v6422 = vunpack.c.l.b16 %v6269
      %v6423 = vunpack.c.h.b16 %v6269
      %v6424 = vunpack.c.l.b16 %v6270
      %v6425 = vunpack.c.h.b16 %v6270
      %v6426 = vunpack.c.l.b16 %v6271
      %v6427 = vunpack.c.h.b16 %v6271
      %v6428 = vunpack.c.l.b16 %v6272
      %v6429 = vunpack.c.h.b16 %v6272
      %v6430 = vunpack.c.l.b16 %v6273
      %v6431 = vunpack.c.h.b16 %v6273
      %v6432 = vunpack.c.l.b16 %v6274
      %v6433 = vunpack.c.h.b16 %v6274
      %v6434 = vunpack.c.l.b16 %v6275
      %v6435 = vunpack.c.h.b16 %v6275
      %v6436 = vunpack.c.l.b16 %v6276
      %v6437 = vunpack.c.h.b16 %v6276
      %v6438 = vunpack.c.l.b16 %v6277
      %v6439 = vunpack.c.h.b16 %v6277
      %v6440 = vunpack.c.l.b16 %v6278
      %v6441 = vunpack.c.h.b16 %v6278
      %v6442 = vunpack.c.l.b16 %v6279
      %v6443 = vunpack.c.h.b16 %v6279
      %v6444 = vunpack.c.l.b16 %v6280
      %v6445 = vunpack.c.h.b16 %v6280
      %v6446 = vunpack.c.l.b16 %v6281
      %v6447 = vunpack.c.h.b16 %v6281
      %v6448 = vunpack.c.l.b16 %v6282
      %v6449 = vunpack.c.h.b16 %v6282
      %v6450 = vunpack.c.l.b16 %v6283
      %v6451 = vunpack.c.h.b16 %v6283
      %v6452 = vunpack.c.l.b16 %v6284
      %v6453 = vunpack.c.h.b16 %v6284
      %v6454 = vunpack.c.l.b16 %v6285
      %v6455 = vunpack.c.h.b16 %v6285
      %v6456 = vunpack.c.l.b16 %v6286
      %v6457 = vunpack.c.h.b16 %v6286
      %v6458 = vunpack.c.l.b16 %v6287
      %v6459 = vunpack.c.h.b16 %v6287
      %v6460 = vunpack.c.l.b16 %v6288
      %v6461 = vunpack.c.h.b16 %v6288
      %v6462 = vunpack.c.l.b16 %v6289
      %v6463 = vunpack.c.h.b16 %v6289
      %v6464 = vunpack.c.l.b16 %v6290
      %v6465 = vunpack.c.h.b16 %v6290
      %v6466 = vunpack.c.l.b16 %v6291
      %v6467 = vunpack.c.h.b16 %v6291
      %v6468 = vunpack.c.l.b16 %v6292
      %v6469 = vunpack.c.h.b16 %v6292
      %v6470 = vunpack.c.l.b16 %v6293
      %v6471 = vunpack.c.h.b16 %v6293
      %v6472 = vunpack.c.l.b16 %v6294
      %v6473 = vunpack.c.h.b16 %v6294
      %v6474 = vunpack.c.l.b16 %v6295
      %v6475 = vunpack.c.h.b16 %v6295
      %v6476 = vunpack.c.l.b16 %v6296
      %v6477 = vunpack.c.h.b16 %v6296
      %v6478 = vunpack.c.l.b16 %v6297
      %v6479 = vunpack.c.h.b16 %v6297
      %v6480 = vunpack.c.l.b16 %v6298
      %v6481 = vunpack.c.h.b16 %v6298
      %v6482 = vunpack.c.l.b16 %v6299
      %v6483 = vunpack.c.h.b16 %v6299
      %v6484 = vunpack.c.l.b16 %v6300
      %v6485 = vunpack.c.h.b16 %v6300
      %v6486 = vunpack.c.l.b16 %v6301
      %v6487 = vunpack.c.h.b16 %v6301
      %v6488 = vunpack.c.l.b16 %v6302
      %v6489 = vunpack.c.h.b16 %v6302
      %v6490 = vunpack.c.l.b16 %v6303
      %v6491 = vunpack.c.h.b16 %v6303
      %v6492 = vunpack.c.l.b16 %v6304
      %v6493 = vunpack.c.h.b16 %v6304
      %v6494 = vunpack.c.l.b16 %v6305
      %v6495 = vunpack.c.h.b16 %v6305
      %v6496 = vunpack.c.l.b16 %v6306
      %v6497 = vunpack.c.h.b16 %v6306
      %v6498 = vunpack.c.l.b16 %v6307
      %v6499 = vunpack.c.h.b16 %v6307
      %v6500 = vunpack.c.l.b16 %v6308
      %v6501 = vunpack.c.h.b16 %v6308
      %v6502 = vunpack.c.l.b16 %v6309
      %v6503 = vunpack.c.h.b16 %v6309
      %v6504 = vunpack.c.l.b16 %v6310
      %v6505 = vunpack.c.h.b16 %v6310
      %v6506 = vunpack.c.l.b16 %v6311
      %v6507 = vunpack.c.h.b16 %v6311
      %v6508 = vunpack.c.l.b16 %v6312
      %v6509 = vunpack.c.h.b16 %v6312
      %v6510 = vunpack.c.l.b16 %v6313
      %v6511 = vunpack.c.h.b16 %v6313
      %v6512 = vunpack.c.l.b16 %v6314
      %v6513 = vunpack.c.h.b16 %v6314
      %v6514 = vunpack.c.l.b16 %v6315
      %v6515 = vunpack.c.h.b16 %v6315
      %v6516 = vunpack.c.l.b16 %v6316
      %v6517 = vunpack.c.h.b16 %v6316
      %v6518 = vunpack.c.l.b16 %v6317
      %v6519 = vunpack.c.h.b16 %v6317
      %v6520 = vunpack.c.l.b16 %v6318
      %v6521 = vunpack.c.h.b16 %v6318
      %v6522 = vunpack.c.l.b16 %v6319
      %v6523 = vunpack.c.h.b16 %v6319
      %v6524 = vpack.c.b16 %v6398, %v6396
      %v6525 = vpack.c.b16 %v6399, %v6397
      %v6526 = vpack.c.b16 %v6402, %v6400
      %v6527 = vpack.c.b16 %v6403, %v6401
      %v6528 = vpack.c.b16 %v6406, %v6404
      %v6529 = vpack.c.b16 %v6407, %v6405
      %v6530 = vpack.c.b16 %v6410, %v6408
      %v6531 = vpack.c.b16 %v6411, %v6409
      %v6532 = vpack.c.b16 %v6414, %v6412
      %v6533 = vpack.c.b16 %v6415, %v6413
      %v6534 = vpack.c.b16 %v6418, %v6416
      %v6535 = vpack.c.b16 %v6419, %v6417
      %v6536 = vpack.c.b16 %v6422, %v6420
      %v6537 = vpack.c.b16 %v6423, %v6421
      %v6538 = vpack.c.b16 %v6426, %v6424
      %v6539 = vpack.c.b16 %v6427, %v6425
      %v6540 = vpack.c.b16 %v6430, %v6428
      %v6541 = vpack.c.b16 %v6431, %v6429
      %v6542 = vpack.c.b16 %v6434, %v6432
      %v6543 = vpack.c.b16 %v6435, %v6433
      %v6544 = vpack.c.b16 %v6438, %v6436
      %v6545 = vpack.c.b16 %v6439, %v6437
      %v6546 = vpack.c.b16 %v6442, %v6440
      %v6547 = vpack.c.b16 %v6443, %v6441
      %v6548 = vpack.c.b16 %v6446, %v6444
      %v6549 = vpack.c.b16 %v6447, %v6445
      %v6550 = vpack.c.b16 %v6450, %v6448
      %v6551 = vpack.c.b16 %v6451, %v6449
      %v6552 = vpack.c.b16 %v6454, %v6452
      %v6553 = vpack.c.b16 %v6455, %v6453
      %v6554 = vpack.c.b16 %v6458, %v6456
      %v6555 = vpack.c.b16 %v6459, %v6457
      %v6556 = vpack.c.b16 %v6462, %v6460
      %v6557 = vpack.c.b16 %v6463, %v6461
      %v6558 = vpack.c.b16 %v6466, %v6464
      %v6559 = vpack.c.b16 %v6467, %v6465
      %v6560 = vpack.c.b16 %v6470, %v6468
      %v6561 = vpack.c.b16 %v6471, %v6469
      %v6562 = vpack.c.b16 %v6474, %v6472
      %v6563 = vpack.c.b16 %v6475, %v6473
      %v6564 = vpack.c.b16 %v6478, %v6476
      %v6565 = vpack.c.b16 %v6479, %v6477
      %v6566 = vpack.c.b16 %v6482, %v6480
      %v6567 = vpack.c.b16 %v6483, %v6481
      %v6568 = vpack.c.b16 %v6486, %v6484
      %v6569 = vpack.c.b16 %v6487, %v6485
      %v6570 = vpack.c.b16 %v6490, %v6488
      %v6571 = vpack.c.b16 %v6491, %v6489
      %v6572 = vpack.c.b16 %v6494, %v6492
      %v6573 = vpack.c.b16 %v6495, %v6493
      %v6574 = vpack.c.b16 %v6498, %v6496
      %v6575 = vpack.c.b16 %v6499, %v6497
      %v6576 = vpack.c.b16 %v6502, %v6500
      %v6577 = vpack.c.b16 %v6503, %v6501
      %v6578 = vpack.c.b16 %v6506, %v6504
      %v6579 = vpack.c.b16 %v6507, %v6505
      %v6580 = vpack.c.b16 %v6510, %v6508
      %v6581 = vpack.c.b16 %v6511, %v6509
      %v6582 = vpack.c.b16 %v6514, %v6512
      %v6583 = vpack.c.b16 %v6515, %v6513
      %v6584 = vpack.c.b16 %v6518, %v6516
      %v6585 = vpack.c.b16 %v6519, %v6517
      %v6586 = vpack.c.b16 %v6522, %v6520
      %v6587 = vpack.c.b16 %v6523, %v6521
      %6652 = vmatprep.subr.bf16.mxu0 %v6539
      %6653 = vmatpush1.bf16.msra.mxu0 %v6538
      %6654 = vmatprep.subr.bf16.mxu0 %v6537
      %6655 = vmatpush1.bf16.msra.mxu0 %v6536
      %6656 = vmatprep.subr.bf16.mxu0 %v6535
      %6657 = vmatpush1.bf16.msra.mxu0 %v6534
      %6658 = vmatprep.subr.bf16.mxu0 %v6533
      %6659 = vmatpush1.bf16.msra.mxu0 %v6532
      %6660 = vmatprep.subr.bf16.mxu0 %v6531
      %6661 = vmatpush1.bf16.msra.mxu0 %v6530
      %6662 = vmatprep.subr.bf16.mxu0 %v6529
      %6663 = vmatpush1.bf16.msra.mxu0 %v6528
      %6664 = vmatprep.subr.bf16.mxu0 %v6527
      %6665 = vmatpush1.bf16.msra.mxu0 %v6526
      %6666 = vmatprep.subr.bf16.mxu0 %v6525
      %6667 = vmatpush1.bf16.msra.mxu0 %v6524
      %6668 = vmatprep.subr.bf16.mxu0 %v6555
      %6669 = vmatpush2.bf16.msra.mxu0 %v6554
      %6670 = vmatprep.subr.bf16.mxu0 %v6553
      %6671 = vmatpush2.bf16.msra.mxu0 %v6552
      %6672 = vmatprep.subr.bf16.mxu0 %v6551
      %6673 = vmatpush2.bf16.msra.mxu0 %v6550
      %6674 = vmatprep.subr.bf16.mxu0 %v6549
      %6675 = vmatpush2.bf16.msra.mxu0 %v6548
      %6676 = vmatprep.subr.bf16.mxu0 %v6547
      %6677 = vmatpush2.bf16.msra.mxu0 %v6546
      %6678 = vmatprep.subr.bf16.mxu0 %v6545
      %6679 = vmatpush2.bf16.msra.mxu0 %v6544
      %6680 = vmatprep.subr.bf16.mxu0 %v6543
      %6681 = vmatpush2.bf16.msra.mxu0 %v6542
      %6682 = vmatprep.subr.bf16.mxu0 %v6541
      %6683 = vmatpush2.bf16.msra.mxu0 %v6540
      %6684 = vmatprep.mubr.bf16.mxu0 %v6253
      %6685 = vmatmul.mubr.bf16.gmra.mxu0 %v6252
      %v6686 = vpop.f32.mrf.mxu0
      %v6687 = vadd.f32 %v6325, %v6686
      %v6688 = vpop.f32.mrf.mxu0
      %v6689 = vadd.f32 %v6329, %v6688
      %v6690 = vpop.f32.mrf.mxu0
      %v6691 = vpop.f32.mrf.mxu0
      %6692 = vdwg.mxu0
      %6693 = vmatprep.subr.bf16.mxu0 %v6571
      %6694 = vmatpush1.bf16.msra.mxu0 %v6570
      %6695 = vmatprep.subr.bf16.mxu0 %v6569
      %6696 = vmatpush1.bf16.msra.mxu0 %v6568
      %6697 = vmatprep.subr.bf16.mxu0 %v6567
      %6698 = vmatpush1.bf16.msra.mxu0 %v6566
      %6699 = vmatprep.subr.bf16.mxu0 %v6565
      %6700 = vmatpush1.bf16.msra.mxu0 %v6564
      %6701 = vmatprep.subr.bf16.mxu0 %v6563
      %6702 = vmatpush1.bf16.msra.mxu0 %v6562
      %6703 = vmatprep.subr.bf16.mxu0 %v6561
      %6704 = vmatpush1.bf16.msra.mxu0 %v6560
      %6705 = vmatprep.subr.bf16.mxu0 %v6559
      %6706 = vmatpush1.bf16.msra.mxu0 %v6558
      %6707 = vmatprep.subr.bf16.mxu0 %v6557
      %6708 = vmatpush1.bf16.msra.mxu0 %v6556
      %6709 = vmatprep.subr.bf16.mxu0 %v6587
      %6710 = vmatpush2.bf16.msra.mxu0 %v6586
      %6711 = vmatprep.subr.bf16.mxu0 %v6585
      %6712 = vmatpush2.bf16.msra.mxu0 %v6584
      %6713 = vmatprep.subr.bf16.mxu0 %v6583
      %6714 = vmatpush2.bf16.msra.mxu0 %v6582
      %6715 = vmatprep.subr.bf16.mxu0 %v6581
      %6716 = vmatpush2.bf16.msra.mxu0 %v6580
      %6717 = vmatprep.subr.bf16.mxu0 %v6579
      %6718 = vmatpush2.bf16.msra.mxu0 %v6578
      %6719 = vmatprep.subr.bf16.mxu0 %v6577
      %6720 = vmatpush2.bf16.msra.mxu0 %v6576
      %6721 = vmatprep.subr.bf16.mxu0 %v6575
      %6722 = vmatpush2.bf16.msra.mxu0 %v6574
      %6723 = vmatprep.subr.bf16.mxu0 %v6573
      %6724 = vmatpush2.bf16.msra.mxu0 %v6572
      %6725 = vmatprep.mubr.bf16.mxu0 %v6255
      %6726 = vmatmul.mubr.bf16.gmra.mxu0 %v6254
      %v6727 = vpop.f32.mrf.mxu0
      %v6728 = vadd.f32 %v6687, %v6727
      %v6729 = vpop.f32.mrf.mxu0
      %v6730 = vadd.f32 %v6689, %v6729
      %v6731 = vpop.f32.mrf.mxu0
      %v6732 = vpop.f32.mrf.mxu0
      %6733 = vdwg.mxu0
      %v6734 = vld [vmem:[#allocation18] sm:$0x3]
      %v6735 = vld [vmem:[#allocation20] sm:$0x3]
      %v6736 = vmul.f32 %v6728, %v4067
      %v6737 = vmul.f32 %v6730, %v4067
      %v6738 = vrot.slane %v6736, 4
      %v6739 = vadd.f32 %v6736, %v6738
      %v6740 = vrot.slane %v6739, 2
      %v6741 = vadd.f32 %v6739, %v6740
      %v6742 = vrot.slane %v6741, 1
      %v6743 = vadd.f32 %v6741, %v6742
      %v6744 = vrot.slane %v6737, 4
      %v6745 = vadd.f32 %v6737, %v6744
      %v6746 = vrot.slane %v6745, 2
      %v6747 = vadd.f32 %v6745, %v6746
      %v6748 = vrot.slane %v6747, 1
      %v6749 = vadd.f32 %v6747, %v6748
      %v6750 = vmul.f32 %v6743, 0.5
      %v6751 = vmul.f32 %v6749, 0.5
      %v6752 = vsub.f32 %v6728, %v6750
      %v6753 = vsub.f32 %v6730, %v6751
      %v6754 = vmul.f32 %v6752, %v4067
      %v6755 = vmul.f32 %v6753, %v4067
      %v6756 = vmul.f32 %v6754, %v6754
      %v6757 = vmul.f32 %v6755, %v6755
      %v6758 = vrot.slane %v6756, 4
      %v6759 = vadd.f32 %v6756, %v6758
      %v6760 = vrot.slane %v6759, 2
      %v6761 = vadd.f32 %v6759, %v6760
      %v6762 = vrot.slane %v6761, 1
      %v6763 = vadd.f32 %v6761, %v6762
      %v6764 = vrot.slane %v6757, 4
      %v6765 = vadd.f32 %v6757, %v6764
      %v6766 = vrot.slane %v6765, 2
      %v6767 = vadd.f32 %v6765, %v6766
      %v6768 = vrot.slane %v6767, 1
      %v6769 = vadd.f32 %v6767, %v6768
      %v6770 = vmul.f32 %v6763, 0.5
      %v6771 = vmul.f32 %v6769, 0.5
      %v6772 = vadd.f32 %v6770, 1e-05
      %v6773 = vadd.f32 %v6771, 1e-05
      %v6774 = vrsqrt.pop %v6772
      %v6775 = vrsqrt.pop %v6773
      %v6778 = vcombine.low %v6774, %v6775
      %v6780 = vunpack.c.l.s4 1966171168
      %v6781 = vunpack.c.0.s8 %v6780
      %v6782 = vlaneseq
      %v6783 = vshrl.u32 %v6782, 7
      %v6784 = vsub.s32 %v6781, %v6783
      %v6785 = vrot.slane %v6778, %v6784
      %v6787 = vunpack.c.l.s4 1966171168
      %v6788 = vunpack.c.0.s8 %v6787
      %v6789 = vlaneseq
      %v6790 = vshrl.u32 %v6789, 7
      %v6791 = vsub.s32 %v6788, %v6790
      %v6792 = vrot.slane %v6785, %v6791
      %v6794 = vmul.f32 %v6734, %v6792
      %v6796 = vlaneseq
      %v6797 = vshrl.u32 %v6796, 7
      %v6798 = vsub.s32 0, %v6797
      %v6799 = vrot.slane %v6794, %v6798
      %v6800 = vlaneseq
      %v6801 = vshrl.u32 %v6800, 7
      %v6802 = vsub.s32 1, %v6801
      %v6803 = vrot.slane %v6794, %v6802
      %v6806 = vmul.f32 %v6750, %v6799
      %v6807 = vmul.f32 %v6751, %v6803
      %v6810 = vcombine.low %v6806, %v6807
      %v6812 = vunpack.c.l.s4 1966171168
      %v6813 = vunpack.c.0.s8 %v6812
      %v6814 = vlaneseq
      %v6815 = vshrl.u32 %v6814, 7
      %v6816 = vsub.s32 %v6813, %v6815
      %v6817 = vrot.slane %v6810, %v6816
      %v6819 = vunpack.c.l.s4 1966171168
      %v6820 = vunpack.c.0.s8 %v6819
      %v6821 = vlaneseq
      %v6822 = vshrl.u32 %v6821, 7
      %v6823 = vsub.s32 %v6820, %v6822
      %v6824 = vrot.slane %v6817, %v6823
      %v6826 = vsub.f32 %v6735, %v6824
      %v6827 = vmul.f32 %v6728, %v6799
      %v6828 = vmul.f32 %v6730, %v6803
      %v6830 = vlaneseq
      %v6831 = vshrl.u32 %v6830, 7
      %v6832 = vsub.s32 0, %v6831
      %v6833 = vrot.slane %v6826, %v6832
      %v6834 = vlaneseq
      %v6835 = vshrl.u32 %v6834, 7
      %v6836 = vsub.s32 1, %v6835
      %v6837 = vrot.slane %v6826, %v6836
      %v6840 = vadd.f32 %v6827, %v6833
      %v6841 = vadd.f32 %v6828, %v6837
      %vm6842 = vcmp.gt.f32.partialorder %v6840, 0.0
      %vm6843 = vcmp.gt.f32.partialorder %v6841, 0.0
      %v6844 = vmul.f32 %v6840, 0.2
      %v6845 = vmul.f32 %v6841, 0.2
      %v6846 = vsel %vm6842, %v6840, %v6844
      %v6847 = vsel %vm6843, %v6841, %v6845
      %v6848 = vpack.c.bf16 %v6846, %v6846
      %v6849 = vpack.c.bf16 %v6847, %v6847
      %v6850 = vld [vmem:[#allocation21] sm:$0xf]
      %v6851 = vld [vmem:[#allocation21 + $0x4] sm:$0xf]
      %v6852 = vld [vmem:[#allocation21 + $0x8] sm:$0xf]
      %v6853 = vld [vmem:[#allocation21 + $0xc] sm:$0xf]
      %v6854 = vld [vmem:[#allocation21 + $0x10] sm:$0xf]
      %v6855 = vld [vmem:[#allocation21 + $0x14] sm:$0xf]
      %v6856 = vld [vmem:[#allocation21 + $0x18] sm:$0xf]
      %v6857 = vld [vmem:[#allocation21 + $0x1c] sm:$0xf]
      %v6858 = vld [vmem:[#allocation21 + $0x20] sm:$0xf]
      %v6859 = vld [vmem:[#allocation21 + $0x24] sm:$0xf]
      %v6860 = vld [vmem:[#allocation21 + $0x28] sm:$0xf]
      %v6861 = vld [vmem:[#allocation21 + $0x2c] sm:$0xf]
      %v6862 = vld [vmem:[#allocation21 + $0x30] sm:$0xf]
      %v6863 = vld [vmem:[#allocation21 + $0x34] sm:$0xf]
      %v6864 = vld [vmem:[#allocation21 + $0x38] sm:$0xf]
      %v6865 = vld [vmem:[#allocation21 + $0x3c] sm:$0xf]
      %v6866 = vld [vmem:[#allocation21 + $0x40] sm:$0xf]
      %v6867 = vld [vmem:[#allocation21 + $0x44] sm:$0xf]
      %v6868 = vld [vmem:[#allocation21 + $0x48] sm:$0xf]
      %v6869 = vld [vmem:[#allocation21 + $0x4c] sm:$0xf]
      %v6870 = vld [vmem:[#allocation21 + $0x50] sm:$0xf]
      %v6871 = vld [vmem:[#allocation21 + $0x54] sm:$0xf]
      %v6872 = vld [vmem:[#allocation21 + $0x58] sm:$0xf]
      %v6873 = vld [vmem:[#allocation21 + $0x5c] sm:$0xf]
      %v6874 = vld [vmem:[#allocation21 + $0x60] sm:$0xf]
      %v6875 = vld [vmem:[#allocation21 + $0x64] sm:$0xf]
      %v6876 = vld [vmem:[#allocation21 + $0x68] sm:$0xf]
      %v6877 = vld [vmem:[#allocation21 + $0x6c] sm:$0xf]
      %v6878 = vld [vmem:[#allocation21 + $0x70] sm:$0xf]
      %v6879 = vld [vmem:[#allocation21 + $0x74] sm:$0xf]
      %v6880 = vld [vmem:[#allocation21 + $0x78] sm:$0xf]
      %v6881 = vld [vmem:[#allocation21 + $0x7c] sm:$0xf]
      %v6882 = vld [vmem:[#allocation23] sm:$0x1]
      %v6884 = vlaneseq
      %v6885 = vshrl.u32 %v6884, 7
      %v6886 = vsub.s32 0, %v6885
      %v6887 = vrot.slane %v6882, %v6886
      %v6921 = vunpack.c.l.b16 %v6850
      %v6922 = vunpack.c.l.b16 %v6851
      %v6923 = vunpack.c.l.b16 %v6852
      %v6924 = vunpack.c.l.b16 %v6853
      %v6925 = vunpack.c.l.b16 %v6854
      %v6926 = vunpack.c.l.b16 %v6855
      %v6927 = vunpack.c.l.b16 %v6856
      %v6928 = vunpack.c.l.b16 %v6857
      %v6929 = vunpack.c.l.b16 %v6858
      %v6930 = vunpack.c.l.b16 %v6859
      %v6931 = vunpack.c.l.b16 %v6860
      %v6932 = vunpack.c.l.b16 %v6861
      %v6933 = vunpack.c.l.b16 %v6862
      %v6934 = vunpack.c.l.b16 %v6863
      %v6935 = vunpack.c.l.b16 %v6864
      %v6936 = vunpack.c.l.b16 %v6865
      %v6937 = vunpack.c.l.b16 %v6866
      %v6938 = vunpack.c.l.b16 %v6867
      %v6939 = vunpack.c.l.b16 %v6868
      %v6940 = vunpack.c.l.b16 %v6869
      %v6941 = vunpack.c.l.b16 %v6870
      %v6942 = vunpack.c.l.b16 %v6871
      %v6943 = vunpack.c.l.b16 %v6872
      %v6944 = vunpack.c.l.b16 %v6873
      %v6945 = vunpack.c.l.b16 %v6874
      %v6946 = vunpack.c.l.b16 %v6875
      %v6947 = vunpack.c.l.b16 %v6876
      %v6948 = vunpack.c.l.b16 %v6877
      %v6949 = vunpack.c.l.b16 %v6878
      %v6950 = vunpack.c.l.b16 %v6879
      %v6951 = vunpack.c.l.b16 %v6880
      %v6952 = vunpack.c.l.b16 %v6881
      %v6953 = vpack.c.b16 %v6922, %v6921
      %v6954 = vpack.c.b16 %v6924, %v6923
      %v6955 = vpack.c.b16 %v6926, %v6925
      %v6956 = vpack.c.b16 %v6928, %v6927
      %v6957 = vpack.c.b16 %v6930, %v6929
      %v6958 = vpack.c.b16 %v6932, %v6931
      %v6959 = vpack.c.b16 %v6934, %v6933
      %v6960 = vpack.c.b16 %v6936, %v6935
      %v6961 = vpack.c.b16 %v6938, %v6937
      %v6962 = vpack.c.b16 %v6940, %v6939
      %v6963 = vpack.c.b16 %v6942, %v6941
      %v6964 = vpack.c.b16 %v6944, %v6943
      %v6965 = vpack.c.b16 %v6946, %v6945
      %v6966 = vpack.c.b16 %v6948, %v6947
      %v6967 = vpack.c.b16 %v6950, %v6949
      %v6968 = vpack.c.b16 %v6952, %v6951
      %6985 = vmatprep.subr.bf16.mxu0 0
      %6986 = vmatpush1.bf16.msra.mxu0 %v6960
      %6987 = vmatprep.subr.bf16.mxu0 0
      %6988 = vmatpush1.bf16.msra.mxu0 %v6959
      %6989 = vmatprep.subr.bf16.mxu0 0
      %6990 = vmatpush1.bf16.msra.mxu0 %v6958
      %6991 = vmatprep.subr.bf16.mxu0 0
      %6992 = vmatpush1.bf16.msra.mxu0 %v6957
      %6993 = vmatprep.subr.bf16.mxu0 0
      %6994 = vmatpush1.bf16.msra.mxu0 %v6956
      %6995 = vmatprep.subr.bf16.mxu0 0
      %6996 = vmatpush1.bf16.msra.mxu0 %v6955
      %6997 = vmatprep.subr.bf16.mxu0 0
      %6998 = vmatpush1.bf16.msra.mxu0 %v6954
      %6999 = vmatprep.subr.bf16.mxu0 0
      %7000 = vmatpush1.bf16.msra.mxu0 %v6953
      %7001 = vmatprep.subr.bf16.mxu0 0
      %7002 = vmatpush2.bf16.msra.mxu0 %v6968
      %7003 = vmatprep.subr.bf16.mxu0 0
      %7004 = vmatpush2.bf16.msra.mxu0 %v6967
      %7005 = vmatprep.subr.bf16.mxu0 0
      %7006 = vmatpush2.bf16.msra.mxu0 %v6966
      %7007 = vmatprep.subr.bf16.mxu0 0
      %7008 = vmatpush2.bf16.msra.mxu0 %v6965
      %7009 = vmatprep.subr.bf16.mxu0 0
      %7010 = vmatpush2.bf16.msra.mxu0 %v6964
      %7011 = vmatprep.subr.bf16.mxu0 0
      %7012 = vmatpush2.bf16.msra.mxu0 %v6963
      %7013 = vmatprep.subr.bf16.mxu0 0
      %7014 = vmatpush2.bf16.msra.mxu0 %v6962
      %7015 = vmatprep.subr.bf16.mxu0 0
      %7016 = vmatpush2.bf16.msra.mxu0 %v6961
      %7017 = vmatprep.mubr.bf16.mxu0 %v6849
      %7018 = vmatmul.mubr.bf16.gmra.mxu0 %v6848
      %v7019 = vpop.f32.mrf.mxu0
      %v7020 = vadd.f32 %v6887, %v7019
      %v7021 = vpop.f32.mrf.mxu0
      %v7022 = vpop.f32.mrf.mxu0
      %v7023 = vpop.f32.mrf.mxu0
      %7024 = vdwg.mxu0
      %v7025 = vld [vmem:[#allocation24] sm:$0x1]
      %v7026 = vld [vmem:[#allocation26] sm:$0x1]
      %v7027 = vmul.f32 %v7020, %v4067
      %v7028 = vrot.slane %v7027, 4
      %v7029 = vadd.f32 %v7027, %v7028
      %v7030 = vrot.slane %v7029, 2
      %v7031 = vadd.f32 %v7029, %v7030
      %v7032 = vrot.slane %v7031, 1
      %v7033 = vadd.f32 %v7031, %v7032
      %v7034 = vmul.f32 %v7033, 0.5
      %v7035 = vsub.f32 %v7020, %v7034
      %v7036 = vmul.f32 %v7035, %v4067
      %v7037 = vmul.f32 %v7036, %v7036
      %v7038 = vrot.slane %v7037, 4
      %v7039 = vadd.f32 %v7037, %v7038
      %v7040 = vrot.slane %v7039, 2
      %v7041 = vadd.f32 %v7039, %v7040
      %v7042 = vrot.slane %v7041, 1
      %v7043 = vadd.f32 %v7041, %v7042
      %v7044 = vmul.f32 %v7043, 0.5
      %v7045 = vadd.f32 %v7044, 1e-05
      %v7046 = vrsqrt.pop %v7045
      %v7047 = vmul.f32 %v7025, %v7046
      %v7048 = vmul.f32 %v7034, %v7047
      %v7049 = vsub.f32 %v7026, %v7048
      %v7051 = vlaneseq
      %v7052 = vshrl.u32 %v7051, 7
      %v7053 = vsub.s32 0, %v7052
      %v7054 = vrot.slane %v7047, %v7053
      %v7056 = vmul.f32 %v7020, %v7054
      %v7058 = vlaneseq
      %v7059 = vshrl.u32 %v7058, 7
      %v7060 = vsub.s32 0, %v7059
      %v7061 = vrot.slane %v7049, %v7060
      %v7063 = vadd.f32 %v7056, %v7061
      %vm7064 = vcmp.gt.f32.partialorder %v7063, 0.0
      %v7065 = vmul.f32 %v7063, 0.2
      %v7066 = vsel %vm7064, %v7063, %v7065
      %v7067 = vpack.c.bf16 %v7066, %v7066
      %v7068 = vld [vmem:[#allocation27] sm:$0xf]
      %v7069 = vld [vmem:[#allocation27 + $0x4] sm:$0xf]
      %v7070 = vld [vmem:[#allocation27 + $0x8] sm:$0xf]
      %v7071 = vld [vmem:[#allocation27 + $0xc] sm:$0xf]
      %v7072 = vld [vmem:[#allocation27 + $0x10] sm:$0xf]
      %v7073 = vld [vmem:[#allocation27 + $0x14] sm:$0xf]
      %v7074 = vld [vmem:[#allocation27 + $0x18] sm:$0xf]
      %v7075 = vld [vmem:[#allocation27 + $0x1c] sm:$0xf]
      %v7076 = vld [vmem:[#allocation27 + $0x20] sm:$0xf]
      %v7077 = vld [vmem:[#allocation27 + $0x24] sm:$0xf]
      %v7078 = vld [vmem:[#allocation27 + $0x28] sm:$0xf]
      %v7079 = vld [vmem:[#allocation27 + $0x2c] sm:$0xf]
      %v7080 = vld [vmem:[#allocation27 + $0x30] sm:$0xf]
      %v7081 = vld [vmem:[#allocation27 + $0x34] sm:$0xf]
      %v7082 = vld [vmem:[#allocation27 + $0x38] sm:$0xf]
      %v7083 = vld [vmem:[#allocation27 + $0x3c] sm:$0xf]
      %v7084 = vld [vmem:[#allocation29] sm:$0x1]
      %v7086 = vlaneseq
      %v7087 = vshrl.u32 %v7086, 7
      %v7088 = vsub.s32 0, %v7087
      %v7089 = vrot.slane %v7084, %v7088
      %v7107 = vunpack.c.l.b16 %v7068
      %v7108 = vunpack.c.l.b16 %v7069
      %v7109 = vunpack.c.l.b16 %v7070
      %v7110 = vunpack.c.l.b16 %v7071
      %v7111 = vunpack.c.l.b16 %v7072
      %v7112 = vunpack.c.l.b16 %v7073
      %v7113 = vunpack.c.l.b16 %v7074
      %v7114 = vunpack.c.l.b16 %v7075
      %v7115 = vunpack.c.l.b16 %v7076
      %v7116 = vunpack.c.l.b16 %v7077
      %v7117 = vunpack.c.l.b16 %v7078
      %v7118 = vunpack.c.l.b16 %v7079
      %v7119 = vunpack.c.l.b16 %v7080
      %v7120 = vunpack.c.l.b16 %v7081
      %v7121 = vunpack.c.l.b16 %v7082
      %v7122 = vunpack.c.l.b16 %v7083
      %v7123 = vpack.c.b16 %v7108, %v7107
      %v7124 = vpack.c.b16 %v7110, %v7109
      %v7125 = vpack.c.b16 %v7112, %v7111
      %v7126 = vpack.c.b16 %v7114, %v7113
      %v7127 = vpack.c.b16 %v7116, %v7115
      %v7128 = vpack.c.b16 %v7118, %v7117
      %v7129 = vpack.c.b16 %v7120, %v7119
      %v7130 = vpack.c.b16 %v7122, %v7121
      %7139 = vmatprep.subr.bf16.mxu0 0
      %7140 = vmatpush1.bf16.msra.mxu0 %v7130
      %7141 = vmatprep.subr.bf16.mxu0 0
      %7142 = vmatpush1.bf16.msra.mxu0 %v7129
      %7143 = vmatprep.subr.bf16.mxu0 0
      %7144 = vmatpush1.bf16.msra.mxu0 %v7128
      %7145 = vmatprep.subr.bf16.mxu0 0
      %7146 = vmatpush1.bf16.msra.mxu0 %v7127
      %7147 = vmatprep.subr.bf16.mxu0 0
      %7148 = vmatpush1.bf16.msra.mxu0 %v7126
      %7149 = vmatprep.subr.bf16.mxu0 0
      %7150 = vmatpush1.bf16.msra.mxu0 %v7125
      %7151 = vmatprep.subr.bf16.mxu0 0
      %7152 = vmatpush1.bf16.msra.mxu0 %v7124
      %7153 = vmatprep.subr.bf16.mxu0 0
      %7154 = vmatpush1.bf16.msra.mxu0 %v7123
      %7155 = vmatprep.subr.bf16.mxu0 0
      %7156 = vmatpush2.bf16.msra.mxu0 0
      %7157 = vmatprep.subr.bf16.mxu0 0
      %7158 = vmatpush2.bf16.msra.mxu0 0
      %7159 = vmatprep.subr.bf16.mxu0 0
      %7160 = vmatpush2.bf16.msra.mxu0 0
      %7161 = vmatprep.subr.bf16.mxu0 0
      %7162 = vmatpush2.bf16.msra.mxu0 0
      %7163 = vmatprep.subr.bf16.mxu0 0
      %7164 = vmatpush2.bf16.msra.mxu0 0
      %7165 = vmatprep.subr.bf16.mxu0 0
      %7166 = vmatpush2.bf16.msra.mxu0 0
      %7167 = vmatprep.subr.bf16.mxu0 0
      %7168 = vmatpush2.bf16.msra.mxu0 0
      %7169 = vmatprep.subr.bf16.mxu0 0
      %7170 = vmatpush2.bf16.msra.mxu0 0
      %7171 = vmatprep.mubr.bf16.mxu0 0
      %7172 = vmatmul.mubr.bf16.gmra.mxu0 %v7067
      %v7173 = vpop.f32.mrf.mxu0
      %v7174 = vadd.f32 %v7089, %v7173
      %v7175 = vpop.f32.mrf.mxu0
      %v7176 = vpop.f32.mrf.mxu0
      %v7177 = vpop.f32.mrf.mxu0
      %7178 = vdwg.mxu0
      %vm7179 = vcmp.gt.f32.partialorder %v7174, 0.0
      %v7180 = vmul.f32 %v7174, 0.2
      %v7181 = vsel %vm7179, %v7174, %v7180
      %7182 = vst [vmem:[#allocation30] sm:$0xff] %v7181
    $region145: #{tpu_custom_call.1} parent=1 // pred_fallthru
      _
    // Predicated region
    $region146: #{tpu_custom_call.1} parent=1 // pred_check
      _
    $region147: #{tpu_custom_call.1} parent=1 // pred_check_branch
      %7184 = sbr.rel (0) target = $region149
    $region148: #{tpu_custom_call.1} parent=1 // pred_region
      %s7186 = ssub.s32 128, 128
      %7187 = vsyncadd [#allocation5], %s7186
      %s7189 = sshll.u32 [#allocation30], 4
      %s7190 = int_to_ptr.vmem [resolvable:$true] %s7189
      %7192 = dma.vmem_to_hbm [thread:$0]  %s7190, 128, %s17, [#allocation5]
    $region149: #{tpu_custom_call.1} parent=1 // pred_fallthru
      _
    // Predicated region
    $region150: #{tpu_custom_call.1} parent=1 // pred_check
      _
    $region151: #{tpu_custom_call.1} parent=1 // pred_check_branch
      %7194 = sbr.rel (0) target = $region153
    $region152: #{tpu_custom_call.1} parent=1 // pred_region
      %7195 = dma.done [#allocation5], 128
    $region153: #{tpu_custom_call.1} parent=1 // pred_fallthru
      _
    %7196 = vsyncpa [#allocation4], 1
    %7197 = vsyncpa [#allocation7], 1
    %7198 = vsyncpa [#allocation10], 1
    %7199 = vsyncpa [#allocation13], 1
    %7200 = vsyncpa [#allocation16], 1
    %7201 = vsyncpa [#allocation19], 1
    %7202 = vsyncpa [#allocation22], 1
    %7203 = vsyncpa [#allocation25], 1
    %7204 = vsyncpa [#allocation28], 1
    %7205 = vsyncpa [#allocation5], 1

</llo_original>
